<compile_context>
chip_gen: v6e
topology: v6e:2x2x1
jax: 0.10.0
libtpu: 0.0.40
codegen_flags: <defaults>
</compile_context>

<pallas_src>
import jax
import jax.numpy as jnp
from jax.experimental import pallas as pl
from jax.experimental.pallas import tpu as pltpu

# Channel sizes fixed by the PyTorch module.
C_IN, C1, C2, C3, N_CLS = 3, 32, 64, 128, 10
K1 = 9 * C_IN          # conv1 im2col K (27)
K1P = 32               # conv1 K padded to 32 (aligned loads / DMA granularity)
OUT_PAD = 128          # lane-dense logits width (sliced back to 10 in the wrapper)
B_MAX = 8              # images folded into each grid step


def _im2col_3x3(x):
    """(N, H, W, C) -> (N, H*W, 9*C) patches for a 3x3 same-padded conv (wrapper-side, tiny)."""
    N, H, W, C = x.shape
    xp = jnp.pad(x, ((0, 0), (1, 1), (1, 1), (0, 0)))
    cols = [xp[:, kh:kh + H, kw:kw + W, :] for kh in range(3) for kw in range(3)]
    return jnp.concatenate(cols, axis=-1).reshape(N, H * W, 9 * C)


def _make_fused_kernel(B, H, W):
    if H % 4 or W % 4:
        raise ValueError("fused ConvGAP kernel assumes H % 4 == 0 and W % 4 == 0")
    H1, W1 = H, W              # conv1 resolution
    H2, W2 = H // 2, W // 2    # conv2 resolution (after pool1)
    H3, W3 = H // 4, W // 4    # conv3 resolution (after pool2)

    def kernel(x1_ref, w1_ref, b1_ref, w2_ref, b2_ref, w3_ref, b3_ref,
               wl_ref, bl_ref, o_ref,
               rowbuf1, pad2, patches2, rowbuf2, pad3, patches3):
        f32, bf16 = jnp.float32, jnp.bfloat16

        # Zero only the halo borders of the padded conv planes; their interiors are
        # fully overwritten every step. (Not hoisted under program_id==0: with a
        # megacore "parallel" split the second core never runs step 0 on its own
        # per-core scratch, so the hoist would read uninitialized halos.)
        pad2[:, 0:1, :, :] = jnp.zeros((B, 1, W2 + 2, C1), f32)
        pad2[:, H2 + 1:H2 + 2, :, :] = jnp.zeros((B, 1, W2 + 2, C1), f32)
        pad2[:, :, 0:1, :] = jnp.zeros((B, H2 + 2, 1, C1), f32)
        pad2[:, :, W2 + 1:W2 + 2, :] = jnp.zeros((B, H2 + 2, 1, C1), f32)
        pad3[:, 0:1, :, :] = jnp.zeros((B, 1, W3 + 2, C2), f32)
        pad3[:, H3 + 1:H3 + 2, :, :] = jnp.zeros((B, 1, W3 + 2, C2), f32)
        pad3[:, :, 0:1, :] = jnp.zeros((B, H3 + 2, 1, C2), f32)
        pad3[:, :, W3 + 1:W3 + 2, :] = jnp.zeros((B, H3 + 2, 1, C2), f32)

        # ---- conv1: ONE batched im2col matmul (B*H*W, 32) x (32, C1), bf16 -> f32 ------
        acc1 = jnp.dot(x1_ref[...].reshape(B * H1 * W1, K1P), w1_ref[...],
                       preferred_element_type=f32)
        y1 = jnp.maximum(acc1 + b1_ref[...], 0.0)                      # (B*H1*W1, C1)

        # ---- maxpool1 2x2: reshape-max over H, strided VMEM loads over W --------------
        rowbuf1[...] = jnp.max(y1.reshape(B * H2, 2, W1, C1), axis=1)
        p1 = jnp.maximum(rowbuf1[:, pl.ds(0, W2, stride=2), :],
                         rowbuf1[:, pl.ds(1, W2, stride=2), :])        # (B*H2, W2, C1)
        pad2[:, 1:H2 + 1, 1:W2 + 1, :] = p1.reshape(B, H2, W2, C1)

        # ---- conv2: 9 slice-copies -> ONE (B*H2*W2, 288) x (288, C2) bf16 matmul ------
        for t in range(9):
            kh, kw = divmod(t, 3)
            patches2[:, t * C1:(t + 1) * C1] = (
                pad2[:, kh:kh + H2, kw:kw + W2, :]
                .reshape(B * H2 * W2, C1).astype(bf16))
        acc2 = jnp.dot(patches2[...], w2_ref[...], preferred_element_type=f32)
        y2 = jnp.maximum(acc2 + b2_ref[...], 0.0)                      # (B*H2*W2, C2)

        # ---- maxpool2 2x2 --------------------------------------------------------------
        rowbuf2[...] = jnp.max(y2.reshape(B * H3, 2, W2, C2), axis=1)
        p2 = jnp.maximum(rowbuf2[:, pl.ds(0, W3, stride=2), :],
                         rowbuf2[:, pl.ds(1, W3, stride=2), :])        # (B*H3, W3, C2)
        pad3[:, 1:H3 + 1, 1:W3 + 1, :] = p2.reshape(B, H3, W3, C2)

        # ---- conv3: ONE (B*H3*W3, 576) x (576, C3) bf16 matmul, no garbage rows -------
        for t in range(9):
            kh, kw = divmod(t, 3)
            patches3[:, t * C2:(t + 1) * C2] = (
                pad3[:, kh:kh + H3, kw:kw + W3, :]
                .reshape(B * H3 * W3, C2).astype(bf16))
        acc3 = jnp.dot(patches3[...], w3_ref[...], preferred_element_type=f32)
        y3 = jnp.maximum(acc3 + b3_ref[...], 0.0)                      # (B*H3*W3, C3)

        # ---- GAP (spatial SUM, matching torch .sum(2)) + linear (f32, lane-dense) -----
        gap = jnp.sum(y3.reshape(B, H3 * W3, C3), axis=1)              # (B, C3)
        out = jnp.dot(gap, wl_ref[...], preferred_element_type=f32) + bl_ref[...]
        o_ref[...] = out.astype(o_ref.dtype)

    scratch_shapes = [
        pltpu.VMEM((B * H2, W1, C1), jnp.float32),           # rowbuf1: pool1 W-step
        pltpu.VMEM((B, H2 + 2, W2 + 2, C1), jnp.float32),    # pad2:    conv2 halo plane
        pltpu.VMEM((B * H2 * W2, 9 * C1), jnp.bfloat16),     # conv2 im2col patch buffer
        pltpu.VMEM((B * H3, W2, C2), jnp.float32),           # rowbuf2: pool2 W-step
        pltpu.VMEM((B, H3 + 2, W3 + 2, C2), jnp.float32),    # pad3:    conv3 halo plane
        pltpu.VMEM((B * H3 * W3, 9 * C2), jnp.bfloat16),     # conv3 im2col patch buffer
    ]
    return kernel, scratch_shapes


def conv_gap_forward(x_nchw, p):
    """x_nchw: (N, 3, H, W) f32 (PyTorch layout). Returns logits (N, 10)."""
    x = jnp.transpose(x_nchw, (0, 2, 3, 1)).astype(jnp.float32)        # NCHW -> NHWC
    N, H, W, _ = x.shape
    # Per-step batch. For N > B_MAX the grid length is N/B_MAX; on v7x keep it even
    # (e.g. N a multiple of 16) so both TensorCores get equal shares.
    B = min(N, B_MAX)
    Np = -(-N // B) * B

    patches = _im2col_3x3(x)                                           # (N, H*W, 27) f32
    patches = jnp.pad(patches, ((0, Np - N), (0, 0), (0, K1P - K1)))   # pad batch + K->32
    patches = patches.astype(jnp.bfloat16)

    # Weights: conv weights reshaped to im2col layout (kh, kw, cin) x cout and cast to
    # bf16 (native MXU input); final linear padded lane-dense to 128 cols, kept f32.
    w1r = jnp.pad(p["w1"].reshape(K1, C1), ((0, K1P - K1), (0, 0))).astype(jnp.bfloat16)
    w2r = p["w2"].reshape(9 * C1, C2).astype(jnp.bfloat16)
    w3r = p["w3"].reshape(9 * C2, C3).astype(jnp.bfloat16)
    wl = jnp.pad(p["w_lin"], ((0, 0), (0, OUT_PAD - N_CLS))).astype(jnp.float32)
    bl = jnp.pad(p["b_lin"], (0, OUT_PAD - N_CLS)).reshape(1, OUT_PAD).astype(jnp.float32)

    kernel, scratch_shapes = _make_fused_kernel(B, H, W)

    out = pl.pallas_call(
        kernel,
        out_shape=jax.ShapeDtypeStruct((Np, OUT_PAD), jnp.float32),
        grid=(Np // B,),
        in_specs=[
            pl.BlockSpec((B, H * W, K1P), lambda n: (n, 0, 0)),        # im2col'd input
            pl.BlockSpec((K1P, C1), lambda n: (0, 0)),                 # conv1 weight
            pl.BlockSpec((1, C1), lambda n: (0, 0)),                   # conv1 bias
            pl.BlockSpec((9 * C1, C2), lambda n: (0, 0)),              # conv2 weight
            pl.BlockSpec((1, C2), lambda n: (0, 0)),                   # conv2 bias
            pl.BlockSpec((9 * C2, C3), lambda n: (0, 0)),              # conv3 weight
            pl.BlockSpec((1, C3), lambda n: (0, 0)),                   # conv3 bias
            pl.BlockSpec((C3, OUT_PAD), lambda n: (0, 0)),             # linear weight
            pl.BlockSpec((1, OUT_PAD), lambda n: (0, 0)),              # linear bias
        ],
        out_specs=pl.BlockSpec((B, OUT_PAD), lambda n: (n, 0)),
        scratch_shapes=scratch_shapes,
        compiler_params=pltpu.CompilerParams(dimension_semantics=("parallel",)),
    )(patches, w1r, p["b1"].reshape(1, C1), w2r, p["b2"].reshape(1, C2),
      w3r, p["b3"].reshape(1, C3), wl, bl)
    return out[:N, :N_CLS]


def init_params(key):
    ks = jax.random.split(key, 8)

    def conv_w(k, cin, cout):
        return jax.random.normal(k, (3, 3, cin, cout), jnp.float32) / jnp.sqrt(9.0 * cin)

    return {
        "w1": conv_w(ks[0], C_IN, C1),
        "b1": 0.01 * jax.random.normal(ks[1], (C1,), jnp.float32),
        "w2": conv_w(ks[2], C1, C2),
        "b2": 0.01 * jax.random.normal(ks[3], (C2,), jnp.float32),
        "w3": conv_w(ks[4], C2, C3),
        "b3": 0.01 * jax.random.normal(ks[5], (C3,), jnp.float32),
        "w_lin": jax.random.normal(ks[6], (C3, N_CLS), jnp.float32) / jnp.sqrt(float(C3)),
        "b_lin": 0.01 * jax.random.normal(ks[7], (N_CLS,), jnp.float32),
    }


def _reference_forward(x_nchw, p):
    """Pure-JAX f32 reference (same weight layout) for a sanity check."""
    x = jnp.transpose(x_nchw, (0, 2, 3, 1))

    def conv(x, w, b):
        y = jax.lax.conv_general_dilated(
            x, w, window_strides=(1, 1), padding="SAME",
            dimension_numbers=("NHWC", "HWIO", "NHWC"),
            precision=jax.lax.Precision.HIGHEST)
        return jax.nn.relu(y + b)

    def pool(x):
        N, H, W, C = x.shape
        return jnp.max(x.reshape(N, H // 2, 2, W // 2, 2, C), axis=(2, 4))

    x = pool(conv(x, p["w1"], p["b1"]))
    x = pool(conv(x, p["w2"], p["b2"]))
    x = conv(x, p["w3"], p["b3"])
    gap = jnp.sum(x, axis=(1, 2))                                       # SUM, matching torch
    return jnp.dot(gap, p["w_lin"], precision=jax.lax.Precision.HIGHEST) + p["b_lin"]


if __name__ == "__main__":
    key = jax.random.PRNGKey(0)
    k_x, k_p = jax.random.split(key)
    # PyTorch module expects 3 input channels; NCHW just like the torch forward.
    x = jax.random.normal(k_x, (2, 3, 16, 16), jnp.float32)
    params = init_params(k_p)

    fwd = jax.jit(conv_gap_forward)
    logits = jax.block_until_ready(fwd(x, params))
    assert logits.shape == (2, N_CLS), logits.shape

    ref = _reference_forward(x, params)
    max_err = float(jnp.max(jnp.abs(logits - ref)))
    # bf16 MXU inputs (f32 accumulate) vs. a pure-f32 reference: allow a slightly
    # looser absolute tolerance on near-zero logits.
    assert jnp.allclose(logits, ref, rtol=5e-2, atol=1e-1), max_err

    print("KERNEL_OK")
</pallas_src>

<mosaic_0001>
module attributes {stable_mosaic.version = 11 : i64} {
  func.func @kernel(%arg0: i32, %arg1: memref<2x256x32xbf16, #tpu.memory_space<vmem>>, %arg2: memref<32x32xbf16, #tpu.memory_space<vmem>>, %arg3: memref<1x32xf32, #tpu.memory_space<vmem>>, %arg4: memref<288x64xbf16, #tpu.memory_space<vmem>>, %arg5: memref<1x64xf32, #tpu.memory_space<vmem>>, %arg6: memref<576x128xbf16, #tpu.memory_space<vmem>>, %arg7: memref<1x128xf32, #tpu.memory_space<vmem>>, %arg8: memref<128x128xf32, #tpu.memory_space<vmem>>, %arg9: memref<1x128xf32, #tpu.memory_space<vmem>>, %arg10: memref<2x128xf32, #tpu.memory_space<vmem>>, %arg11: memref<16x16x32xf32, #tpu.memory_space<vmem>>, %arg12: memref<2x10x10x32xf32, #tpu.memory_space<vmem>>, %arg13: memref<128x288xbf16, #tpu.memory_space<vmem>>, %arg14: memref<8x8x64xf32, #tpu.memory_space<vmem>>, %arg15: memref<2x6x6x64xf32, #tpu.memory_space<vmem>>, %arg16: memref<32x576xbf16, #tpu.memory_space<vmem>>) attributes {dimension_semantics = [#tpu.dimension_semantics<parallel>], iteration_bounds = array<i64: 1>, scalar_prefetch = 0 : i64, scratch_operands = 6 : i64, tpu.core_type = #tpu.core_type<tc>, window_params = [{transform_indices = @transform_0, window_bounds = array<i64: 2, 256, 32>}, {pipeline_mode = #tpu.pipeline_mode<synchronous>, transform_indices = @transform_1, window_bounds = array<i64: 32, 32>}, {pipeline_mode = #tpu.pipeline_mode<synchronous>, transform_indices = @transform_2, window_bounds = array<i64: 1, 32>}, {pipeline_mode = #tpu.pipeline_mode<synchronous>, transform_indices = @transform_3, window_bounds = array<i64: 288, 64>}, {pipeline_mode = #tpu.pipeline_mode<synchronous>, transform_indices = @transform_4, window_bounds = array<i64: 1, 64>}, {pipeline_mode = #tpu.pipeline_mode<synchronous>, transform_indices = @transform_5, window_bounds = array<i64: 576, 128>}, {pipeline_mode = #tpu.pipeline_mode<synchronous>, transform_indices = @transform_6, window_bounds = array<i64: 1, 128>}, {pipeline_mode = #tpu.pipeline_mode<synchronous>, transform_indices = @transform_7, window_bounds = array<i64: 128, 128>}, {pipeline_mode = #tpu.pipeline_mode<synchronous>, transform_indices = @transform_8, window_bounds = array<i64: 1, 128>}, {transform_indices = @transform_9, window_bounds = array<i64: 2, 128>}]} {
    %cst = arith.constant 0.000000e+00 : f32
    %0 = vector.broadcast %cst : f32 to vector<2x1x10x32xf32>
    %c0 = arith.constant 0 : index
    %c0_0 = arith.constant 0 : index
    %c0_1 = arith.constant 0 : index
    %c0_2 = arith.constant 0 : index
    %1 = vector.load %arg12[%c0, %c0_0, %c0_1, %c0_2] : memref<2x10x10x32xf32, #tpu.memory_space<vmem>>, vector<2x1x10x32xf32>
    tpu.vector_store %arg12[%c0, %c0_0, %c0_1, %c0_2], %0 {strides = array<i32>} : memref<2x10x10x32xf32, #tpu.memory_space<vmem>>, vector<2x1x10x32xf32>,
    %cst_3 = arith.constant 0.000000e+00 : f32
    %2 = vector.broadcast %cst_3 : f32 to vector<2x1x10x32xf32>
    %c0_4 = arith.constant 0 : index
    %c9 = arith.constant 9 : index
    %c0_5 = arith.constant 0 : index
    %c0_6 = arith.constant 0 : index
    %3 = vector.load %arg12[%c0_4, %c9, %c0_5, %c0_6] : memref<2x10x10x32xf32, #tpu.memory_space<vmem>>, vector<2x1x10x32xf32>
    tpu.vector_store %arg12[%c0_4, %c9, %c0_5, %c0_6], %2 {strides = array<i32>} : memref<2x10x10x32xf32, #tpu.memory_space<vmem>>, vector<2x1x10x32xf32>,
    %cst_7 = arith.constant 0.000000e+00 : f32
    %4 = vector.broadcast %cst_7 : f32 to vector<2x10x1x32xf32>
    %c0_8 = arith.constant 0 : index
    %c0_9 = arith.constant 0 : index
    %c0_10 = arith.constant 0 : index
    %c0_11 = arith.constant 0 : index
    %5 = vector.load %arg12[%c0_8, %c0_9, %c0_10, %c0_11] : memref<2x10x10x32xf32, #tpu.memory_space<vmem>>, vector<2x10x1x32xf32>
    tpu.vector_store %arg12[%c0_8, %c0_9, %c0_10, %c0_11], %4 {strides = array<i32>} : memref<2x10x10x32xf32, #tpu.memory_space<vmem>>, vector<2x10x1x32xf32>,
    %cst_12 = arith.constant 0.000000e+00 : f32
    %6 = vector.broadcast %cst_12 : f32 to vector<2x10x1x32xf32>
    %c0_13 = arith.constant 0 : index
    %c0_14 = arith.constant 0 : index
    %c9_15 = arith.constant 9 : index
    %c0_16 = arith.constant 0 : index
    %7 = vector.load %arg12[%c0_13, %c0_14, %c9_15, %c0_16] : memref<2x10x10x32xf32, #tpu.memory_space<vmem>>, vector<2x10x1x32xf32>
    tpu.vector_store %arg12[%c0_13, %c0_14, %c9_15, %c0_16], %6 {strides = array<i32>} : memref<2x10x10x32xf32, #tpu.memory_space<vmem>>, vector<2x10x1x32xf32>,
    %cst_17 = arith.constant 0.000000e+00 : f32
    %8 = vector.broadcast %cst_17 : f32 to vector<2x1x6x64xf32>
    %c0_18 = arith.constant 0 : index
    %c0_19 = arith.constant 0 : index
    %c0_20 = arith.constant 0 : index
    %c0_21 = arith.constant 0 : index
    %9 = vector.load %arg15[%c0_18, %c0_19, %c0_20, %c0_21] : memref<2x6x6x64xf32, #tpu.memory_space<vmem>>, vector<2x1x6x64xf32>
    tpu.vector_store %arg15[%c0_18, %c0_19, %c0_20, %c0_21], %8 {strides = array<i32>} : memref<2x6x6x64xf32, #tpu.memory_space<vmem>>, vector<2x1x6x64xf32>,
    %cst_22 = arith.constant 0.000000e+00 : f32
    %10 = vector.broadcast %cst_22 : f32 to vector<2x1x6x64xf32>
    %c0_23 = arith.constant 0 : index
    %c5 = arith.constant 5 : index
    %c0_24 = arith.constant 0 : index
    %c0_25 = arith.constant 0 : index
    %11 = vector.load %arg15[%c0_23, %c5, %c0_24, %c0_25] : memref<2x6x6x64xf32, #tpu.memory_space<vmem>>, vector<2x1x6x64xf32>
    tpu.vector_store %arg15[%c0_23, %c5, %c0_24, %c0_25], %10 {strides = array<i32>} : memref<2x6x6x64xf32, #tpu.memory_space<vmem>>, vector<2x1x6x64xf32>,
    %cst_26 = arith.constant 0.000000e+00 : f32
    %12 = vector.broadcast %cst_26 : f32 to vector<2x6x1x64xf32>
    %c0_27 = arith.constant 0 : index
    %c0_28 = arith.constant 0 : index
    %c0_29 = arith.constant 0 : index
    %c0_30 = arith.constant 0 : index
    %13 = vector.load %arg15[%c0_27, %c0_28, %c0_29, %c0_30] : memref<2x6x6x64xf32, #tpu.memory_space<vmem>>, vector<2x6x1x64xf32>
    tpu.vector_store %arg15[%c0_27, %c0_28, %c0_29, %c0_30], %12 {strides = array<i32>} : memref<2x6x6x64xf32, #tpu.memory_space<vmem>>, vector<2x6x1x64xf32>,
    %cst_31 = arith.constant 0.000000e+00 : f32
    %14 = vector.broadcast %cst_31 : f32 to vector<2x6x1x64xf32>
    %c0_32 = arith.constant 0 : index
    %c0_33 = arith.constant 0 : index
    %c5_34 = arith.constant 5 : index
    %c0_35 = arith.constant 0 : index
    %15 = vector.load %arg15[%c0_32, %c0_33, %c5_34, %c0_35] : memref<2x6x6x64xf32, #tpu.memory_space<vmem>>, vector<2x6x1x64xf32>
    tpu.vector_store %arg15[%c0_32, %c0_33, %c5_34, %c0_35], %14 {strides = array<i32>} : memref<2x6x6x64xf32, #tpu.memory_space<vmem>>, vector<2x6x1x64xf32>,
    %c0_36 = arith.constant 0 : index
    %c0_37 = arith.constant 0 : index
    %c0_38 = arith.constant 0 : index
    %16 = vector.load %arg1[%c0_36, %c0_37, %c0_38] : memref<2x256x32xbf16, #tpu.memory_space<vmem>>, vector<2x256x32xbf16>
    %17 = vector.shape_cast %16 : vector<2x256x32xbf16> to vector<512x32xbf16>
    %c0_39 = arith.constant 0 : index
    %c0_40 = arith.constant 0 : index
    %18 = vector.load %arg2[%c0_39, %c0_40] : memref<32x32xbf16, #tpu.memory_space<vmem>>, vector<32x32xbf16>
    %cst_41 = arith.constant dense<0.000000e+00> : vector<512x32xf32>
    %19 = tpu.matmul %17, %18, %cst_41 {dimension_numbers = #tpu.dot_dimension_numbers<[1], [0], [0], [1], [0, 0, 1, 1], [], []>} : vector<512x32xbf16>, vector<32x32xbf16>, vector<512x32xf32> -> vector<512x32xf32>
    %c0_42 = arith.constant 0 : index
    %c0_43 = arith.constant 0 : index
    %20 = vector.load %arg3[%c0_42, %c0_43] : memref<1x32xf32, #tpu.memory_space<vmem>>, vector<1x32xf32>
    %21 = vector.broadcast %20 : vector<1x32xf32> to vector<512x32xf32>
    %22 = arith.addf %19, %21 : vector<512x32xf32>
    %cst_44 = arith.constant 0.000000e+00 : f32
    %23 = vector.broadcast %cst_44 : f32 to vector<512x32xf32>
    %24 = arith.maximumf %22, %23 : vector<512x32xf32>
    %25 = vector.shape_cast %24 : vector<512x32xf32> to vector<16x2x16x32xf32>
    %cst_45 = arith.constant dense<0xFF800000> : vector<16x16x32xf32>
    %26 = vector.multi_reduction <maximumf>, %25, %cst_45 [1] : vector<16x2x16x32xf32> to vector<16x16x32xf32>
    %c0_46 = arith.constant 0 : index
    %c0_47 = arith.constant 0 : index
    %c0_48 = arith.constant 0 : index
    %27 = vector.load %arg11[%c0_46, %c0_47, %c0_48] : memref<16x16x32xf32, #tpu.memory_space<vmem>>, vector<16x16x32xf32>
    tpu.vector_store %arg11[%c0_46, %c0_47, %c0_48], %26 {strides = array<i32>} : memref<16x16x32xf32, #tpu.memory_space<vmem>>, vector<16x16x32xf32>,
    %c0_49 = arith.constant 0 : index
    %c0_50 = arith.constant 0 : index
    %c0_51 = arith.constant 0 : index
    %28 = tpu.strided_load %arg11[%c0_49, %c0_50, %c0_51] {strides = array<i32: 1, 2, 1>} : memref<16x16x32xf32, #tpu.memory_space<vmem>>, vector<16x8x32xf32>
    %c0_52 = arith.constant 0 : index
    %c1 = arith.constant 1 : index
    %c0_53 = arith.constant 0 : index
    %29 = tpu.strided_load %arg11[%c0_52, %c1, %c0_53] {strides = array<i32: 1, 2, 1>} : memref<16x16x32xf32, #tpu.memory_space<vmem>>, vector<16x8x32xf32>
    %30 = arith.maximumf %28, %29 : vector<16x8x32xf32>
    %31 = vector.shape_cast %30 : vector<16x8x32xf32> to vector<2x8x8x32xf32>
    %c0_54 = arith.constant 0 : index
    %c1_55 = arith.constant 1 : index
    %c1_56 = arith.constant 1 : index
    %c0_57 = arith.constant 0 : index
    %32 = vector.load %arg12[%c0_54, %c1_55, %c1_56, %c0_57] : memref<2x10x10x32xf32, #tpu.memory_space<vmem>>, vector<2x8x8x32xf32>
    tpu.vector_store %arg12[%c0_54, %c1_55, %c1_56, %c0_57], %31 {strides = array<i32>} : memref<2x10x10x32xf32, #tpu.memory_space<vmem>>, vector<2x8x8x32xf32>,
    %c0_58 = arith.constant 0 : index
    %c0_59 = arith.constant 0 : index
    %c0_60 = arith.constant 0 : index
    %c0_61 = arith.constant 0 : index
    %33 = vector.load %arg12[%c0_58, %c0_59, %c0_60, %c0_61] : memref<2x10x10x32xf32, #tpu.memory_space<vmem>>, vector<2x8x8x32xf32>
    %34 = vector.shape_cast %33 : vector<2x8x8x32xf32> to vector<128x32xf32>
    %35 = arith.truncf %34 : vector<128x32xf32> to vector<128x32xbf16>
    %c0_62 = arith.constant 0 : index
    %c0_63 = arith.constant 0 : index
    %36 = vector.load %arg13[%c0_62, %c0_63] : memref<128x288xbf16, #tpu.memory_space<vmem>>, vector<128x32xbf16>
    tpu.vector_store %arg13[%c0_62, %c0_63], %35 {strides = array<i32>} : memref<128x288xbf16, #tpu.memory_space<vmem>>, vector<128x32xbf16>,
    %c0_64 = arith.constant 0 : index
    %c0_65 = arith.constant 0 : index
    %c1_66 = arith.constant 1 : index
    %c0_67 = arith.constant 0 : index
    %37 = vector.load %arg12[%c0_64, %c0_65, %c1_66, %c0_67] : memref<2x10x10x32xf32, #tpu.memory_space<vmem>>, vector<2x8x8x32xf32>
    %38 = vector.shape_cast %37 : vector<2x8x8x32xf32> to vector<128x32xf32>
    %39 = arith.truncf %38 : vector<128x32xf32> to vector<128x32xbf16>
    %c0_68 = arith.constant 0 : index
    %c32 = arith.constant 32 : index
    %40 = vector.load %arg13[%c0_68, %c32] : memref<128x288xbf16, #tpu.memory_space<vmem>>, vector<128x32xbf16>
    tpu.vector_store %arg13[%c0_68, %c32], %39 {strides = array<i32>} : memref<128x288xbf16, #tpu.memory_space<vmem>>, vector<128x32xbf16>,
    %c0_69 = arith.constant 0 : index
    %c0_70 = arith.constant 0 : index
    %c2 = arith.constant 2 : index
    %c0_71 = arith.constant 0 : index
    %41 = vector.load %arg12[%c0_69, %c0_70, %c2, %c0_71] : memref<2x10x10x32xf32, #tpu.memory_space<vmem>>, vector<2x8x8x32xf32>
    %42 = vector.shape_cast %41 : vector<2x8x8x32xf32> to vector<128x32xf32>
    %43 = arith.truncf %42 : vector<128x32xf32> to vector<128x32xbf16>
    %c0_72 = arith.constant 0 : index
    %c64 = arith.constant 64 : index
    %44 = vector.load %arg13[%c0_72, %c64] : memref<128x288xbf16, #tpu.memory_space<vmem>>, vector<128x32xbf16>
    tpu.vector_store %arg13[%c0_72, %c64], %43 {strides = array<i32>} : memref<128x288xbf16, #tpu.memory_space<vmem>>, vector<128x32xbf16>,
    %c0_73 = arith.constant 0 : index
    %c1_74 = arith.constant 1 : index
    %c0_75 = arith.constant 0 : index
    %c0_76 = arith.constant 0 : index
    %45 = vector.load %arg12[%c0_73, %c1_74, %c0_75, %c0_76] : memref<2x10x10x32xf32, #tpu.memory_space<vmem>>, vector<2x8x8x32xf32>
    %46 = vector.shape_cast %45 : vector<2x8x8x32xf32> to vector<128x32xf32>
    %47 = arith.truncf %46 : vector<128x32xf32> to vector<128x32xbf16>
    %c0_77 = arith.constant 0 : index
    %c96 = arith.constant 96 : index
    %48 = vector.load %arg13[%c0_77, %c96] : memref<128x288xbf16, #tpu.memory_space<vmem>>, vector<128x32xbf16>
    tpu.vector_store %arg13[%c0_77, %c96], %47 {strides = array<i32>} : memref<128x288xbf16, #tpu.memory_space<vmem>>, vector<128x32xbf16>,
    %c0_78 = arith.constant 0 : index
    %c1_79 = arith.constant 1 : index
    %c1_80 = arith.constant 1 : index
    %c0_81 = arith.constant 0 : index
    %49 = vector.load %arg12[%c0_78, %c1_79, %c1_80, %c0_81] : memref<2x10x10x32xf32, #tpu.memory_space<vmem>>, vector<2x8x8x32xf32>
    %50 = vector.shape_cast %49 : vector<2x8x8x32xf32> to vector<128x32xf32>
    %51 = arith.truncf %50 : vector<128x32xf32> to vector<128x32xbf16>
    %c0_82 = arith.constant 0 : index
    %c128 = arith.constant 128 : index
    %52 = vector.load %arg13[%c0_82, %c128] : memref<128x288xbf16, #tpu.memory_space<vmem>>, vector<128x32xbf16>
    tpu.vector_store %arg13[%c0_82, %c128], %51 {strides = array<i32>} : memref<128x288xbf16, #tpu.memory_space<vmem>>, vector<128x32xbf16>,
    %c0_83 = arith.constant 0 : index
    %c1_84 = arith.constant 1 : index
    %c2_85 = arith.constant 2 : index
    %c0_86 = arith.constant 0 : index
    %53 = vector.load %arg12[%c0_83, %c1_84, %c2_85, %c0_86] : memref<2x10x10x32xf32, #tpu.memory_space<vmem>>, vector<2x8x8x32xf32>
    %54 = vector.shape_cast %53 : vector<2x8x8x32xf32> to vector<128x32xf32>
    %55 = arith.truncf %54 : vector<128x32xf32> to vector<128x32xbf16>
    %c0_87 = arith.constant 0 : index
    %c160 = arith.constant 160 : index
    %56 = vector.load %arg13[%c0_87, %c160] : memref<128x288xbf16, #tpu.memory_space<vmem>>, vector<128x32xbf16>
    tpu.vector_store %arg13[%c0_87, %c160], %55 {strides = array<i32>} : memref<128x288xbf16, #tpu.memory_space<vmem>>, vector<128x32xbf16>,
    %c0_88 = arith.constant 0 : index
    %c2_89 = arith.constant 2 : index
    %c0_90 = arith.constant 0 : index
    %c0_91 = arith.constant 0 : index
    %57 = vector.load %arg12[%c0_88, %c2_89, %c0_90, %c0_91] : memref<2x10x10x32xf32, #tpu.memory_space<vmem>>, vector<2x8x8x32xf32>
    %58 = vector.shape_cast %57 : vector<2x8x8x32xf32> to vector<128x32xf32>
    %59 = arith.truncf %58 : vector<128x32xf32> to vector<128x32xbf16>
    %c0_92 = arith.constant 0 : index
    %c192 = arith.constant 192 : index
    %60 = vector.load %arg13[%c0_92, %c192] : memref<128x288xbf16, #tpu.memory_space<vmem>>, vector<128x32xbf16>
    tpu.vector_store %arg13[%c0_92, %c192], %59 {strides = array<i32>} : memref<128x288xbf16, #tpu.memory_space<vmem>>, vector<128x32xbf16>,
    %c0_93 = arith.constant 0 : index
    %c2_94 = arith.constant 2 : index
    %c1_95 = arith.constant 1 : index
    %c0_96 = arith.constant 0 : index
    %61 = vector.load %arg12[%c0_93, %c2_94, %c1_95, %c0_96] : memref<2x10x10x32xf32, #tpu.memory_space<vmem>>, vector<2x8x8x32xf32>
    %62 = vector.shape_cast %61 : vector<2x8x8x32xf32> to vector<128x32xf32>
    %63 = arith.truncf %62 : vector<128x32xf32> to vector<128x32xbf16>
    %c0_97 = arith.constant 0 : index
    %c224 = arith.constant 224 : index
    %64 = vector.load %arg13[%c0_97, %c224] : memref<128x288xbf16, #tpu.memory_space<vmem>>, vector<128x32xbf16>
    tpu.vector_store %arg13[%c0_97, %c224], %63 {strides = array<i32>} : memref<128x288xbf16, #tpu.memory_space<vmem>>, vector<128x32xbf16>,
    %c0_98 = arith.constant 0 : index
    %c2_99 = arith.constant 2 : index
    %c2_100 = arith.constant 2 : index
    %c0_101 = arith.constant 0 : index
    %65 = vector.load %arg12[%c0_98, %c2_99, %c2_100, %c0_101] : memref<2x10x10x32xf32, #tpu.memory_space<vmem>>, vector<2x8x8x32xf32>
    %66 = vector.shape_cast %65 : vector<2x8x8x32xf32> to vector<128x32xf32>
    %67 = arith.truncf %66 : vector<128x32xf32> to vector<128x32xbf16>
    %c0_102 = arith.constant 0 : index
    %c256 = arith.constant 256 : index
    %68 = vector.load %arg13[%c0_102, %c256] : memref<128x288xbf16, #tpu.memory_space<vmem>>, vector<128x32xbf16>
    tpu.vector_store %arg13[%c0_102, %c256], %67 {strides = array<i32>} : memref<128x288xbf16, #tpu.memory_space<vmem>>, vector<128x32xbf16>,
    %c0_103 = arith.constant 0 : index
    %c0_104 = arith.constant 0 : index
    %69 = vector.load %arg13[%c0_103, %c0_104] : memref<128x288xbf16, #tpu.memory_space<vmem>>, vector<128x288xbf16>
    %c0_105 = arith.constant 0 : index
    %c0_106 = arith.constant 0 : index
    %70 = vector.load %arg4[%c0_105, %c0_106] : memref<288x64xbf16, #tpu.memory_space<vmem>>, vector<288x64xbf16>
    %cst_107 = arith.constant dense<0.000000e+00> : vector<128x64xf32>
    %71 = tpu.matmul %69, %70, %cst_107 {dimension_numbers = #tpu.dot_dimension_numbers<[1], [0], [0], [1], [0, 0, 1, 1], [], []>} : vector<128x288xbf16>, vector<288x64xbf16>, vector<128x64xf32> -> vector<128x64xf32>
    %c0_108 = arith.constant 0 : index
    %c0_109 = arith.constant 0 : index
    %72 = vector.load %arg5[%c0_108, %c0_109] : memref<1x64xf32, #tpu.memory_space<vmem>>, vector<1x64xf32>
    %73 = vector.broadcast %72 : vector<1x64xf32> to vector<128x64xf32>
    %74 = arith.addf %71, %73 : vector<128x64xf32>
    %cst_110 = arith.constant 0.000000e+00 : f32
    %75 = vector.broadcast %cst_110 : f32 to vector<128x64xf32>
    %76 = arith.maximumf %74, %75 : vector<128x64xf32>
    %77 = vector.shape_cast %76 : vector<128x64xf32> to vector<8x2x8x64xf32>
    %cst_111 = arith.constant dense<0xFF800000> : vector<8x8x64xf32>
    %78 = vector.multi_reduction <maximumf>, %77, %cst_111 [1] : vector<8x2x8x64xf32> to vector<8x8x64xf32>
    %c0_112 = arith.constant 0 : index
    %c0_113 = arith.constant 0 : index
    %c0_114 = arith.constant 0 : index
    %79 = vector.load %arg14[%c0_112, %c0_113, %c0_114] : memref<8x8x64xf32, #tpu.memory_space<vmem>>, vector<8x8x64xf32>
    tpu.vector_store %arg14[%c0_112, %c0_113, %c0_114], %78 {strides = array<i32>} : memref<8x8x64xf32, #tpu.memory_space<vmem>>, vector<8x8x64xf32>,
    %c0_115 = arith.constant 0 : index
    %c0_116 = arith.constant 0 : index
    %c0_117 = arith.constant 0 : index
    %80 = tpu.strided_load %arg14[%c0_115, %c0_116, %c0_117] {strides = array<i32: 1, 2, 1>} : memref<8x8x64xf32, #tpu.memory_space<vmem>>, vector<8x4x64xf32>
    %c0_118 = arith.constant 0 : index
    %c1_119 = arith.constant 1 : index
    %c0_120 = arith.constant 0 : index
    %81 = tpu.strided_load %arg14[%c0_118, %c1_119, %c0_120] {strides = array<i32: 1, 2, 1>} : memref<8x8x64xf32, #tpu.memory_space<vmem>>, vector<8x4x64xf32>
    %82 = arith.maximumf %80, %81 : vector<8x4x64xf32>
    %83 = vector.shape_cast %82 : vector<8x4x64xf32> to vector<2x4x4x64xf32>
    %c0_121 = arith.constant 0 : index
    %c1_122 = arith.constant 1 : index
    %c1_123 = arith.constant 1 : index
    %c0_124 = arith.constant 0 : index
    %84 = vector.load %arg15[%c0_121, %c1_122, %c1_123, %c0_124] : memref<2x6x6x64xf32, #tpu.memory_space<vmem>>, vector<2x4x4x64xf32>
    tpu.vector_store %arg15[%c0_121, %c1_122, %c1_123, %c0_124], %83 {strides = array<i32>} : memref<2x6x6x64xf32, #tpu.memory_space<vmem>>, vector<2x4x4x64xf32>,
    %c0_125 = arith.constant 0 : index
    %c0_126 = arith.constant 0 : index
    %c0_127 = arith.constant 0 : index
    %c0_128 = arith.constant 0 : index
    %85 = vector.load %arg15[%c0_125, %c0_126, %c0_127, %c0_128] : memref<2x6x6x64xf32, #tpu.memory_space<vmem>>, vector<2x4x4x64xf32>
    %86 = vector.shape_cast %85 : vector<2x4x4x64xf32> to vector<32x64xf32>
    %87 = arith.truncf %86 : vector<32x64xf32> to vector<32x64xbf16>
    %c0_129 = arith.constant 0 : index
    %c0_130 = arith.constant 0 : index
    %88 = vector.load %arg16[%c0_129, %c0_130] : memref<32x576xbf16, #tpu.memory_space<vmem>>, vector<32x64xbf16>
    tpu.vector_store %arg16[%c0_129, %c0_130], %87 {strides = array<i32>} : memref<32x576xbf16, #tpu.memory_space<vmem>>, vector<32x64xbf16>,
    %c0_131 = arith.constant 0 : index
    %c0_132 = arith.constant 0 : index
    %c1_133 = arith.constant 1 : index
    %c0_134 = arith.constant 0 : index
    %89 = vector.load %arg15[%c0_131, %c0_132, %c1_133, %c0_134] : memref<2x6x6x64xf32, #tpu.memory_space<vmem>>, vector<2x4x4x64xf32>
    %90 = vector.shape_cast %89 : vector<2x4x4x64xf32> to vector<32x64xf32>
    %91 = arith.truncf %90 : vector<32x64xf32> to vector<32x64xbf16>
    %c0_135 = arith.constant 0 : index
    %c64_136 = arith.constant 64 : index
    %92 = vector.load %arg16[%c0_135, %c64_136] : memref<32x576xbf16, #tpu.memory_space<vmem>>, vector<32x64xbf16>
    tpu.vector_store %arg16[%c0_135, %c64_136], %91 {strides = array<i32>} : memref<32x576xbf16, #tpu.memory_space<vmem>>, vector<32x64xbf16>,
    %c0_137 = arith.constant 0 : index
    %c0_138 = arith.constant 0 : index
    %c2_139 = arith.constant 2 : index
    %c0_140 = arith.constant 0 : index
    %93 = vector.load %arg15[%c0_137, %c0_138, %c2_139, %c0_140] : memref<2x6x6x64xf32, #tpu.memory_space<vmem>>, vector<2x4x4x64xf32>
    %94 = vector.shape_cast %93 : vector<2x4x4x64xf32> to vector<32x64xf32>
    %95 = arith.truncf %94 : vector<32x64xf32> to vector<32x64xbf16>
    %c0_141 = arith.constant 0 : index
    %c128_142 = arith.constant 128 : index
    %96 = vector.load %arg16[%c0_141, %c128_142] : memref<32x576xbf16, #tpu.memory_space<vmem>>, vector<32x64xbf16>
    tpu.vector_store %arg16[%c0_141, %c128_142], %95 {strides = array<i32>} : memref<32x576xbf16, #tpu.memory_space<vmem>>, vector<32x64xbf16>,
    %c0_143 = arith.constant 0 : index
    %c1_144 = arith.constant 1 : index
    %c0_145 = arith.constant 0 : index
    %c0_146 = arith.constant 0 : index
    %97 = vector.load %arg15[%c0_143, %c1_144, %c0_145, %c0_146] : memref<2x6x6x64xf32, #tpu.memory_space<vmem>>, vector<2x4x4x64xf32>
    %98 = vector.shape_cast %97 : vector<2x4x4x64xf32> to vector<32x64xf32>
    %99 = arith.truncf %98 : vector<32x64xf32> to vector<32x64xbf16>
    %c0_147 = arith.constant 0 : index
    %c192_148 = arith.constant 192 : index
    %100 = vector.load %arg16[%c0_147, %c192_148] : memref<32x576xbf16, #tpu.memory_space<vmem>>, vector<32x64xbf16>
    tpu.vector_store %arg16[%c0_147, %c192_148], %99 {strides = array<i32>} : memref<32x576xbf16, #tpu.memory_space<vmem>>, vector<32x64xbf16>,
    %c0_149 = arith.constant 0 : index
    %c1_150 = arith.constant 1 : index
    %c1_151 = arith.constant 1 : index
    %c0_152 = arith.constant 0 : index
    %101 = vector.load %arg15[%c0_149, %c1_150, %c1_151, %c0_152] : memref<2x6x6x64xf32, #tpu.memory_space<vmem>>, vector<2x4x4x64xf32>
    %102 = vector.shape_cast %101 : vector<2x4x4x64xf32> to vector<32x64xf32>
    %103 = arith.truncf %102 : vector<32x64xf32> to vector<32x64xbf16>
    %c0_153 = arith.constant 0 : index
    %c256_154 = arith.constant 256 : index
    %104 = vector.load %arg16[%c0_153, %c256_154] : memref<32x576xbf16, #tpu.memory_space<vmem>>, vector<32x64xbf16>
    tpu.vector_store %arg16[%c0_153, %c256_154], %103 {strides = array<i32>} : memref<32x576xbf16, #tpu.memory_space<vmem>>, vector<32x64xbf16>,
    %c0_155 = arith.constant 0 : index
    %c1_156 = arith.constant 1 : index
    %c2_157 = arith.constant 2 : index
    %c0_158 = arith.constant 0 : index
    %105 = vector.load %arg15[%c0_155, %c1_156, %c2_157, %c0_158] : memref<2x6x6x64xf32, #tpu.memory_space<vmem>>, vector<2x4x4x64xf32>
    %106 = vector.shape_cast %105 : vector<2x4x4x64xf32> to vector<32x64xf32>
    %107 = arith.truncf %106 : vector<32x64xf32> to vector<32x64xbf16>
    %c0_159 = arith.constant 0 : index
    %c320 = arith.constant 320 : index
    %108 = vector.load %arg16[%c0_159, %c320] : memref<32x576xbf16, #tpu.memory_space<vmem>>, vector<32x64xbf16>
    tpu.vector_store %arg16[%c0_159, %c320], %107 {strides = array<i32>} : memref<32x576xbf16, #tpu.memory_space<vmem>>, vector<32x64xbf16>,
    %c0_160 = arith.constant 0 : index
    %c2_161 = arith.constant 2 : index
    %c0_162 = arith.constant 0 : index
    %c0_163 = arith.constant 0 : index
    %109 = vector.load %arg15[%c0_160, %c2_161, %c0_162, %c0_163] : memref<2x6x6x64xf32, #tpu.memory_space<vmem>>, vector<2x4x4x64xf32>
    %110 = vector.shape_cast %109 : vector<2x4x4x64xf32> to vector<32x64xf32>
    %111 = arith.truncf %110 : vector<32x64xf32> to vector<32x64xbf16>
    %c0_164 = arith.constant 0 : index
    %c384 = arith.constant 384 : index
    %112 = vector.load %arg16[%c0_164, %c384] : memref<32x576xbf16, #tpu.memory_space<vmem>>, vector<32x64xbf16>
    tpu.vector_store %arg16[%c0_164, %c384], %111 {strides = array<i32>} : memref<32x576xbf16, #tpu.memory_space<vmem>>, vector<32x64xbf16>,
    %c0_165 = arith.constant 0 : index
    %c2_166 = arith.constant 2 : index
    %c1_167 = arith.constant 1 : index
    %c0_168 = arith.constant 0 : index
    %113 = vector.load %arg15[%c0_165, %c2_166, %c1_167, %c0_168] : memref<2x6x6x64xf32, #tpu.memory_space<vmem>>, vector<2x4x4x64xf32>
    %114 = vector.shape_cast %113 : vector<2x4x4x64xf32> to vector<32x64xf32>
    %115 = arith.truncf %114 : vector<32x64xf32> to vector<32x64xbf16>
    %c0_169 = arith.constant 0 : index
    %c448 = arith.constant 448 : index
    %116 = vector.load %arg16[%c0_169, %c448] : memref<32x576xbf16, #tpu.memory_space<vmem>>, vector<32x64xbf16>
    tpu.vector_store %arg16[%c0_169, %c448], %115 {strides = array<i32>} : memref<32x576xbf16, #tpu.memory_space<vmem>>, vector<32x64xbf16>,
    %c0_170 = arith.constant 0 : index
    %c2_171 = arith.constant 2 : index
    %c2_172 = arith.constant 2 : index
    %c0_173 = arith.constant 0 : index
    %117 = vector.load %arg15[%c0_170, %c2_171, %c2_172, %c0_173] : memref<2x6x6x64xf32, #tpu.memory_space<vmem>>, vector<2x4x4x64xf32>
    %118 = vector.shape_cast %117 : vector<2x4x4x64xf32> to vector<32x64xf32>
    %119 = arith.truncf %118 : vector<32x64xf32> to vector<32x64xbf16>
    %c0_174 = arith.constant 0 : index
    %c512 = arith.constant 512 : index
    %120 = vector.load %arg16[%c0_174, %c512] : memref<32x576xbf16, #tpu.memory_space<vmem>>, vector<32x64xbf16>
    tpu.vector_store %arg16[%c0_174, %c512], %119 {strides = array<i32>} : memref<32x576xbf16, #tpu.memory_space<vmem>>, vector<32x64xbf16>,
    %c0_175 = arith.constant 0 : index
    %c0_176 = arith.constant 0 : index
    %121 = vector.load %arg16[%c0_175, %c0_176] : memref<32x576xbf16, #tpu.memory_space<vmem>>, vector<32x576xbf16>
    %c0_177 = arith.constant 0 : index
    %c0_178 = arith.constant 0 : index
    %122 = vector.load %arg6[%c0_177, %c0_178] : memref<576x128xbf16, #tpu.memory_space<vmem>>, vector<576x128xbf16>
    %cst_179 = arith.constant dense<0.000000e+00> : vector<32x128xf32>
    %123 = tpu.matmul %121, %122, %cst_179 {dimension_numbers = #tpu.dot_dimension_numbers<[1], [0], [0], [1], [0, 0, 1, 1], [], []>} : vector<32x576xbf16>, vector<576x128xbf16>, vector<32x128xf32> -> vector<32x128xf32>
    %c0_180 = arith.constant 0 : index
    %c0_181 = arith.constant 0 : index
    %124 = vector.load %arg7[%c0_180, %c0_181] : memref<1x128xf32, #tpu.memory_space<vmem>>, vector<1x128xf32>
    %125 = vector.broadcast %124 : vector<1x128xf32> to vector<32x128xf32>
    %126 = arith.addf %123, %125 : vector<32x128xf32>
    %cst_182 = arith.constant 0.000000e+00 : f32
    %127 = vector.broadcast %cst_182 : f32 to vector<32x128xf32>
    %128 = arith.maximumf %126, %127 : vector<32x128xf32>
    %129 = vector.shape_cast %128 : vector<32x128xf32> to vector<2x16x128xf32>
    %cst_183 = arith.constant dense<0.000000e+00> : vector<2x128xf32>
    %130 = vector.multi_reduction <add>, %129, %cst_183 [1] : vector<2x16x128xf32> to vector<2x128xf32>
    %c0_184 = arith.constant 0 : index
    %c0_185 = arith.constant 0 : index
    %131 = vector.load %arg8[%c0_184, %c0_185] : memref<128x128xf32, #tpu.memory_space<vmem>>, vector<128x128xf32>
    %cst_186 = arith.constant dense<0.000000e+00> : vector<2x128xf32>
    %132 = tpu.matmul %130, %131, %cst_186 {dimension_numbers = #tpu.dot_dimension_numbers<[1], [0], [0], [1], [0, 0, 1, 1], [], []>} : vector<2x128xf32>, vector<128x128xf32>, vector<2x128xf32> -> vector<2x128xf32>
    %c0_187 = arith.constant 0 : index
    %c0_188 = arith.constant 0 : index
    %133 = vector.load %arg9[%c0_187, %c0_188] : memref<1x128xf32, #tpu.memory_space<vmem>>, vector<1x128xf32>
    %134 = vector.broadcast %133 : vector<1x128xf32> to vector<2x128xf32>
    %135 = arith.addf %132, %134 : vector<2x128xf32>
    %c0_189 = arith.constant 0 : index
    %c0_190 = arith.constant 0 : index
    %136 = vector.load %arg10[%c0_189, %c0_190] : memref<2x128xf32, #tpu.memory_space<vmem>>, vector<2x128xf32>
    tpu.vector_store %arg10[%c0_189, %c0_190], %135 {strides = array<i32>} : memref<2x128xf32, #tpu.memory_space<vmem>>, vector<2x128xf32>,
    return
  }
  func.func @transform_0(%arg0: i32) -> (i32, i32, i32) {
    %c0_i32 = arith.constant 0 : i32
    %c0_i32_0 = arith.constant 0 : i32
    %c0_i32_1 = arith.constant 0 : i32
    return %arg0, %c0_i32, %c0_i32_0 : i32, i32, i32
  }
  func.func @transform_1(%arg0: i32) -> (i32, i32) {
    %c0_i32 = arith.constant 0 : i32
    %c0_i32_0 = arith.constant 0 : i32
    %c0_i32_1 = arith.constant 0 : i32
    return %c0_i32, %c0_i32_0 : i32, i32
  }
  func.func @transform_2(%arg0: i32) -> (i32, i32) {
    %c0_i32 = arith.constant 0 : i32
    %c0_i32_0 = arith.constant 0 : i32
    %c0_i32_1 = arith.constant 0 : i32
    return %c0_i32, %c0_i32_0 : i32, i32
  }
  func.func @transform_3(%arg0: i32) -> (i32, i32) {
    %c0_i32 = arith.constant 0 : i32
    %c0_i32_0 = arith.constant 0 : i32
    %c0_i32_1 = arith.constant 0 : i32
    return %c0_i32, %c0_i32_0 : i32, i32
  }
  func.func @transform_4(%arg0: i32) -> (i32, i32) {
    %c0_i32 = arith.constant 0 : i32
    %c0_i32_0 = arith.constant 0 : i32
    %c0_i32_1 = arith.constant 0 : i32
    return %c0_i32, %c0_i32_0 : i32, i32
  }
  func.func @transform_5(%arg0: i32) -> (i32, i32) {
    %c0_i32 = arith.constant 0 : i32
    %c0_i32_0 = arith.constant 0 : i32
    %c0_i32_1 = arith.constant 0 : i32
    return %c0_i32, %c0_i32_0 : i32, i32
  }
  func.func @transform_6(%arg0: i32) -> (i32, i32) {
    %c0_i32 = arith.constant 0 : i32
    %c0_i32_0 = arith.constant 0 : i32
    %c0_i32_1 = arith.constant 0 : i32
    return %c0_i32, %c0_i32_0 : i32, i32
  }
  func.func @transform_7(%arg0: i32) -> (i32, i32) {
    %c0_i32 = arith.constant 0 : i32
    %c0_i32_0 = arith.constant 0 : i32
    %c0_i32_1 = arith.constant 0 : i32
    return %c0_i32, %c0_i32_0 : i32, i32
  }
  func.func @transform_8(%arg0: i32) -> (i32, i32) {
    %c0_i32 = arith.constant 0 : i32
    %c0_i32_0 = arith.constant 0 : i32
    %c0_i32_1 = arith.constant 0 : i32
    return %c0_i32, %c0_i32_0 : i32, i32
  }
  func.func @transform_9(%arg0: i32) -> (i32, i32) {
    %c0_i32 = arith.constant 0 : i32
    %c0_i32_0 = arith.constant 0 : i32
    return %arg0, %c0_i32 : i32, i32
  }
}

</mosaic_0001>

<llo_original>
// kernel: conv_gap_forward.1
$region0: #{conv_gap_forward.1}
  #allocation0 [shape = 'u32[]', space=smem, size = 0x4, offset = 0x4, fixed_abs, tag = 'smem constant byte address 0x4 - core index']
  #allocation1 [shape = 'u32[144,128]{1,0:T(1,128)}', space=vmem, size = 0x12000, scoped, tag = 'internal scratch']
  #allocation2 [shape = 'f32[16,16,32]{2,1,0:T(8,128)}', space=vmem, size = 0x20000, scoped, tag = 'scratch operand']
  #allocation3 [shape = 'f32[2,10,10,32]{3,2,1,0:T(8,128)}', space=vmem, size = 0x28000, scoped, tag = 'scratch operand']
  #allocation4 [shape = 'bf16[128,288]{1,0:T(8,128)(2,1)}', space=vmem, size = 0x18000, scoped, tag = 'scratch operand']
  #allocation5 [shape = 'f32[8,8,64]{2,1,0:T(8,128)}', space=vmem, size = 0x8000, scoped, tag = 'scratch operand']
  #allocation6 [shape = 'f32[2,6,6,64]{3,2,1,0:T(8,128)}', space=vmem, size = 0xc000, scoped, tag = 'scratch operand']
  #allocation7 [shape = 'bf16[32,576]{1,0:T(8,128)(2,1)}', space=vmem, size = 0xa000, scoped, tag = 'scratch operand']
  %s0 = inlined_call_operand.vmem [shape: bf16[2,256,32], index: 0, kind: input, shape index: {}]
  %s1 = inlined_call_operand.vmem [shape: bf16[32,32], index: 1, kind: input, shape index: {}]
  %s2 = inlined_call_operand.vmem [shape: f32[1,32], index: 2, kind: input, shape index: {}]
  %s3 = inlined_call_operand.vmem [shape: bf16[288,64], index: 3, kind: input, shape index: {}]
  %s4 = inlined_call_operand.vmem [shape: f32[1,64], index: 4, kind: input, shape index: {}]
  %s5 = inlined_call_operand.vmem [shape: bf16[576,128], index: 5, kind: input, shape index: {}]
  %s6 = inlined_call_operand.vmem [shape: f32[1,128], index: 6, kind: input, shape index: {}]
  %s7 = inlined_call_operand.vmem [shape: f32[128,128], index: 7, kind: input, shape index: {}]
  %s8 = inlined_call_operand.vmem [shape: f32[1,128], index: 8, kind: input, shape index: {}]
  %s9 = inlined_call_operand.hbm [shape: f32[2,128], index: 9, kind: output, shape index: {}]
  %s10 = sld [smem:[#allocation0]]
  $region46: #{conv_gap_forward.1} parent=0
    _
  %s12 = ssub.s32 1, %s10
  %s13 = scalar_select 0, %s12, %s10
  $region1: #{conv_gap_forward.1} parent=0
    #allocation8 [shape = 'u8[1024]{0}', space=vmem, size = 0x400, scoped, tag = 'output window, operand 0, single buffered']
    #allocation9 [shape = 's32[1]{0}', space=sflag, size = 0x4, scoped, tag = 'scoped memory for conv_gap_forward.1']
    %14 = vsyncpa [#allocation9], 0
    // Predicated region
    $region2: #{conv_gap_forward.1} parent=1 // pred_check
      _
    $region3: #{conv_gap_forward.1} parent=1 // pred_check_branch
      %16 = sbr.rel (0) target = $region5
    $region4: #{conv_gap_forward.1} parent=1 // pred_region
      _
    $region5: #{conv_gap_forward.1} parent=1 // pred_fallthru
      _
    // Predicated region
    $region6: #{conv_gap_forward.1} parent=1 // pred_check
      _
    $region7: #{conv_gap_forward.1} parent=1 // pred_check_branch
      %18 = sbr.rel (0) target = $region9
    $region8: #{conv_gap_forward.1} parent=1 // pred_region
      _
    $region9: #{conv_gap_forward.1} parent=1 // pred_fallthru
      _
    // Predicated region
    $region10: #{conv_gap_forward.1} parent=1 // pred_check
      _
    $region11: #{conv_gap_forward.1} parent=1 // pred_check_branch
      %20 = sbr.rel (0) target = $region13
    $region12: #{conv_gap_forward.1} parent=1 // pred_region
      _
    $region13: #{conv_gap_forward.1} parent=1 // pred_fallthru
      _
    // Predicated region
    $region14: #{conv_gap_forward.1} parent=1 // pred_check
      _
    $region15: #{conv_gap_forward.1} parent=1 // pred_check_branch
      %22 = sbr.rel (0) target = $region17
    $region16: #{conv_gap_forward.1} parent=1 // pred_region
      _
    $region17: #{conv_gap_forward.1} parent=1 // pred_fallthru
      _
    // Predicated region
    $region18: #{conv_gap_forward.1} parent=1 // pred_check
      _
    $region19: #{conv_gap_forward.1} parent=1 // pred_check_branch
      %24 = sbr.rel (0) target = $region21
    $region20: #{conv_gap_forward.1} parent=1 // pred_region
      _
    $region21: #{conv_gap_forward.1} parent=1 // pred_fallthru
      _
    // Predicated region
    $region22: #{conv_gap_forward.1} parent=1 // pred_check
      _
    $region23: #{conv_gap_forward.1} parent=1 // pred_check_branch
      %26 = sbr.rel (0) target = $region25
    $region24: #{conv_gap_forward.1} parent=1 // pred_region
      _
    $region25: #{conv_gap_forward.1} parent=1 // pred_fallthru
      _
    // Predicated region
    $region26: #{conv_gap_forward.1} parent=1 // pred_check
      _
    $region27: #{conv_gap_forward.1} parent=1 // pred_check_branch
      %28 = sbr.rel (0) target = $region29
    $region28: #{conv_gap_forward.1} parent=1 // pred_region
      _
    $region29: #{conv_gap_forward.1} parent=1 // pred_fallthru
      _
    // Predicated region
    $region30: #{conv_gap_forward.1} parent=1 // pred_check
      _
    $region31: #{conv_gap_forward.1} parent=1 // pred_check_branch
      %30 = sbr.rel (0) target = $region33
    $region32: #{conv_gap_forward.1} parent=1 // pred_region
      _
    $region33: #{conv_gap_forward.1} parent=1 // pred_fallthru
      _
    // Predicated region
    $region34: #{conv_gap_forward.1} parent=1 // pred_check
      _
    $region35: #{conv_gap_forward.1} parent=1 // pred_check_branch
      %32 = sbr.rel (0) target = $region37
    $region36: #{conv_gap_forward.1} parent=1 // pred_region
      _
    $region37: #{conv_gap_forward.1} parent=1 // pred_fallthru
      _
    %vm34 = vcmask 261120
    %35 = vst.msk [vmem:[#allocation3] sm:$0xff] %vm34, 0.0
    %vm36 = vcmask 254976
    %37 = vst.msk [vmem:[#allocation3 + $0x8] sm:$0x3] %vm36, 0.0
    %38 = vst.msk [vmem:[#allocation3 + $0xa0] sm:$0xff] %vm34, 0.0
    %39 = vst.msk [vmem:[#allocation3 + $0xa8] sm:$0x3] %vm36, 0.0
    %s40 = scalar_lea.vmem [#allocation3], 144
    %41 = vst.msk [vmem:[%s40] sm:$0xff] %vm34, 0.0
    %42 = vst.msk [vmem:[%s40 + $0x8] sm:$0x3] %vm36, 0.0
    %43 = vst.msk [vmem:[%s40 + $0xa0] sm:$0xff] %vm34, 0.0
    %44 = vst.msk [vmem:[%s40 + $0xa8] sm:$0x3] %vm36, 0.0
    %vm45 = vcmask 253952
    %46 = vst.msk [vmem:[#allocation3] sm:$0x1] %vm45, 0.0
    %47 = vst.msk [vmem:[#allocation3 + $0x10] sm:$0x1] %vm45, 0.0
    %48 = vst.msk [vmem:[#allocation3 + $0x20] sm:$0x1] %vm45, 0.0
    %49 = vst.msk [vmem:[#allocation3 + $0x30] sm:$0x1] %vm45, 0.0
    %50 = vst.msk [vmem:[#allocation3 + $0x40] sm:$0x1] %vm45, 0.0
    %51 = vst.msk [vmem:[#allocation3 + $0x50] sm:$0x1] %vm45, 0.0
    %52 = vst.msk [vmem:[#allocation3 + $0x60] sm:$0x1] %vm45, 0.0
    %53 = vst.msk [vmem:[#allocation3 + $0x70] sm:$0x1] %vm45, 0.0
    %54 = vst.msk [vmem:[#allocation3 + $0x80] sm:$0x1] %vm45, 0.0
    %55 = vst.msk [vmem:[#allocation3 + $0x90] sm:$0x1] %vm45, 0.0
    %56 = vst.msk [vmem:[#allocation3 + $0xa0] sm:$0x1] %vm45, 0.0
    %57 = vst.msk [vmem:[#allocation3 + $0xb0] sm:$0x1] %vm45, 0.0
    %58 = vst.msk [vmem:[#allocation3 + $0xc0] sm:$0x1] %vm45, 0.0
    %59 = vst.msk [vmem:[#allocation3 + $0xd0] sm:$0x1] %vm45, 0.0
    %60 = vst.msk [vmem:[#allocation3 + $0xe0] sm:$0x1] %vm45, 0.0
    %61 = vst.msk [vmem:[#allocation3 + $0xf0] sm:$0x1] %vm45, 0.0
    %62 = vst.msk [vmem:[#allocation3 + $0x100] sm:$0x1] %vm45, 0.0
    %63 = vst.msk [vmem:[#allocation3 + $0x110] sm:$0x1] %vm45, 0.0
    %64 = vst.msk [vmem:[#allocation3 + $0x120] sm:$0x1] %vm45, 0.0
    %65 = vst.msk [vmem:[#allocation3 + $0x130] sm:$0x1] %vm45, 0.0
    %66 = vst.msk [vmem:[#allocation3 + $0x9] sm:$0x1] %vm45, 0.0
    %67 = vst.msk [vmem:[#allocation3 + $0x19] sm:$0x1] %vm45, 0.0
    %68 = vst.msk [vmem:[#allocation3 + $0x29] sm:$0x1] %vm45, 0.0
    %69 = vst.msk [vmem:[#allocation3 + $0x39] sm:$0x1] %vm45, 0.0
    %70 = vst.msk [vmem:[#allocation3 + $0x49] sm:$0x1] %vm45, 0.0
    %71 = vst.msk [vmem:[#allocation3 + $0x59] sm:$0x1] %vm45, 0.0
    %72 = vst.msk [vmem:[#allocation3 + $0x69] sm:$0x1] %vm45, 0.0
    %73 = vst.msk [vmem:[#allocation3 + $0x79] sm:$0x1] %vm45, 0.0
    %74 = vst.msk [vmem:[#allocation3 + $0x89] sm:$0x1] %vm45, 0.0
    %75 = vst.msk [vmem:[#allocation3 + $0x99] sm:$0x1] %vm45, 0.0
    %76 = vst.msk [vmem:[#allocation3 + $0xa9] sm:$0x1] %vm45, 0.0
    %77 = vst.msk [vmem:[#allocation3 + $0xb9] sm:$0x1] %vm45, 0.0
    %78 = vst.msk [vmem:[#allocation3 + $0xc9] sm:$0x1] %vm45, 0.0
    %79 = vst.msk [vmem:[#allocation3 + $0xd9] sm:$0x1] %vm45, 0.0
    %80 = vst.msk [vmem:[#allocation3 + $0xe9] sm:$0x1] %vm45, 0.0
    %81 = vst.msk [vmem:[#allocation3 + $0xf9] sm:$0x1] %vm45, 0.0
    %82 = vst.msk [vmem:[#allocation3 + $0x109] sm:$0x1] %vm45, 0.0
    %83 = vst.msk [vmem:[#allocation3 + $0x119] sm:$0x1] %vm45, 0.0
    %84 = vst.msk [vmem:[#allocation3 + $0x129] sm:$0x1] %vm45, 0.0
    %85 = vst.msk [vmem:[#allocation3 + $0x139] sm:$0x1] %vm45, 0.0
    %vm86 = vcmask 521216
    %87 = vst.msk [vmem:[#allocation6] sm:$0x3f] %vm86, 0.0
    %88 = vst.msk [vmem:[#allocation6 + $0x30] sm:$0x3f] %vm86, 0.0
    %s89 = scalar_lea.vmem [#allocation6], 40
    %90 = vst.msk [vmem:[%s89] sm:$0x3f] %vm86, 0.0
    %91 = vst.msk [vmem:[%s89 + $0x30] sm:$0x3f] %vm86, 0.0
    %vm92 = vcmask 516096
    %93 = vst.msk [vmem:[#allocation6] sm:$0x1] %vm92, 0.0
    %94 = vst.msk [vmem:[#allocation6 + $0x8] sm:$0x1] %vm92, 0.0
    %95 = vst.msk [vmem:[#allocation6 + $0x10] sm:$0x1] %vm92, 0.0
    %96 = vst.msk [vmem:[#allocation6 + $0x18] sm:$0x1] %vm92, 0.0
    %97 = vst.msk [vmem:[#allocation6 + $0x20] sm:$0x1] %vm92, 0.0
    %98 = vst.msk [vmem:[#allocation6 + $0x28] sm:$0x1] %vm92, 0.0
    %99 = vst.msk [vmem:[#allocation6 + $0x30] sm:$0x1] %vm92, 0.0
    %100 = vst.msk [vmem:[#allocation6 + $0x38] sm:$0x1] %vm92, 0.0
    %101 = vst.msk [vmem:[#allocation6 + $0x40] sm:$0x1] %vm92, 0.0
    %102 = vst.msk [vmem:[#allocation6 + $0x48] sm:$0x1] %vm92, 0.0
    %103 = vst.msk [vmem:[#allocation6 + $0x50] sm:$0x1] %vm92, 0.0
    %104 = vst.msk [vmem:[#allocation6 + $0x58] sm:$0x1] %vm92, 0.0
    %105 = vst.msk [vmem:[#allocation6 + $0x5] sm:$0x1] %vm92, 0.0
    %106 = vst.msk [vmem:[#allocation6 + $0xd] sm:$0x1] %vm92, 0.0
    %107 = vst.msk [vmem:[#allocation6 + $0x15] sm:$0x1] %vm92, 0.0
    %108 = vst.msk [vmem:[#allocation6 + $0x1d] sm:$0x1] %vm92, 0.0
    %109 = vst.msk [vmem:[#allocation6 + $0x25] sm:$0x1] %vm92, 0.0
    %110 = vst.msk [vmem:[#allocation6 + $0x2d] sm:$0x1] %vm92, 0.0
    %111 = vst.msk [vmem:[#allocation6 + $0x35] sm:$0x1] %vm92, 0.0
    %112 = vst.msk [vmem:[#allocation6 + $0x3d] sm:$0x1] %vm92, 0.0
    %113 = vst.msk [vmem:[#allocation6 + $0x45] sm:$0x1] %vm92, 0.0
    %114 = vst.msk [vmem:[#allocation6 + $0x4d] sm:$0x1] %vm92, 0.0
    %115 = vst.msk [vmem:[#allocation6 + $0x55] sm:$0x1] %vm92, 0.0
    %116 = vst.msk [vmem:[#allocation6 + $0x5d] sm:$0x1] %vm92, 0.0
    %v117 = vld [vmem:[%s0] sm:$0xf]
    %v118 = vld [vmem:[%s0 + $0x4] sm:$0xf]
    %v119 = vld [vmem:[%s0 + $0x8] sm:$0xf]
    %v120 = vld [vmem:[%s0 + $0xc] sm:$0xf]
    %v121 = vld [vmem:[%s0 + $0x10] sm:$0xf]
    %v122 = vld [vmem:[%s0 + $0x14] sm:$0xf]
    %v123 = vld [vmem:[%s0 + $0x18] sm:$0xf]
    %v124 = vld [vmem:[%s0 + $0x1c] sm:$0xf]
    %v125 = vld [vmem:[%s0 + $0x20] sm:$0xf]
    %v126 = vld [vmem:[%s0 + $0x24] sm:$0xf]
    %v127 = vld [vmem:[%s0 + $0x28] sm:$0xf]
    %v128 = vld [vmem:[%s0 + $0x2c] sm:$0xf]
    %v129 = vld [vmem:[%s0 + $0x30] sm:$0xf]
    %v130 = vld [vmem:[%s0 + $0x34] sm:$0xf]
    %v131 = vld [vmem:[%s0 + $0x38] sm:$0xf]
    %v132 = vld [vmem:[%s0 + $0x3c] sm:$0xf]
    %v133 = vld [vmem:[%s0 + $0x40] sm:$0xf]
    %v134 = vld [vmem:[%s0 + $0x44] sm:$0xf]
    %v135 = vld [vmem:[%s0 + $0x48] sm:$0xf]
    %v136 = vld [vmem:[%s0 + $0x4c] sm:$0xf]
    %v137 = vld [vmem:[%s0 + $0x50] sm:$0xf]
    %v138 = vld [vmem:[%s0 + $0x54] sm:$0xf]
    %v139 = vld [vmem:[%s0 + $0x58] sm:$0xf]
    %v140 = vld [vmem:[%s0 + $0x5c] sm:$0xf]
    %v141 = vld [vmem:[%s0 + $0x60] sm:$0xf]
    %v142 = vld [vmem:[%s0 + $0x64] sm:$0xf]
    %v143 = vld [vmem:[%s0 + $0x68] sm:$0xf]
    %v144 = vld [vmem:[%s0 + $0x6c] sm:$0xf]
    %v145 = vld [vmem:[%s0 + $0x70] sm:$0xf]
    %v146 = vld [vmem:[%s0 + $0x74] sm:$0xf]
    %v147 = vld [vmem:[%s0 + $0x78] sm:$0xf]
    %v148 = vld [vmem:[%s0 + $0x7c] sm:$0xf]
    %v149 = vld [vmem:[%s0 + $0x80] sm:$0xf]
    %v150 = vld [vmem:[%s0 + $0x84] sm:$0xf]
    %v151 = vld [vmem:[%s0 + $0x88] sm:$0xf]
    %v152 = vld [vmem:[%s0 + $0x8c] sm:$0xf]
    %v153 = vld [vmem:[%s0 + $0x90] sm:$0xf]
    %v154 = vld [vmem:[%s0 + $0x94] sm:$0xf]
    %v155 = vld [vmem:[%s0 + $0x98] sm:$0xf]
    %v156 = vld [vmem:[%s0 + $0x9c] sm:$0xf]
    %v157 = vld [vmem:[%s0 + $0xa0] sm:$0xf]
    %v158 = vld [vmem:[%s0 + $0xa4] sm:$0xf]
    %v159 = vld [vmem:[%s0 + $0xa8] sm:$0xf]
    %v160 = vld [vmem:[%s0 + $0xac] sm:$0xf]
    %v161 = vld [vmem:[%s0 + $0xb0] sm:$0xf]
    %v162 = vld [vmem:[%s0 + $0xb4] sm:$0xf]
    %v163 = vld [vmem:[%s0 + $0xb8] sm:$0xf]
    %v164 = vld [vmem:[%s0 + $0xbc] sm:$0xf]
    %v165 = vld [vmem:[%s0 + $0xc0] sm:$0xf]
    %v166 = vld [vmem:[%s0 + $0xc4] sm:$0xf]
    %v167 = vld [vmem:[%s0 + $0xc8] sm:$0xf]
    %v168 = vld [vmem:[%s0 + $0xcc] sm:$0xf]
    %v169 = vld [vmem:[%s0 + $0xd0] sm:$0xf]
    %v170 = vld [vmem:[%s0 + $0xd4] sm:$0xf]
    %v171 = vld [vmem:[%s0 + $0xd8] sm:$0xf]
    %v172 = vld [vmem:[%s0 + $0xdc] sm:$0xf]
    %v173 = vld [vmem:[%s0 + $0xe0] sm:$0xf]
    %v174 = vld [vmem:[%s0 + $0xe4] sm:$0xf]
    %v175 = vld [vmem:[%s0 + $0xe8] sm:$0xf]
    %v176 = vld [vmem:[%s0 + $0xec] sm:$0xf]
    %v177 = vld [vmem:[%s0 + $0xf0] sm:$0xf]
    %v178 = vld [vmem:[%s0 + $0xf4] sm:$0xf]
    %v179 = vld [vmem:[%s0 + $0xf8] sm:$0xf]
    %v180 = vld [vmem:[%s0 + $0xfc] sm:$0xf]
    %v181 = vld [vmem:[%s1] sm:$0xf]
    %v182 = vld [vmem:[%s1 + $0x4] sm:$0xf]
    %v183 = vld [vmem:[%s1 + $0x8] sm:$0xf]
    %v184 = vld [vmem:[%s1 + $0xc] sm:$0xf]
    %v185 = vld [vmem:[%s2] sm:$0x1]
    %v187 = vlaneseq
    %v188 = vshrl.u32 %v187, 7
    %v189 = vsub.s32 0, %v188
    %v190 = vrot.slane %v185, %v189
    %v256 = vunpack.c.l.b16 %v117
    %v257 = vunpack.c.l.b16 %v118
    %v258 = vunpack.c.l.b16 %v119
    %v259 = vunpack.c.l.b16 %v120
    %v260 = vunpack.c.l.b16 %v121
    %v261 = vunpack.c.l.b16 %v122
    %v262 = vunpack.c.l.b16 %v123
    %v263 = vunpack.c.l.b16 %v124
    %v264 = vunpack.c.l.b16 %v125
    %v265 = vunpack.c.l.b16 %v126
    %v266 = vunpack.c.l.b16 %v127
    %v267 = vunpack.c.l.b16 %v128
    %v268 = vunpack.c.l.b16 %v129
    %v269 = vunpack.c.l.b16 %v130
    %v270 = vunpack.c.l.b16 %v131
    %v271 = vunpack.c.l.b16 %v132
    %v272 = vunpack.c.l.b16 %v133
    %v273 = vunpack.c.l.b16 %v134
    %v274 = vunpack.c.l.b16 %v135
    %v275 = vunpack.c.l.b16 %v136
    %v276 = vunpack.c.l.b16 %v137
    %v277 = vunpack.c.l.b16 %v138
    %v278 = vunpack.c.l.b16 %v139
    %v279 = vunpack.c.l.b16 %v140
    %v280 = vunpack.c.l.b16 %v141
    %v281 = vunpack.c.l.b16 %v142
    %v282 = vunpack.c.l.b16 %v143
    %v283 = vunpack.c.l.b16 %v144
    %v284 = vunpack.c.l.b16 %v145
    %v285 = vunpack.c.l.b16 %v146
    %v286 = vunpack.c.l.b16 %v147
    %v287 = vunpack.c.l.b16 %v148
    %v288 = vunpack.c.l.b16 %v149
    %v289 = vunpack.c.l.b16 %v150
    %v290 = vunpack.c.l.b16 %v151
    %v291 = vunpack.c.l.b16 %v152
    %v292 = vunpack.c.l.b16 %v153
    %v293 = vunpack.c.l.b16 %v154
    %v294 = vunpack.c.l.b16 %v155
    %v295 = vunpack.c.l.b16 %v156
    %v296 = vunpack.c.l.b16 %v157
    %v297 = vunpack.c.l.b16 %v158
    %v298 = vunpack.c.l.b16 %v159
    %v299 = vunpack.c.l.b16 %v160
    %v300 = vunpack.c.l.b16 %v161
    %v301 = vunpack.c.l.b16 %v162
    %v302 = vunpack.c.l.b16 %v163
    %v303 = vunpack.c.l.b16 %v164
    %v304 = vunpack.c.l.b16 %v165
    %v305 = vunpack.c.l.b16 %v166
    %v306 = vunpack.c.l.b16 %v167
    %v307 = vunpack.c.l.b16 %v168
    %v308 = vunpack.c.l.b16 %v169
    %v309 = vunpack.c.l.b16 %v170
    %v310 = vunpack.c.l.b16 %v171
    %v311 = vunpack.c.l.b16 %v172
    %v312 = vunpack.c.l.b16 %v173
    %v313 = vunpack.c.l.b16 %v174
    %v314 = vunpack.c.l.b16 %v175
    %v315 = vunpack.c.l.b16 %v176
    %v316 = vunpack.c.l.b16 %v177
    %v317 = vunpack.c.l.b16 %v178
    %v318 = vunpack.c.l.b16 %v179
    %v319 = vunpack.c.l.b16 %v180
    %v320 = vpack.c.b16 %v257, %v256
    %v321 = vpack.c.b16 %v259, %v258
    %v322 = vpack.c.b16 %v261, %v260
    %v323 = vpack.c.b16 %v263, %v262
    %v324 = vpack.c.b16 %v265, %v264
    %v325 = vpack.c.b16 %v267, %v266
    %v326 = vpack.c.b16 %v269, %v268
    %v327 = vpack.c.b16 %v271, %v270
    %v328 = vpack.c.b16 %v273, %v272
    %v329 = vpack.c.b16 %v275, %v274
    %v330 = vpack.c.b16 %v277, %v276
    %v331 = vpack.c.b16 %v279, %v278
    %v332 = vpack.c.b16 %v281, %v280
    %v333 = vpack.c.b16 %v283, %v282
    %v334 = vpack.c.b16 %v285, %v284
    %v335 = vpack.c.b16 %v287, %v286
    %v336 = vpack.c.b16 %v289, %v288
    %v337 = vpack.c.b16 %v291, %v290
    %v338 = vpack.c.b16 %v293, %v292
    %v339 = vpack.c.b16 %v295, %v294
    %v340 = vpack.c.b16 %v297, %v296
    %v341 = vpack.c.b16 %v299, %v298
    %v342 = vpack.c.b16 %v301, %v300
    %v343 = vpack.c.b16 %v303, %v302
    %v344 = vpack.c.b16 %v305, %v304
    %v345 = vpack.c.b16 %v307, %v306
    %v346 = vpack.c.b16 %v309, %v308
    %v347 = vpack.c.b16 %v311, %v310
    %v348 = vpack.c.b16 %v313, %v312
    %v349 = vpack.c.b16 %v315, %v314
    %v350 = vpack.c.b16 %v317, %v316
    %v351 = vpack.c.b16 %v319, %v318
    %v356 = vunpack.c.l.b16 %v181
    %v357 = vunpack.c.l.b16 %v182
    %v358 = vunpack.c.l.b16 %v183
    %v359 = vunpack.c.l.b16 %v184
    %v360 = vpack.c.b16 %v357, %v356
    %v361 = vpack.c.b16 %v359, %v358
    %v365 = vsel %vm34, %v320, 0
    %v368 = vsel %vm34, %v321, 0
    %v371 = vsel %vm34, %v322, 0
    %v374 = vsel %vm34, %v323, 0
    %v377 = vsel %vm34, %v324, 0
    %v380 = vsel %vm34, %v325, 0
    %v383 = vsel %vm34, %v326, 0
    %v386 = vsel %vm34, %v327, 0
    %v389 = vsel %vm34, %v328, 0
    %v392 = vsel %vm34, %v329, 0
    %v395 = vsel %vm34, %v330, 0
    %v398 = vsel %vm34, %v331, 0
    %v401 = vsel %vm34, %v332, 0
    %v404 = vsel %vm34, %v333, 0
    %v407 = vsel %vm34, %v334, 0
    %v410 = vsel %vm34, %v335, 0
    %v413 = vsel %vm34, %v336, 0
    %v416 = vsel %vm34, %v337, 0
    %v419 = vsel %vm34, %v338, 0
    %v422 = vsel %vm34, %v339, 0
    %v425 = vsel %vm34, %v340, 0
    %v428 = vsel %vm34, %v341, 0
    %v431 = vsel %vm34, %v342, 0
    %v434 = vsel %vm34, %v343, 0
    %v437 = vsel %vm34, %v344, 0
    %v440 = vsel %vm34, %v345, 0
    %v443 = vsel %vm34, %v346, 0
    %v446 = vsel %vm34, %v347, 0
    %v449 = vsel %vm34, %v348, 0
    %v452 = vsel %vm34, %v349, 0
    %v455 = vsel %vm34, %v350, 0
    %v458 = vsel %vm34, %v351, 0
    %460 = vmatprep.subr.bf16.mxu0 0
    %461 = vmatpush1.bf16.msra.mxu0 0
    %462 = vmatprep.subr.bf16.mxu0 0
    %463 = vmatpush1.bf16.msra.mxu0 0
    %464 = vmatprep.subr.bf16.mxu0 0
    %465 = vmatpush1.bf16.msra.mxu0 0
    %466 = vmatprep.subr.bf16.mxu0 0
    %467 = vmatpush1.bf16.msra.mxu0 0
    %468 = vmatprep.subr.bf16.mxu0 0
    %469 = vmatpush1.bf16.msra.mxu0 0
    %470 = vmatprep.subr.bf16.mxu0 0
    %471 = vmatpush1.bf16.msra.mxu0 0
    %472 = vmatprep.subr.bf16.mxu0 0
    %473 = vmatpush1.bf16.msra.mxu0 %v361
    %474 = vmatprep.subr.bf16.mxu0 0
    %475 = vmatpush1.bf16.msra.mxu0 %v360
    %476 = vmatprep.subr.bf16.mxu0 0
    %477 = vmatpush2.bf16.msra.mxu0 0
    %478 = vmatprep.subr.bf16.mxu0 0
    %479 = vmatpush2.bf16.msra.mxu0 0
    %480 = vmatprep.subr.bf16.mxu0 0
    %481 = vmatpush2.bf16.msra.mxu0 0
    %482 = vmatprep.subr.bf16.mxu0 0
    %483 = vmatpush2.bf16.msra.mxu0 0
    %484 = vmatprep.subr.bf16.mxu0 0
    %485 = vmatpush2.bf16.msra.mxu0 0
    %486 = vmatprep.subr.bf16.mxu0 0
    %487 = vmatpush2.bf16.msra.mxu0 0
    %488 = vmatprep.subr.bf16.mxu0 0
    %489 = vmatpush2.bf16.msra.mxu0 0
    %490 = vmatprep.subr.bf16.mxu0 0
    %491 = vmatpush2.bf16.msra.mxu0 0
    %492 = vmatprep.mubr.bf16.mxu0 0
    %493 = vmatmul.mubr.bf16.gmra.mxu0 %v365
    %v494 = vpop.f32.mrf.mxu0
    %v495 = vadd.f32 %v190, %v494
    %v496 = vpop.f32.mrf.mxu0
    %v497 = vpop.f32.mrf.mxu0
    %v498 = vadd.f32 %v190, %v497
    %v499 = vpop.f32.mrf.mxu0
    %500 = vmatprep.mubr.bf16.mxu0 0
    %501 = vmatmul.mubr.bf16.gmra.mxu0 %v368
    %v502 = vpop.f32.mrf.mxu0
    %v503 = vadd.f32 %v190, %v502
    %v504 = vpop.f32.mrf.mxu0
    %v505 = vpop.f32.mrf.mxu0
    %v506 = vadd.f32 %v190, %v505
    %v507 = vpop.f32.mrf.mxu0
    %508 = vmatprep.mubr.bf16.mxu0 0
    %509 = vmatmul.mubr.bf16.gmra.mxu0 %v371
    %v510 = vpop.f32.mrf.mxu0
    %v511 = vadd.f32 %v190, %v510
    %v512 = vpop.f32.mrf.mxu0
    %v513 = vpop.f32.mrf.mxu0
    %v514 = vadd.f32 %v190, %v513
    %v515 = vpop.f32.mrf.mxu0
    %516 = vmatprep.mubr.bf16.mxu0 0
    %517 = vmatmul.mubr.bf16.gmra.mxu0 %v374
    %v518 = vpop.f32.mrf.mxu0
    %v519 = vadd.f32 %v190, %v518
    %v520 = vpop.f32.mrf.mxu0
    %v521 = vpop.f32.mrf.mxu0
    %v522 = vadd.f32 %v190, %v521
    %v523 = vpop.f32.mrf.mxu0
    %524 = vmatprep.mubr.bf16.mxu0 0
    %525 = vmatmul.mubr.bf16.gmra.mxu0 %v377
    %v526 = vpop.f32.mrf.mxu0
    %v527 = vadd.f32 %v190, %v526
    %v528 = vpop.f32.mrf.mxu0
    %v529 = vpop.f32.mrf.mxu0
    %v530 = vadd.f32 %v190, %v529
    %v531 = vpop.f32.mrf.mxu0
    %532 = vmatprep.mubr.bf16.mxu0 0
    %533 = vmatmul.mubr.bf16.gmra.mxu0 %v380
    %v534 = vpop.f32.mrf.mxu0
    %v535 = vadd.f32 %v190, %v534
    %v536 = vpop.f32.mrf.mxu0
    %v537 = vpop.f32.mrf.mxu0
    %v538 = vadd.f32 %v190, %v537
    %v539 = vpop.f32.mrf.mxu0
    %540 = vmatprep.mubr.bf16.mxu0 0
    %541 = vmatmul.mubr.bf16.gmra.mxu0 %v383
    %v542 = vpop.f32.mrf.mxu0
    %v543 = vadd.f32 %v190, %v542
    %v544 = vpop.f32.mrf.mxu0
    %v545 = vpop.f32.mrf.mxu0
    %v546 = vadd.f32 %v190, %v545
    %v547 = vpop.f32.mrf.mxu0
    %548 = vmatprep.mubr.bf16.mxu0 0
    %549 = vmatmul.mubr.bf16.gmra.mxu0 %v386
    %v550 = vpop.f32.mrf.mxu0
    %v551 = vadd.f32 %v190, %v550
    %v552 = vpop.f32.mrf.mxu0
    %v553 = vpop.f32.mrf.mxu0
    %v554 = vadd.f32 %v190, %v553
    %v555 = vpop.f32.mrf.mxu0
    %556 = vmatprep.mubr.bf16.mxu0 0
    %557 = vmatmul.mubr.bf16.gmra.mxu0 %v389
    %v558 = vpop.f32.mrf.mxu0
    %v559 = vadd.f32 %v190, %v558
    %v560 = vpop.f32.mrf.mxu0
    %v561 = vpop.f32.mrf.mxu0
    %v562 = vadd.f32 %v190, %v561
    %v563 = vpop.f32.mrf.mxu0
    %564 = vmatprep.mubr.bf16.mxu0 0
    %565 = vmatmul.mubr.bf16.gmra.mxu0 %v392
    %v566 = vpop.f32.mrf.mxu0
    %v567 = vadd.f32 %v190, %v566
    %v568 = vpop.f32.mrf.mxu0
    %v569 = vpop.f32.mrf.mxu0
    %v570 = vadd.f32 %v190, %v569
    %v571 = vpop.f32.mrf.mxu0
    %572 = vmatprep.mubr.bf16.mxu0 0
    %573 = vmatmul.mubr.bf16.gmra.mxu0 %v395
    %v574 = vpop.f32.mrf.mxu0
    %v575 = vadd.f32 %v190, %v574
    %v576 = vpop.f32.mrf.mxu0
    %v577 = vpop.f32.mrf.mxu0
    %v578 = vadd.f32 %v190, %v577
    %v579 = vpop.f32.mrf.mxu0
    %580 = vmatprep.mubr.bf16.mxu0 0
    %581 = vmatmul.mubr.bf16.gmra.mxu0 %v398
    %v582 = vpop.f32.mrf.mxu0
    %v583 = vadd.f32 %v190, %v582
    %v584 = vpop.f32.mrf.mxu0
    %v585 = vpop.f32.mrf.mxu0
    %v586 = vadd.f32 %v190, %v585
    %v587 = vpop.f32.mrf.mxu0
    %588 = vmatprep.mubr.bf16.mxu0 0
    %589 = vmatmul.mubr.bf16.gmra.mxu0 %v401
    %v590 = vpop.f32.mrf.mxu0
    %v591 = vadd.f32 %v190, %v590
    %v592 = vpop.f32.mrf.mxu0
    %v593 = vpop.f32.mrf.mxu0
    %v594 = vadd.f32 %v190, %v593
    %v595 = vpop.f32.mrf.mxu0
    %596 = vmatprep.mubr.bf16.mxu0 0
    %597 = vmatmul.mubr.bf16.gmra.mxu0 %v404
    %v598 = vpop.f32.mrf.mxu0
    %v599 = vadd.f32 %v190, %v598
    %v600 = vpop.f32.mrf.mxu0
    %v601 = vpop.f32.mrf.mxu0
    %v602 = vadd.f32 %v190, %v601
    %v603 = vpop.f32.mrf.mxu0
    %604 = vmatprep.mubr.bf16.mxu0 0
    %605 = vmatmul.mubr.bf16.gmra.mxu0 %v407
    %v606 = vpop.f32.mrf.mxu0
    %v607 = vadd.f32 %v190, %v606
    %v608 = vpop.f32.mrf.mxu0
    %v609 = vpop.f32.mrf.mxu0
    %v610 = vadd.f32 %v190, %v609
    %v611 = vpop.f32.mrf.mxu0
    %612 = vmatprep.mubr.bf16.mxu0 0
    %613 = vmatmul.mubr.bf16.gmra.mxu0 %v410
    %v614 = vpop.f32.mrf.mxu0
    %v615 = vadd.f32 %v190, %v614
    %v616 = vpop.f32.mrf.mxu0
    %v617 = vpop.f32.mrf.mxu0
    %v618 = vadd.f32 %v190, %v617
    %v619 = vpop.f32.mrf.mxu0
    %620 = vmatprep.mubr.bf16.mxu0 0
    %621 = vmatmul.mubr.bf16.gmra.mxu0 %v413
    %v622 = vpop.f32.mrf.mxu0
    %v623 = vadd.f32 %v190, %v622
    %v624 = vpop.f32.mrf.mxu0
    %v625 = vpop.f32.mrf.mxu0
    %v626 = vadd.f32 %v190, %v625
    %v627 = vpop.f32.mrf.mxu0
    %628 = vmatprep.mubr.bf16.mxu0 0
    %629 = vmatmul.mubr.bf16.gmra.mxu0 %v416
    %v630 = vpop.f32.mrf.mxu0
    %v631 = vadd.f32 %v190, %v630
    %v632 = vpop.f32.mrf.mxu0
    %v633 = vpop.f32.mrf.mxu0
    %v634 = vadd.f32 %v190, %v633
    %v635 = vpop.f32.mrf.mxu0
    %636 = vmatprep.mubr.bf16.mxu0 0
    %637 = vmatmul.mubr.bf16.gmra.mxu0 %v419
    %v638 = vpop.f32.mrf.mxu0
    %v639 = vadd.f32 %v190, %v638
    %v640 = vpop.f32.mrf.mxu0
    %v641 = vpop.f32.mrf.mxu0
    %v642 = vadd.f32 %v190, %v641
    %v643 = vpop.f32.mrf.mxu0
    %644 = vmatprep.mubr.bf16.mxu0 0
    %645 = vmatmul.mubr.bf16.gmra.mxu0 %v422
    %v646 = vpop.f32.mrf.mxu0
    %v647 = vadd.f32 %v190, %v646
    %v648 = vpop.f32.mrf.mxu0
    %v649 = vpop.f32.mrf.mxu0
    %v650 = vadd.f32 %v190, %v649
    %v651 = vpop.f32.mrf.mxu0
    %652 = vmatprep.mubr.bf16.mxu0 0
    %653 = vmatmul.mubr.bf16.gmra.mxu0 %v425
    %v654 = vpop.f32.mrf.mxu0
    %v655 = vadd.f32 %v190, %v654
    %v656 = vpop.f32.mrf.mxu0
    %v657 = vpop.f32.mrf.mxu0
    %v658 = vadd.f32 %v190, %v657
    %v659 = vpop.f32.mrf.mxu0
    %660 = vmatprep.mubr.bf16.mxu0 0
    %661 = vmatmul.mubr.bf16.gmra.mxu0 %v428
    %v662 = vpop.f32.mrf.mxu0
    %v663 = vadd.f32 %v190, %v662
    %v664 = vpop.f32.mrf.mxu0
    %v665 = vpop.f32.mrf.mxu0
    %v666 = vadd.f32 %v190, %v665
    %v667 = vpop.f32.mrf.mxu0
    %668 = vmatprep.mubr.bf16.mxu0 0
    %669 = vmatmul.mubr.bf16.gmra.mxu0 %v431
    %v670 = vpop.f32.mrf.mxu0
    %v671 = vadd.f32 %v190, %v670
    %v672 = vpop.f32.mrf.mxu0
    %v673 = vpop.f32.mrf.mxu0
    %v674 = vadd.f32 %v190, %v673
    %v675 = vpop.f32.mrf.mxu0
    %676 = vmatprep.mubr.bf16.mxu0 0
    %677 = vmatmul.mubr.bf16.gmra.mxu0 %v434
    %v678 = vpop.f32.mrf.mxu0
    %v679 = vadd.f32 %v190, %v678
    %v680 = vpop.f32.mrf.mxu0
    %v681 = vpop.f32.mrf.mxu0
    %v682 = vadd.f32 %v190, %v681
    %v683 = vpop.f32.mrf.mxu0
    %684 = vmatprep.mubr.bf16.mxu0 0
    %685 = vmatmul.mubr.bf16.gmra.mxu0 %v437
    %v686 = vpop.f32.mrf.mxu0
    %v687 = vadd.f32 %v190, %v686
    %v688 = vpop.f32.mrf.mxu0
    %v689 = vpop.f32.mrf.mxu0
    %v690 = vadd.f32 %v190, %v689
    %v691 = vpop.f32.mrf.mxu0
    %692 = vmatprep.mubr.bf16.mxu0 0
    %693 = vmatmul.mubr.bf16.gmra.mxu0 %v440
    %v694 = vpop.f32.mrf.mxu0
    %v695 = vadd.f32 %v190, %v694
    %v696 = vpop.f32.mrf.mxu0
    %v697 = vpop.f32.mrf.mxu0
    %v698 = vadd.f32 %v190, %v697
    %v699 = vpop.f32.mrf.mxu0
    %700 = vmatprep.mubr.bf16.mxu0 0
    %701 = vmatmul.mubr.bf16.gmra.mxu0 %v443
    %v702 = vpop.f32.mrf.mxu0
    %v703 = vadd.f32 %v190, %v702
    %v704 = vpop.f32.mrf.mxu0
    %v705 = vpop.f32.mrf.mxu0
    %v706 = vadd.f32 %v190, %v705
    %v707 = vpop.f32.mrf.mxu0
    %708 = vmatprep.mubr.bf16.mxu0 0
    %709 = vmatmul.mubr.bf16.gmra.mxu0 %v446
    %v710 = vpop.f32.mrf.mxu0
    %v711 = vadd.f32 %v190, %v710
    %v712 = vpop.f32.mrf.mxu0
    %v713 = vpop.f32.mrf.mxu0
    %v714 = vadd.f32 %v190, %v713
    %v715 = vpop.f32.mrf.mxu0
    %716 = vmatprep.mubr.bf16.mxu0 0
    %717 = vmatmul.mubr.bf16.gmra.mxu0 %v449
    %v718 = vpop.f32.mrf.mxu0
    %v719 = vadd.f32 %v190, %v718
    %v720 = vpop.f32.mrf.mxu0
    %v721 = vpop.f32.mrf.mxu0
    %v722 = vadd.f32 %v190, %v721
    %v723 = vpop.f32.mrf.mxu0
    %724 = vmatprep.mubr.bf16.mxu0 0
    %725 = vmatmul.mubr.bf16.gmra.mxu0 %v452
    %v726 = vpop.f32.mrf.mxu0
    %v727 = vadd.f32 %v190, %v726
    %v728 = vpop.f32.mrf.mxu0
    %v729 = vpop.f32.mrf.mxu0
    %v730 = vadd.f32 %v190, %v729
    %v731 = vpop.f32.mrf.mxu0
    %732 = vmatprep.mubr.bf16.mxu0 0
    %733 = vmatmul.mubr.bf16.gmra.mxu0 %v455
    %v734 = vpop.f32.mrf.mxu0
    %v735 = vadd.f32 %v190, %v734
    %v736 = vpop.f32.mrf.mxu0
    %v737 = vpop.f32.mrf.mxu0
    %v738 = vadd.f32 %v190, %v737
    %v739 = vpop.f32.mrf.mxu0
    %740 = vmatprep.mubr.bf16.mxu0 0
    %741 = vmatmul.mubr.bf16.gmra.mxu0 %v458
    %v742 = vpop.f32.mrf.mxu0
    %v743 = vadd.f32 %v190, %v742
    %v744 = vpop.f32.mrf.mxu0
    %v745 = vpop.f32.mrf.mxu0
    %v746 = vadd.f32 %v190, %v745
    %v747 = vpop.f32.mrf.mxu0
    %748 = vdwg.mxu0
    %v749 = vmax.f32 %v495, 0.0
    %v750 = vmax.f32 %v498, 0.0
    %v751 = vmax.f32 %v503, 0.0
    %v752 = vmax.f32 %v506, 0.0
    %v753 = vmax.f32 %v511, 0.0
    %v754 = vmax.f32 %v514, 0.0
    %v755 = vmax.f32 %v519, 0.0
    %v756 = vmax.f32 %v522, 0.0
    %v757 = vmax.f32 %v527, 0.0
    %v758 = vmax.f32 %v530, 0.0
    %v759 = vmax.f32 %v535, 0.0
    %v760 = vmax.f32 %v538, 0.0
    %v761 = vmax.f32 %v543, 0.0
    %v762 = vmax.f32 %v546, 0.0
    %v763 = vmax.f32 %v551, 0.0
    %v764 = vmax.f32 %v554, 0.0
    %v765 = vmax.f32 %v559, 0.0
    %v766 = vmax.f32 %v562, 0.0
    %v767 = vmax.f32 %v567, 0.0
    %v768 = vmax.f32 %v570, 0.0
    %v769 = vmax.f32 %v575, 0.0
    %v770 = vmax.f32 %v578, 0.0
    %v771 = vmax.f32 %v583, 0.0
    %v772 = vmax.f32 %v586, 0.0
    %v773 = vmax.f32 %v591, 0.0
    %v774 = vmax.f32 %v594, 0.0
    %v775 = vmax.f32 %v599, 0.0
    %v776 = vmax.f32 %v602, 0.0
    %v777 = vmax.f32 %v607, 0.0
    %v778 = vmax.f32 %v610, 0.0
    %v779 = vmax.f32 %v615, 0.0
    %v780 = vmax.f32 %v618, 0.0
    %v781 = vmax.f32 %v623, 0.0
    %v782 = vmax.f32 %v626, 0.0
    %v783 = vmax.f32 %v631, 0.0
    %v784 = vmax.f32 %v634, 0.0
    %v785 = vmax.f32 %v639, 0.0
    %v786 = vmax.f32 %v642, 0.0
    %v787 = vmax.f32 %v647, 0.0
    %v788 = vmax.f32 %v650, 0.0
    %v789 = vmax.f32 %v655, 0.0
    %v790 = vmax.f32 %v658, 0.0
    %v791 = vmax.f32 %v663, 0.0
    %v792 = vmax.f32 %v666, 0.0
    %v793 = vmax.f32 %v671, 0.0
    %v794 = vmax.f32 %v674, 0.0
    %v795 = vmax.f32 %v679, 0.0
    %v796 = vmax.f32 %v682, 0.0
    %v797 = vmax.f32 %v687, 0.0
    %v798 = vmax.f32 %v690, 0.0
    %v799 = vmax.f32 %v695, 0.0
    %v800 = vmax.f32 %v698, 0.0
    %v801 = vmax.f32 %v703, 0.0
    %v802 = vmax.f32 %v706, 0.0
    %v803 = vmax.f32 %v711, 0.0
    %v804 = vmax.f32 %v714, 0.0
    %v805 = vmax.f32 %v719, 0.0
    %v806 = vmax.f32 %v722, 0.0
    %v807 = vmax.f32 %v727, 0.0
    %v808 = vmax.f32 %v730, 0.0
    %v809 = vmax.f32 %v735, 0.0
    %v810 = vmax.f32 %v738, 0.0
    %v811 = vmax.f32 %v743, 0.0
    %v812 = vmax.f32 %v746, 0.0
    %v813 = vsel %vm34, %v749, -inf
    %v814 = vsel %vm34, %v751, -inf
    %v815 = vmax.f32 %v813, %v814
    %v816 = vsel %vm34, %v750, -inf
    %v817 = vsel %vm34, %v752, -inf
    %v818 = vmax.f32 %v816, %v817
    %v819 = vsel %vm34, %v753, -inf
    %v820 = vsel %vm34, %v755, -inf
    %v821 = vmax.f32 %v819, %v820
    %v822 = vsel %vm34, %v754, -inf
    %v823 = vsel %vm34, %v756, -inf
    %v824 = vmax.f32 %v822, %v823
    %v825 = vsel %vm34, %v757, -inf
    %v826 = vsel %vm34, %v759, -inf
    %v827 = vmax.f32 %v825, %v826
    %v828 = vsel %vm34, %v758, -inf
    %v829 = vsel %vm34, %v760, -inf
    %v830 = vmax.f32 %v828, %v829
    %v831 = vsel %vm34, %v761, -inf
    %v832 = vsel %vm34, %v763, -inf
    %v833 = vmax.f32 %v831, %v832
    %v834 = vsel %vm34, %v762, -inf
    %v835 = vsel %vm34, %v764, -inf
    %v836 = vmax.f32 %v834, %v835
    %v837 = vsel %vm34, %v765, -inf
    %v838 = vsel %vm34, %v767, -inf
    %v839 = vmax.f32 %v837, %v838
    %v840 = vsel %vm34, %v766, -inf
    %v841 = vsel %vm34, %v768, -inf
    %v842 = vmax.f32 %v840, %v841
    %v843 = vsel %vm34, %v769, -inf
    %v844 = vsel %vm34, %v771, -inf
    %v845 = vmax.f32 %v843, %v844
    %v846 = vsel %vm34, %v770, -inf
    %v847 = vsel %vm34, %v772, -inf
    %v848 = vmax.f32 %v846, %v847
    %v849 = vsel %vm34, %v773, -inf
    %v850 = vsel %vm34, %v775, -inf
    %v851 = vmax.f32 %v849, %v850
    %v852 = vsel %vm34, %v774, -inf
    %v853 = vsel %vm34, %v776, -inf
    %v854 = vmax.f32 %v852, %v853
    %v855 = vsel %vm34, %v777, -inf
    %v856 = vsel %vm34, %v779, -inf
    %v857 = vmax.f32 %v855, %v856
    %v858 = vsel %vm34, %v778, -inf
    %v859 = vsel %vm34, %v780, -inf
    %v860 = vmax.f32 %v858, %v859
    %v861 = vsel %vm34, %v781, -inf
    %v862 = vsel %vm34, %v783, -inf
    %v863 = vmax.f32 %v861, %v862
    %v864 = vsel %vm34, %v782, -inf
    %v865 = vsel %vm34, %v784, -inf
    %v866 = vmax.f32 %v864, %v865
    %v867 = vsel %vm34, %v785, -inf
    %v868 = vsel %vm34, %v787, -inf
    %v869 = vmax.f32 %v867, %v868
    %v870 = vsel %vm34, %v786, -inf
    %v871 = vsel %vm34, %v788, -inf
    %v872 = vmax.f32 %v870, %v871
    %v873 = vsel %vm34, %v789, -inf
    %v874 = vsel %vm34, %v791, -inf
    %v875 = vmax.f32 %v873, %v874
    %v876 = vsel %vm34, %v790, -inf
    %v877 = vsel %vm34, %v792, -inf
    %v878 = vmax.f32 %v876, %v877
    %v879 = vsel %vm34, %v793, -inf
    %v880 = vsel %vm34, %v795, -inf
    %v881 = vmax.f32 %v879, %v880
    %v882 = vsel %vm34, %v794, -inf
    %v883 = vsel %vm34, %v796, -inf
    %v884 = vmax.f32 %v882, %v883
    %v885 = vsel %vm34, %v797, -inf
    %v886 = vsel %vm34, %v799, -inf
    %v887 = vmax.f32 %v885, %v886
    %v888 = vsel %vm34, %v798, -inf
    %v889 = vsel %vm34, %v800, -inf
    %v890 = vmax.f32 %v888, %v889
    %v891 = vsel %vm34, %v801, -inf
    %v892 = vsel %vm34, %v803, -inf
    %v893 = vmax.f32 %v891, %v892
    %v894 = vsel %vm34, %v802, -inf
    %v895 = vsel %vm34, %v804, -inf
    %v896 = vmax.f32 %v894, %v895
    %v897 = vsel %vm34, %v805, -inf
    %v898 = vsel %vm34, %v807, -inf
    %v899 = vmax.f32 %v897, %v898
    %v900 = vsel %vm34, %v806, -inf
    %v901 = vsel %vm34, %v808, -inf
    %v902 = vmax.f32 %v900, %v901
    %v903 = vsel %vm34, %v809, -inf
    %v904 = vsel %vm34, %v811, -inf
    %v905 = vmax.f32 %v903, %v904
    %v906 = vsel %vm34, %v810, -inf
    %v907 = vsel %vm34, %v812, -inf
    %v908 = vmax.f32 %v906, %v907
    %909 = vst.msk [vmem:[#allocation2] sm:$0xff] %vm34, %v815
    %910 = vst.msk [vmem:[#allocation2 + $0x8] sm:$0xff] %vm34, %v818
    %911 = vst.msk [vmem:[#allocation2 + $0x10] sm:$0xff] %vm34, %v821
    %912 = vst.msk [vmem:[#allocation2 + $0x18] sm:$0xff] %vm34, %v824
    %913 = vst.msk [vmem:[#allocation2 + $0x20] sm:$0xff] %vm34, %v827
    %914 = vst.msk [vmem:[#allocation2 + $0x28] sm:$0xff] %vm34, %v830
    %915 = vst.msk [vmem:[#allocation2 + $0x30] sm:$0xff] %vm34, %v833
    %916 = vst.msk [vmem:[#allocation2 + $0x38] sm:$0xff] %vm34, %v836
    %917 = vst.msk [vmem:[#allocation2 + $0x40] sm:$0xff] %vm34, %v839
    %918 = vst.msk [vmem:[#allocation2 + $0x48] sm:$0xff] %vm34, %v842
    %919 = vst.msk [vmem:[#allocation2 + $0x50] sm:$0xff] %vm34, %v845
    %920 = vst.msk [vmem:[#allocation2 + $0x58] sm:$0xff] %vm34, %v848
    %921 = vst.msk [vmem:[#allocation2 + $0x60] sm:$0xff] %vm34, %v851
    %922 = vst.msk [vmem:[#allocation2 + $0x68] sm:$0xff] %vm34, %v854
    %923 = vst.msk [vmem:[#allocation2 + $0x70] sm:$0xff] %vm34, %v857
    %924 = vst.msk [vmem:[#allocation2 + $0x78] sm:$0xff] %vm34, %v860
    %925 = vst.msk [vmem:[#allocation2 + $0x80] sm:$0xff] %vm34, %v863
    %926 = vst.msk [vmem:[#allocation2 + $0x88] sm:$0xff] %vm34, %v866
    %927 = vst.msk [vmem:[#allocation2 + $0x90] sm:$0xff] %vm34, %v869
    %928 = vst.msk [vmem:[#allocation2 + $0x98] sm:$0xff] %vm34, %v872
    %929 = vst.msk [vmem:[#allocation2 + $0xa0] sm:$0xff] %vm34, %v875
    %930 = vst.msk [vmem:[#allocation2 + $0xa8] sm:$0xff] %vm34, %v878
    %931 = vst.msk [vmem:[#allocation2 + $0xb0] sm:$0xff] %vm34, %v881
    %932 = vst.msk [vmem:[#allocation2 + $0xb8] sm:$0xff] %vm34, %v884
    %933 = vst.msk [vmem:[#allocation2 + $0xc0] sm:$0xff] %vm34, %v887
    %934 = vst.msk [vmem:[#allocation2 + $0xc8] sm:$0xff] %vm34, %v890
    %935 = vst.msk [vmem:[#allocation2 + $0xd0] sm:$0xff] %vm34, %v893
    %936 = vst.msk [vmem:[#allocation2 + $0xd8] sm:$0xff] %vm34, %v896
    %937 = vst.msk [vmem:[#allocation2 + $0xe0] sm:$0xff] %vm34, %v899
    %938 = vst.msk [vmem:[#allocation2 + $0xe8] sm:$0xff] %vm34, %v902
    %939 = vst.msk [vmem:[#allocation2 + $0xf0] sm:$0xff] %vm34, %v905
    %940 = vst.msk [vmem:[#allocation2 + $0xf8] sm:$0xff] %vm34, %v908
    %v941 = vld [vmem:[#allocation2] ss:$2 sm:$0xff]
    %s942 = scalar_lea.vmem [#allocation2], 16
    %v943 = vld [vmem:[%s942] ss:$2 sm:$0xff]
    %s944 = scalar_lea.vmem [#allocation2], 32
    %v945 = vld [vmem:[%s944] ss:$2 sm:$0xff]
    %s946 = scalar_lea.vmem [#allocation2], 48
    %v947 = vld [vmem:[%s946] ss:$2 sm:$0xff]
    %s948 = scalar_lea.vmem [#allocation2], 64
    %v949 = vld [vmem:[%s948] ss:$2 sm:$0xff]
    %s950 = scalar_lea.vmem [#allocation2], 80
    %v951 = vld [vmem:[%s950] ss:$2 sm:$0xff]
    %s952 = scalar_lea.vmem [#allocation2], 96
    %v953 = vld [vmem:[%s952] ss:$2 sm:$0xff]
    %s954 = scalar_lea.vmem [#allocation2], 112
    %v955 = vld [vmem:[%s954] ss:$2 sm:$0xff]
    %s956 = scalar_lea.vmem [#allocation2], 128
    %v957 = vld [vmem:[%s956] ss:$2 sm:$0xff]
    %s958 = scalar_lea.vmem [#allocation2], 144
    %v959 = vld [vmem:[%s958] ss:$2 sm:$0xff]
    %s960 = scalar_lea.vmem [#allocation2], 160
    %v961 = vld [vmem:[%s960] ss:$2 sm:$0xff]
    %s962 = scalar_lea.vmem [#allocation2], 176
    %v963 = vld [vmem:[%s962] ss:$2 sm:$0xff]
    %s964 = scalar_lea.vmem [#allocation2], 192
    %v965 = vld [vmem:[%s964] ss:$2 sm:$0xff]
    %s966 = scalar_lea.vmem [#allocation2], 208
    %v967 = vld [vmem:[%s966] ss:$2 sm:$0xff]
    %s968 = scalar_lea.vmem [#allocation2], 224
    %v969 = vld [vmem:[%s968] ss:$2 sm:$0xff]
    %s970 = scalar_lea.vmem [#allocation2], 240
    %v971 = vld [vmem:[%s970] ss:$2 sm:$0xff]
    %s972 = scalar_lea.vmem [#allocation2], 1
    %v973 = vld [vmem:[%s972] ss:$2 sm:$0xff]
    %s974 = scalar_lea.vmem [#allocation2], 17
    %v975 = vld [vmem:[%s974] ss:$2 sm:$0xff]
    %s976 = scalar_lea.vmem [#allocation2], 33
    %v977 = vld [vmem:[%s976] ss:$2 sm:$0xff]
    %s978 = scalar_lea.vmem [#allocation2], 49
    %v979 = vld [vmem:[%s978] ss:$2 sm:$0xff]
    %s980 = scalar_lea.vmem [#allocation2], 65
    %v981 = vld [vmem:[%s980] ss:$2 sm:$0xff]
    %s982 = scalar_lea.vmem [#allocation2], 81
    %v983 = vld [vmem:[%s982] ss:$2 sm:$0xff]
    %s984 = scalar_lea.vmem [#allocation2], 97
    %v985 = vld [vmem:[%s984] ss:$2 sm:$0xff]
    %s986 = scalar_lea.vmem [#allocation2], 113
    %v987 = vld [vmem:[%s986] ss:$2 sm:$0xff]
    %s988 = scalar_lea.vmem [#allocation2], 129
    %v989 = vld [vmem:[%s988] ss:$2 sm:$0xff]
    %s990 = scalar_lea.vmem [#allocation2], 145
    %v991 = vld [vmem:[%s990] ss:$2 sm:$0xff]
    %s992 = scalar_lea.vmem [#allocation2], 161
    %v993 = vld [vmem:[%s992] ss:$2 sm:$0xff]
    %s994 = scalar_lea.vmem [#allocation2], 177
    %v995 = vld [vmem:[%s994] ss:$2 sm:$0xff]
    %s996 = scalar_lea.vmem [#allocation2], 193
    %v997 = vld [vmem:[%s996] ss:$2 sm:$0xff]
    %s998 = scalar_lea.vmem [#allocation2], 209
    %v999 = vld [vmem:[%s998] ss:$2 sm:$0xff]
    %s1000 = scalar_lea.vmem [#allocation2], 225
    %v1001 = vld [vmem:[%s1000] ss:$2 sm:$0xff]
    %s1002 = scalar_lea.vmem [#allocation2], 241
    %v1003 = vld [vmem:[%s1002] ss:$2 sm:$0xff]
    %v1004 = vmax.f32 %v941, %v973
    %v1005 = vmax.f32 %v943, %v975
    %v1006 = vmax.f32 %v945, %v977
    %v1007 = vmax.f32 %v947, %v979
    %v1008 = vmax.f32 %v949, %v981
    %v1009 = vmax.f32 %v951, %v983
    %v1010 = vmax.f32 %v953, %v985
    %v1011 = vmax.f32 %v955, %v987
    %v1012 = vmax.f32 %v957, %v989
    %v1013 = vmax.f32 %v959, %v991
    %v1014 = vmax.f32 %v961, %v993
    %v1015 = vmax.f32 %v963, %v995
    %v1016 = vmax.f32 %v965, %v997
    %v1017 = vmax.f32 %v967, %v999
    %v1018 = vmax.f32 %v969, %v1001
    %v1019 = vmax.f32 %v971, %v1003
    %s1020 = scalar_lea.vmem [#allocation3], 16
    %1021 = vst.msk [vmem:[%s1020 + $0x1] sm:$0xff] %vm34, %v1004
    %1022 = vst.msk [vmem:[%s1020 + $0x11] sm:$0xff] %vm34, %v1005
    %1023 = vst.msk [vmem:[%s1020 + $0x21] sm:$0xff] %vm34, %v1006
    %1024 = vst.msk [vmem:[%s1020 + $0x31] sm:$0xff] %vm34, %v1007
    %1025 = vst.msk [vmem:[%s1020 + $0x41] sm:$0xff] %vm34, %v1008
    %1026 = vst.msk [vmem:[%s1020 + $0x51] sm:$0xff] %vm34, %v1009
    %1027 = vst.msk [vmem:[%s1020 + $0x61] sm:$0xff] %vm34, %v1010
    %1028 = vst.msk [vmem:[%s1020 + $0x71] sm:$0xff] %vm34, %v1011
    %1029 = vst.msk [vmem:[%s1020 + $0xa1] sm:$0xff] %vm34, %v1012
    %1030 = vst.msk [vmem:[%s1020 + $0xb1] sm:$0xff] %vm34, %v1013
    %1031 = vst.msk [vmem:[%s1020 + $0xc1] sm:$0xff] %vm34, %v1014
    %1032 = vst.msk [vmem:[%s1020 + $0xd1] sm:$0xff] %vm34, %v1015
    %1033 = vst.msk [vmem:[%s1020 + $0xe1] sm:$0xff] %vm34, %v1016
    %1034 = vst.msk [vmem:[%s1020 + $0xf1] sm:$0xff] %vm34, %v1017
    %1035 = vst.msk [vmem:[%s1020 + $0x101] sm:$0xff] %vm34, %v1018
    %1036 = vst.msk [vmem:[%s1020 + $0x111] sm:$0xff] %vm34, %v1019
    %v1037 = vld [vmem:[#allocation3] sm:$0xff]
    %v1038 = vld [vmem:[#allocation3 + $0x10] sm:$0xff]
    %v1039 = vld [vmem:[#allocation3 + $0x20] sm:$0xff]
    %v1040 = vld [vmem:[#allocation3 + $0x30] sm:$0xff]
    %v1041 = vld [vmem:[#allocation3 + $0x40] sm:$0xff]
    %v1042 = vld [vmem:[#allocation3 + $0x50] sm:$0xff]
    %v1043 = vld [vmem:[#allocation3 + $0x60] sm:$0xff]
    %v1044 = vld [vmem:[#allocation3 + $0x70] sm:$0xff]
    %v1045 = vld [vmem:[#allocation3 + $0xa0] sm:$0xff]
    %v1046 = vld [vmem:[#allocation3 + $0xb0] sm:$0xff]
    %v1047 = vld [vmem:[#allocation3 + $0xc0] sm:$0xff]
    %v1048 = vld [vmem:[#allocation3 + $0xd0] sm:$0xff]
    %v1049 = vld [vmem:[#allocation3 + $0xe0] sm:$0xff]
    %v1050 = vld [vmem:[#allocation3 + $0xf0] sm:$0xff]
    %v1051 = vld [vmem:[#allocation3 + $0x100] sm:$0xff]
    %v1052 = vld [vmem:[#allocation3 + $0x110] sm:$0xff]
    %v1053 = vpack.c.bf16 %v1038, %v1037
    %v1054 = vpack.c.bf16 %v1040, %v1039
    %v1055 = vpack.c.bf16 %v1042, %v1041
    %v1056 = vpack.c.bf16 %v1044, %v1043
    %v1057 = vpack.c.bf16 %v1046, %v1045
    %v1058 = vpack.c.bf16 %v1048, %v1047
    %v1059 = vpack.c.bf16 %v1050, %v1049
    %v1060 = vpack.c.bf16 %v1052, %v1051
    %v1069 = vunpack.c.l.b16 %v1053
    %v1070 = vunpack.c.h.b16 %v1053
    %v1071 = vunpack.c.l.b16 %v1054
    %v1072 = vunpack.c.h.b16 %v1054
    %v1073 = vunpack.c.l.b16 %v1055
    %v1074 = vunpack.c.h.b16 %v1055
    %v1075 = vunpack.c.l.b16 %v1056
    %v1076 = vunpack.c.h.b16 %v1056
    %v1077 = vunpack.c.l.b16 %v1057
    %v1078 = vunpack.c.h.b16 %v1057
    %v1079 = vunpack.c.l.b16 %v1058
    %v1080 = vunpack.c.h.b16 %v1058
    %v1081 = vunpack.c.l.b16 %v1059
    %v1082 = vunpack.c.h.b16 %v1059
    %v1083 = vunpack.c.l.b16 %v1060
    %v1084 = vunpack.c.h.b16 %v1060
    %v1085 = vpack.c.b16 %v1069, %v1069
    %v1086 = vpack.c.b16 %v1070, %v1070
    %v1087 = vpack.c.b16 %v1071, %v1071
    %v1088 = vpack.c.b16 %v1072, %v1072
    %v1089 = vpack.c.b16 %v1073, %v1073
    %v1090 = vpack.c.b16 %v1074, %v1074
    %v1091 = vpack.c.b16 %v1075, %v1075
    %v1092 = vpack.c.b16 %v1076, %v1076
    %v1093 = vpack.c.b16 %v1077, %v1077
    %v1094 = vpack.c.b16 %v1078, %v1078
    %v1095 = vpack.c.b16 %v1079, %v1079
    %v1096 = vpack.c.b16 %v1080, %v1080
    %v1097 = vpack.c.b16 %v1081, %v1081
    %v1098 = vpack.c.b16 %v1082, %v1082
    %v1099 = vpack.c.b16 %v1083, %v1083
    %v1100 = vpack.c.b16 %v1084, %v1084
    %vm1117 = vcmask 257024
    %1118 = vst.msk [vmem:[#allocation4] sm:$0xf] %vm1117, %v1085
    %1119 = vst.msk [vmem:[#allocation4 + $0xc] sm:$0xf] %vm1117, %v1086
    %1120 = vst.msk [vmem:[#allocation4 + $0x18] sm:$0xf] %vm1117, %v1087
    %1121 = vst.msk [vmem:[#allocation4 + $0x24] sm:$0xf] %vm1117, %v1088
    %1122 = vst.msk [vmem:[#allocation4 + $0x30] sm:$0xf] %vm1117, %v1089
    %1123 = vst.msk [vmem:[#allocation4 + $0x3c] sm:$0xf] %vm1117, %v1090
    %1124 = vst.msk [vmem:[#allocation4 + $0x48] sm:$0xf] %vm1117, %v1091
    %1125 = vst.msk [vmem:[#allocation4 + $0x54] sm:$0xf] %vm1117, %v1092
    %1126 = vst.msk [vmem:[#allocation4 + $0x60] sm:$0xf] %vm1117, %v1093
    %1127 = vst.msk [vmem:[#allocation4 + $0x6c] sm:$0xf] %vm1117, %v1094
    %1128 = vst.msk [vmem:[#allocation4 + $0x78] sm:$0xf] %vm1117, %v1095
    %1129 = vst.msk [vmem:[#allocation4 + $0x84] sm:$0xf] %vm1117, %v1096
    %1130 = vst.msk [vmem:[#allocation4 + $0x90] sm:$0xf] %vm1117, %v1097
    %1131 = vst.msk [vmem:[#allocation4 + $0x9c] sm:$0xf] %vm1117, %v1098
    %1132 = vst.msk [vmem:[#allocation4 + $0xa8] sm:$0xf] %vm1117, %v1099
    %1133 = vst.msk [vmem:[#allocation4 + $0xb4] sm:$0xf] %vm1117, %v1100
    %v1134 = vld [vmem:[#allocation3 + $0x1] sm:$0xff]
    %v1135 = vld [vmem:[#allocation3 + $0x11] sm:$0xff]
    %v1136 = vld [vmem:[#allocation3 + $0x21] sm:$0xff]
    %v1137 = vld [vmem:[#allocation3 + $0x31] sm:$0xff]
    %v1138 = vld [vmem:[#allocation3 + $0x41] sm:$0xff]
    %v1139 = vld [vmem:[#allocation3 + $0x51] sm:$0xff]
    %v1140 = vld [vmem:[#allocation3 + $0x61] sm:$0xff]
    %v1141 = vld [vmem:[#allocation3 + $0x71] sm:$0xff]
    %v1142 = vld [vmem:[#allocation3 + $0xa1] sm:$0xff]
    %v1143 = vld [vmem:[#allocation3 + $0xb1] sm:$0xff]
    %v1144 = vld [vmem:[#allocation3 + $0xc1] sm:$0xff]
    %v1145 = vld [vmem:[#allocation3 + $0xd1] sm:$0xff]
    %v1146 = vld [vmem:[#allocation3 + $0xe1] sm:$0xff]
    %v1147 = vld [vmem:[#allocation3 + $0xf1] sm:$0xff]
    %v1148 = vld [vmem:[#allocation3 + $0x101] sm:$0xff]
    %v1149 = vld [vmem:[#allocation3 + $0x111] sm:$0xff]
    %v1150 = vpack.c.bf16 %v1135, %v1134
    %v1151 = vpack.c.bf16 %v1137, %v1136
    %v1152 = vpack.c.bf16 %v1139, %v1138
    %v1153 = vpack.c.bf16 %v1141, %v1140
    %v1154 = vpack.c.bf16 %v1143, %v1142
    %v1155 = vpack.c.bf16 %v1145, %v1144
    %v1156 = vpack.c.bf16 %v1147, %v1146
    %v1157 = vpack.c.bf16 %v1149, %v1148
    %v1166 = vunpack.c.l.b16 %v1150
    %v1167 = vunpack.c.h.b16 %v1150
    %v1168 = vunpack.c.l.b16 %v1151
    %v1169 = vunpack.c.h.b16 %v1151
    %v1170 = vunpack.c.l.b16 %v1152
    %v1171 = vunpack.c.h.b16 %v1152
    %v1172 = vunpack.c.l.b16 %v1153
    %v1173 = vunpack.c.h.b16 %v1153
    %v1174 = vunpack.c.l.b16 %v1154
    %v1175 = vunpack.c.h.b16 %v1154
    %v1176 = vunpack.c.l.b16 %v1155
    %v1177 = vunpack.c.h.b16 %v1155
    %v1178 = vunpack.c.l.b16 %v1156
    %v1179 = vunpack.c.h.b16 %v1156
    %v1180 = vunpack.c.l.b16 %v1157
    %v1181 = vunpack.c.h.b16 %v1157
    %v1182 = vpack.c.b16 %v1166, %v1166
    %v1183 = vpack.c.b16 %v1167, %v1167
    %v1184 = vpack.c.b16 %v1168, %v1168
    %v1185 = vpack.c.b16 %v1169, %v1169
    %v1186 = vpack.c.b16 %v1170, %v1170
    %v1187 = vpack.c.b16 %v1171, %v1171
    %v1188 = vpack.c.b16 %v1172, %v1172
    %v1189 = vpack.c.b16 %v1173, %v1173
    %v1190 = vpack.c.b16 %v1174, %v1174
    %v1191 = vpack.c.b16 %v1175, %v1175
    %v1192 = vpack.c.b16 %v1176, %v1176
    %v1193 = vpack.c.b16 %v1177, %v1177
    %v1194 = vpack.c.b16 %v1178, %v1178
    %v1195 = vpack.c.b16 %v1179, %v1179
    %v1196 = vpack.c.b16 %v1180, %v1180
    %v1197 = vpack.c.b16 %v1181, %v1181
    %1198 = vrot.lane.b32.xlu0 %v1182, 32
    %v1199 = vpop.permute.xlu0 %1198
    %1200 = vrot.lane.b32.xlu0 %v1183, 32
    %v1201 = vpop.permute.xlu0 %1200
    %1202 = vrot.lane.b32.xlu0 %v1184, 32
    %v1203 = vpop.permute.xlu0 %1202
    %1204 = vrot.lane.b32.xlu0 %v1185, 32
    %v1205 = vpop.permute.xlu0 %1204
    %1206 = vrot.lane.b32.xlu0 %v1186, 32
    %v1207 = vpop.permute.xlu0 %1206
    %1208 = vrot.lane.b32.xlu0 %v1187, 32
    %v1209 = vpop.permute.xlu0 %1208
    %1210 = vrot.lane.b32.xlu0 %v1188, 32
    %v1211 = vpop.permute.xlu0 %1210
    %1212 = vrot.lane.b32.xlu0 %v1189, 32
    %v1213 = vpop.permute.xlu0 %1212
    %1214 = vrot.lane.b32.xlu0 %v1190, 32
    %v1215 = vpop.permute.xlu0 %1214
    %1216 = vrot.lane.b32.xlu0 %v1191, 32
    %v1217 = vpop.permute.xlu0 %1216
    %1218 = vrot.lane.b32.xlu0 %v1192, 32
    %v1219 = vpop.permute.xlu0 %1218
    %1220 = vrot.lane.b32.xlu0 %v1193, 32
    %v1221 = vpop.permute.xlu0 %1220
    %1222 = vrot.lane.b32.xlu0 %v1194, 32
    %v1223 = vpop.permute.xlu0 %1222
    %1224 = vrot.lane.b32.xlu0 %v1195, 32
    %v1225 = vpop.permute.xlu0 %1224
    %1226 = vrot.lane.b32.xlu0 %v1196, 32
    %v1227 = vpop.permute.xlu0 %1226
    %1228 = vrot.lane.b32.xlu0 %v1197, 32
    %v1229 = vpop.permute.xlu0 %1228
    %vm1246 = vcmask 519424
    %1247 = vst.msk [vmem:[#allocation4] sm:$0xf] %vm1246, %v1199
    %1248 = vst.msk [vmem:[#allocation4 + $0xc] sm:$0xf] %vm1246, %v1201
    %1249 = vst.msk [vmem:[#allocation4 + $0x18] sm:$0xf] %vm1246, %v1203
    %1250 = vst.msk [vmem:[#allocation4 + $0x24] sm:$0xf] %vm1246, %v1205
    %1251 = vst.msk [vmem:[#allocation4 + $0x30] sm:$0xf] %vm1246, %v1207
    %1252 = vst.msk [vmem:[#allocation4 + $0x3c] sm:$0xf] %vm1246, %v1209
    %1253 = vst.msk [vmem:[#allocation4 + $0x48] sm:$0xf] %vm1246, %v1211
    %1254 = vst.msk [vmem:[#allocation4 + $0x54] sm:$0xf] %vm1246, %v1213
    %1255 = vst.msk [vmem:[#allocation4 + $0x60] sm:$0xf] %vm1246, %v1215
    %1256 = vst.msk [vmem:[#allocation4 + $0x6c] sm:$0xf] %vm1246, %v1217
    %1257 = vst.msk [vmem:[#allocation4 + $0x78] sm:$0xf] %vm1246, %v1219
    %1258 = vst.msk [vmem:[#allocation4 + $0x84] sm:$0xf] %vm1246, %v1221
    %1259 = vst.msk [vmem:[#allocation4 + $0x90] sm:$0xf] %vm1246, %v1223
    %1260 = vst.msk [vmem:[#allocation4 + $0x9c] sm:$0xf] %vm1246, %v1225
    %1261 = vst.msk [vmem:[#allocation4 + $0xa8] sm:$0xf] %vm1246, %v1227
    %1262 = vst.msk [vmem:[#allocation4 + $0xb4] sm:$0xf] %vm1246, %v1229
    %v1263 = vld [vmem:[#allocation3 + $0x2] sm:$0xff]
    %v1264 = vld [vmem:[#allocation3 + $0x12] sm:$0xff]
    %v1265 = vld [vmem:[#allocation3 + $0x22] sm:$0xff]
    %v1266 = vld [vmem:[#allocation3 + $0x32] sm:$0xff]
    %v1267 = vld [vmem:[#allocation3 + $0x42] sm:$0xff]
    %v1268 = vld [vmem:[#allocation3 + $0x52] sm:$0xff]
    %v1269 = vld [vmem:[#allocation3 + $0x62] sm:$0xff]
    %v1270 = vld [vmem:[#allocation3 + $0x72] sm:$0xff]
    %v1271 = vld [vmem:[#allocation3 + $0xa2] sm:$0xff]
    %v1272 = vld [vmem:[#allocation3 + $0xb2] sm:$0xff]
    %v1273 = vld [vmem:[#allocation3 + $0xc2] sm:$0xff]
    %v1274 = vld [vmem:[#allocation3 + $0xd2] sm:$0xff]
    %v1275 = vld [vmem:[#allocation3 + $0xe2] sm:$0xff]
    %v1276 = vld [vmem:[#allocation3 + $0xf2] sm:$0xff]
    %v1277 = vld [vmem:[#allocation3 + $0x102] sm:$0xff]
    %v1278 = vld [vmem:[#allocation3 + $0x112] sm:$0xff]
    %v1279 = vpack.c.bf16 %v1264, %v1263
    %v1280 = vpack.c.bf16 %v1266, %v1265
    %v1281 = vpack.c.bf16 %v1268, %v1267
    %v1282 = vpack.c.bf16 %v1270, %v1269
    %v1283 = vpack.c.bf16 %v1272, %v1271
    %v1284 = vpack.c.bf16 %v1274, %v1273
    %v1285 = vpack.c.bf16 %v1276, %v1275
    %v1286 = vpack.c.bf16 %v1278, %v1277
    %v1295 = vunpack.c.l.b16 %v1279
    %v1296 = vunpack.c.h.b16 %v1279
    %v1297 = vunpack.c.l.b16 %v1280
    %v1298 = vunpack.c.h.b16 %v1280
    %v1299 = vunpack.c.l.b16 %v1281
    %v1300 = vunpack.c.h.b16 %v1281
    %v1301 = vunpack.c.l.b16 %v1282
    %v1302 = vunpack.c.h.b16 %v1282
    %v1303 = vunpack.c.l.b16 %v1283
    %v1304 = vunpack.c.h.b16 %v1283
    %v1305 = vunpack.c.l.b16 %v1284
    %v1306 = vunpack.c.h.b16 %v1284
    %v1307 = vunpack.c.l.b16 %v1285
    %v1308 = vunpack.c.h.b16 %v1285
    %v1309 = vunpack.c.l.b16 %v1286
    %v1310 = vunpack.c.h.b16 %v1286
    %v1311 = vpack.c.b16 %v1295, %v1295
    %v1312 = vpack.c.b16 %v1296, %v1296
    %v1313 = vpack.c.b16 %v1297, %v1297
    %v1314 = vpack.c.b16 %v1298, %v1298
    %v1315 = vpack.c.b16 %v1299, %v1299
    %v1316 = vpack.c.b16 %v1300, %v1300
    %v1317 = vpack.c.b16 %v1301, %v1301
    %v1318 = vpack.c.b16 %v1302, %v1302
    %v1319 = vpack.c.b16 %v1303, %v1303
    %v1320 = vpack.c.b16 %v1304, %v1304
    %v1321 = vpack.c.b16 %v1305, %v1305
    %v1322 = vpack.c.b16 %v1306, %v1306
    %v1323 = vpack.c.b16 %v1307, %v1307
    %v1324 = vpack.c.b16 %v1308, %v1308
    %v1325 = vpack.c.b16 %v1309, %v1309
    %v1326 = vpack.c.b16 %v1310, %v1310
    %1327 = vrot.lane.b32.xlu0 %v1311, 64
    %v1328 = vpop.permute.xlu0 %1327
    %1329 = vrot.lane.b32.xlu0 %v1312, 64
    %v1330 = vpop.permute.xlu0 %1329
    %1331 = vrot.lane.b32.xlu0 %v1313, 64
    %v1332 = vpop.permute.xlu0 %1331
    %1333 = vrot.lane.b32.xlu0 %v1314, 64
    %v1334 = vpop.permute.xlu0 %1333
    %1335 = vrot.lane.b32.xlu0 %v1315, 64
    %v1336 = vpop.permute.xlu0 %1335
    %1337 = vrot.lane.b32.xlu0 %v1316, 64
    %v1338 = vpop.permute.xlu0 %1337
    %1339 = vrot.lane.b32.xlu0 %v1317, 64
    %v1340 = vpop.permute.xlu0 %1339
    %1341 = vrot.lane.b32.xlu0 %v1318, 64
    %v1342 = vpop.permute.xlu0 %1341
    %1343 = vrot.lane.b32.xlu0 %v1319, 64
    %v1344 = vpop.permute.xlu0 %1343
    %1345 = vrot.lane.b32.xlu0 %v1320, 64
    %v1346 = vpop.permute.xlu0 %1345
    %1347 = vrot.lane.b32.xlu0 %v1321, 64
    %v1348 = vpop.permute.xlu0 %1347
    %1349 = vrot.lane.b32.xlu0 %v1322, 64
    %v1350 = vpop.permute.xlu0 %1349
    %1351 = vrot.lane.b32.xlu0 %v1323, 64
    %v1352 = vpop.permute.xlu0 %1351
    %1353 = vrot.lane.b32.xlu0 %v1324, 64
    %v1354 = vpop.permute.xlu0 %1353
    %1355 = vrot.lane.b32.xlu0 %v1325, 64
    %v1356 = vpop.permute.xlu0 %1355
    %1357 = vrot.lane.b32.xlu0 %v1326, 64
    %v1358 = vpop.permute.xlu0 %1357
    %vm1375 = vcmask 781824
    %1376 = vst.msk [vmem:[#allocation4] sm:$0xf] %vm1375, %v1328
    %1377 = vst.msk [vmem:[#allocation4 + $0xc] sm:$0xf] %vm1375, %v1330
    %1378 = vst.msk [vmem:[#allocation4 + $0x18] sm:$0xf] %vm1375, %v1332
    %1379 = vst.msk [vmem:[#allocation4 + $0x24] sm:$0xf] %vm1375, %v1334
    %1380 = vst.msk [vmem:[#allocation4 + $0x30] sm:$0xf] %vm1375, %v1336
    %1381 = vst.msk [vmem:[#allocation4 + $0x3c] sm:$0xf] %vm1375, %v1338
    %1382 = vst.msk [vmem:[#allocation4 + $0x48] sm:$0xf] %vm1375, %v1340
    %1383 = vst.msk [vmem:[#allocation4 + $0x54] sm:$0xf] %vm1375, %v1342
    %1384 = vst.msk [vmem:[#allocation4 + $0x60] sm:$0xf] %vm1375, %v1344
    %1385 = vst.msk [vmem:[#allocation4 + $0x6c] sm:$0xf] %vm1375, %v1346
    %1386 = vst.msk [vmem:[#allocation4 + $0x78] sm:$0xf] %vm1375, %v1348
    %1387 = vst.msk [vmem:[#allocation4 + $0x84] sm:$0xf] %vm1375, %v1350
    %1388 = vst.msk [vmem:[#allocation4 + $0x90] sm:$0xf] %vm1375, %v1352
    %1389 = vst.msk [vmem:[#allocation4 + $0x9c] sm:$0xf] %vm1375, %v1354
    %1390 = vst.msk [vmem:[#allocation4 + $0xa8] sm:$0xf] %vm1375, %v1356
    %1391 = vst.msk [vmem:[#allocation4 + $0xb4] sm:$0xf] %vm1375, %v1358
    %v1392 = vld [vmem:[%s1020] sm:$0xff]
    %v1393 = vld [vmem:[%s1020 + $0x10] sm:$0xff]
    %v1394 = vld [vmem:[%s1020 + $0x20] sm:$0xff]
    %v1395 = vld [vmem:[%s1020 + $0x30] sm:$0xff]
    %v1396 = vld [vmem:[%s1020 + $0x40] sm:$0xff]
    %v1397 = vld [vmem:[%s1020 + $0x50] sm:$0xff]
    %v1398 = vld [vmem:[%s1020 + $0x60] sm:$0xff]
    %v1399 = vld [vmem:[%s1020 + $0x70] sm:$0xff]
    %v1400 = vld [vmem:[%s1020 + $0xa0] sm:$0xff]
    %v1401 = vld [vmem:[%s1020 + $0xb0] sm:$0xff]
    %v1402 = vld [vmem:[%s1020 + $0xc0] sm:$0xff]
    %v1403 = vld [vmem:[%s1020 + $0xd0] sm:$0xff]
    %v1404 = vld [vmem:[%s1020 + $0xe0] sm:$0xff]
    %v1405 = vld [vmem:[%s1020 + $0xf0] sm:$0xff]
    %v1406 = vld [vmem:[%s1020 + $0x100] sm:$0xff]
    %v1407 = vld [vmem:[%s1020 + $0x110] sm:$0xff]
    %v1408 = vpack.c.bf16 %v1393, %v1392
    %v1409 = vpack.c.bf16 %v1395, %v1394
    %v1410 = vpack.c.bf16 %v1397, %v1396
    %v1411 = vpack.c.bf16 %v1399, %v1398
    %v1412 = vpack.c.bf16 %v1401, %v1400
    %v1413 = vpack.c.bf16 %v1403, %v1402
    %v1414 = vpack.c.bf16 %v1405, %v1404
    %v1415 = vpack.c.bf16 %v1407, %v1406
    %v1424 = vunpack.c.l.b16 %v1408
    %v1425 = vunpack.c.h.b16 %v1408
    %v1426 = vunpack.c.l.b16 %v1409
    %v1427 = vunpack.c.h.b16 %v1409
    %v1428 = vunpack.c.l.b16 %v1410
    %v1429 = vunpack.c.h.b16 %v1410
    %v1430 = vunpack.c.l.b16 %v1411
    %v1431 = vunpack.c.h.b16 %v1411
    %v1432 = vunpack.c.l.b16 %v1412
    %v1433 = vunpack.c.h.b16 %v1412
    %v1434 = vunpack.c.l.b16 %v1413
    %v1435 = vunpack.c.h.b16 %v1413
    %v1436 = vunpack.c.l.b16 %v1414
    %v1437 = vunpack.c.h.b16 %v1414
    %v1438 = vunpack.c.l.b16 %v1415
    %v1439 = vunpack.c.h.b16 %v1415
    %v1440 = vpack.c.b16 %v1424, %v1424
    %v1441 = vpack.c.b16 %v1425, %v1425
    %v1442 = vpack.c.b16 %v1426, %v1426
    %v1443 = vpack.c.b16 %v1427, %v1427
    %v1444 = vpack.c.b16 %v1428, %v1428
    %v1445 = vpack.c.b16 %v1429, %v1429
    %v1446 = vpack.c.b16 %v1430, %v1430
    %v1447 = vpack.c.b16 %v1431, %v1431
    %v1448 = vpack.c.b16 %v1432, %v1432
    %v1449 = vpack.c.b16 %v1433, %v1433
    %v1450 = vpack.c.b16 %v1434, %v1434
    %v1451 = vpack.c.b16 %v1435, %v1435
    %v1452 = vpack.c.b16 %v1436, %v1436
    %v1453 = vpack.c.b16 %v1437, %v1437
    %v1454 = vpack.c.b16 %v1438, %v1438
    %v1455 = vpack.c.b16 %v1439, %v1439
    %1456 = vrot.lane.b32.xlu0 %v1440, 96
    %v1457 = vpop.permute.xlu0 %1456
    %1458 = vrot.lane.b32.xlu0 %v1441, 96
    %v1459 = vpop.permute.xlu0 %1458
    %1460 = vrot.lane.b32.xlu0 %v1442, 96
    %v1461 = vpop.permute.xlu0 %1460
    %1462 = vrot.lane.b32.xlu0 %v1443, 96
    %v1463 = vpop.permute.xlu0 %1462
    %1464 = vrot.lane.b32.xlu0 %v1444, 96
    %v1465 = vpop.permute.xlu0 %1464
    %1466 = vrot.lane.b32.xlu0 %v1445, 96
    %v1467 = vpop.permute.xlu0 %1466
    %1468 = vrot.lane.b32.xlu0 %v1446, 96
    %v1469 = vpop.permute.xlu0 %1468
    %1470 = vrot.lane.b32.xlu0 %v1447, 96
    %v1471 = vpop.permute.xlu0 %1470
    %1472 = vrot.lane.b32.xlu0 %v1448, 96
    %v1473 = vpop.permute.xlu0 %1472
    %1474 = vrot.lane.b32.xlu0 %v1449, 96
    %v1475 = vpop.permute.xlu0 %1474
    %1476 = vrot.lane.b32.xlu0 %v1450, 96
    %v1477 = vpop.permute.xlu0 %1476
    %1478 = vrot.lane.b32.xlu0 %v1451, 96
    %v1479 = vpop.permute.xlu0 %1478
    %1480 = vrot.lane.b32.xlu0 %v1452, 96
    %v1481 = vpop.permute.xlu0 %1480
    %1482 = vrot.lane.b32.xlu0 %v1453, 96
    %v1483 = vpop.permute.xlu0 %1482
    %1484 = vrot.lane.b32.xlu0 %v1454, 96
    %v1485 = vpop.permute.xlu0 %1484
    %1486 = vrot.lane.b32.xlu0 %v1455, 96
    %v1487 = vpop.permute.xlu0 %1486
    %vm1504 = vcmask 1044224
    %1505 = vst.msk [vmem:[#allocation4] sm:$0xf] %vm1504, %v1457
    %1506 = vst.msk [vmem:[#allocation4 + $0xc] sm:$0xf] %vm1504, %v1459
    %1507 = vst.msk [vmem:[#allocation4 + $0x18] sm:$0xf] %vm1504, %v1461
    %1508 = vst.msk [vmem:[#allocation4 + $0x24] sm:$0xf] %vm1504, %v1463
    %1509 = vst.msk [vmem:[#allocation4 + $0x30] sm:$0xf] %vm1504, %v1465
    %1510 = vst.msk [vmem:[#allocation4 + $0x3c] sm:$0xf] %vm1504, %v1467
    %1511 = vst.msk [vmem:[#allocation4 + $0x48] sm:$0xf] %vm1504, %v1469
    %1512 = vst.msk [vmem:[#allocation4 + $0x54] sm:$0xf] %vm1504, %v1471
    %1513 = vst.msk [vmem:[#allocation4 + $0x60] sm:$0xf] %vm1504, %v1473
    %1514 = vst.msk [vmem:[#allocation4 + $0x6c] sm:$0xf] %vm1504, %v1475
    %1515 = vst.msk [vmem:[#allocation4 + $0x78] sm:$0xf] %vm1504, %v1477
    %1516 = vst.msk [vmem:[#allocation4 + $0x84] sm:$0xf] %vm1504, %v1479
    %1517 = vst.msk [vmem:[#allocation4 + $0x90] sm:$0xf] %vm1504, %v1481
    %1518 = vst.msk [vmem:[#allocation4 + $0x9c] sm:$0xf] %vm1504, %v1483
    %1519 = vst.msk [vmem:[#allocation4 + $0xa8] sm:$0xf] %vm1504, %v1485
    %1520 = vst.msk [vmem:[#allocation4 + $0xb4] sm:$0xf] %vm1504, %v1487
    %v1521 = vld [vmem:[%s1020 + $0x1] sm:$0xff]
    %v1522 = vld [vmem:[%s1020 + $0x11] sm:$0xff]
    %v1523 = vld [vmem:[%s1020 + $0x21] sm:$0xff]
    %v1524 = vld [vmem:[%s1020 + $0x31] sm:$0xff]
    %v1525 = vld [vmem:[%s1020 + $0x41] sm:$0xff]
    %v1526 = vld [vmem:[%s1020 + $0x51] sm:$0xff]
    %v1527 = vld [vmem:[%s1020 + $0x61] sm:$0xff]
    %v1528 = vld [vmem:[%s1020 + $0x71] sm:$0xff]
    %v1529 = vld [vmem:[%s1020 + $0xa1] sm:$0xff]
    %v1530 = vld [vmem:[%s1020 + $0xb1] sm:$0xff]
    %v1531 = vld [vmem:[%s1020 + $0xc1] sm:$0xff]
    %v1532 = vld [vmem:[%s1020 + $0xd1] sm:$0xff]
    %v1533 = vld [vmem:[%s1020 + $0xe1] sm:$0xff]
    %v1534 = vld [vmem:[%s1020 + $0xf1] sm:$0xff]
    %v1535 = vld [vmem:[%s1020 + $0x101] sm:$0xff]
    %v1536 = vld [vmem:[%s1020 + $0x111] sm:$0xff]
    %v1537 = vpack.c.bf16 %v1522, %v1521
    %v1538 = vpack.c.bf16 %v1524, %v1523
    %v1539 = vpack.c.bf16 %v1526, %v1525
    %v1540 = vpack.c.bf16 %v1528, %v1527
    %v1541 = vpack.c.bf16 %v1530, %v1529
    %v1542 = vpack.c.bf16 %v1532, %v1531
    %v1543 = vpack.c.bf16 %v1534, %v1533
    %v1544 = vpack.c.bf16 %v1536, %v1535
    %v1553 = vunpack.c.l.b16 %v1537
    %v1554 = vunpack.c.h.b16 %v1537
    %v1555 = vunpack.c.l.b16 %v1538
    %v1556 = vunpack.c.h.b16 %v1538
    %v1557 = vunpack.c.l.b16 %v1539
    %v1558 = vunpack.c.h.b16 %v1539
    %v1559 = vunpack.c.l.b16 %v1540
    %v1560 = vunpack.c.h.b16 %v1540
    %v1561 = vunpack.c.l.b16 %v1541
    %v1562 = vunpack.c.h.b16 %v1541
    %v1563 = vunpack.c.l.b16 %v1542
    %v1564 = vunpack.c.h.b16 %v1542
    %v1565 = vunpack.c.l.b16 %v1543
    %v1566 = vunpack.c.h.b16 %v1543
    %v1567 = vunpack.c.l.b16 %v1544
    %v1568 = vunpack.c.h.b16 %v1544
    %v1569 = vpack.c.b16 %v1553, %v1553
    %v1570 = vpack.c.b16 %v1554, %v1554
    %v1571 = vpack.c.b16 %v1555, %v1555
    %v1572 = vpack.c.b16 %v1556, %v1556
    %v1573 = vpack.c.b16 %v1557, %v1557
    %v1574 = vpack.c.b16 %v1558, %v1558
    %v1575 = vpack.c.b16 %v1559, %v1559
    %v1576 = vpack.c.b16 %v1560, %v1560
    %v1577 = vpack.c.b16 %v1561, %v1561
    %v1578 = vpack.c.b16 %v1562, %v1562
    %v1579 = vpack.c.b16 %v1563, %v1563
    %v1580 = vpack.c.b16 %v1564, %v1564
    %v1581 = vpack.c.b16 %v1565, %v1565
    %v1582 = vpack.c.b16 %v1566, %v1566
    %v1583 = vpack.c.b16 %v1567, %v1567
    %v1584 = vpack.c.b16 %v1568, %v1568
    %1601 = vst.msk [vmem:[#allocation4 + $0x4] sm:$0xf] %vm1117, %v1569
    %1602 = vst.msk [vmem:[#allocation4 + $0x10] sm:$0xf] %vm1117, %v1570
    %1603 = vst.msk [vmem:[#allocation4 + $0x1c] sm:$0xf] %vm1117, %v1571
    %1604 = vst.msk [vmem:[#allocation4 + $0x28] sm:$0xf] %vm1117, %v1572
    %1605 = vst.msk [vmem:[#allocation4 + $0x34] sm:$0xf] %vm1117, %v1573
    %1606 = vst.msk [vmem:[#allocation4 + $0x40] sm:$0xf] %vm1117, %v1574
    %1607 = vst.msk [vmem:[#allocation4 + $0x4c] sm:$0xf] %vm1117, %v1575
    %1608 = vst.msk [vmem:[#allocation4 + $0x58] sm:$0xf] %vm1117, %v1576
    %1609 = vst.msk [vmem:[#allocation4 + $0x64] sm:$0xf] %vm1117, %v1577
    %1610 = vst.msk [vmem:[#allocation4 + $0x70] sm:$0xf] %vm1117, %v1578
    %1611 = vst.msk [vmem:[#allocation4 + $0x7c] sm:$0xf] %vm1117, %v1579
    %1612 = vst.msk [vmem:[#allocation4 + $0x88] sm:$0xf] %vm1117, %v1580
    %1613 = vst.msk [vmem:[#allocation4 + $0x94] sm:$0xf] %vm1117, %v1581
    %1614 = vst.msk [vmem:[#allocation4 + $0xa0] sm:$0xf] %vm1117, %v1582
    %1615 = vst.msk [vmem:[#allocation4 + $0xac] sm:$0xf] %vm1117, %v1583
    %1616 = vst.msk [vmem:[#allocation4 + $0xb8] sm:$0xf] %vm1117, %v1584
    %v1617 = vld [vmem:[%s1020 + $0x2] sm:$0xff]
    %v1618 = vld [vmem:[%s1020 + $0x12] sm:$0xff]
    %v1619 = vld [vmem:[%s1020 + $0x22] sm:$0xff]
    %v1620 = vld [vmem:[%s1020 + $0x32] sm:$0xff]
    %v1621 = vld [vmem:[%s1020 + $0x42] sm:$0xff]
    %v1622 = vld [vmem:[%s1020 + $0x52] sm:$0xff]
    %v1623 = vld [vmem:[%s1020 + $0x62] sm:$0xff]
    %v1624 = vld [vmem:[%s1020 + $0x72] sm:$0xff]
    %v1625 = vld [vmem:[%s1020 + $0xa2] sm:$0xff]
    %v1626 = vld [vmem:[%s1020 + $0xb2] sm:$0xff]
    %v1627 = vld [vmem:[%s1020 + $0xc2] sm:$0xff]
    %v1628 = vld [vmem:[%s1020 + $0xd2] sm:$0xff]
    %v1629 = vld [vmem:[%s1020 + $0xe2] sm:$0xff]
    %v1630 = vld [vmem:[%s1020 + $0xf2] sm:$0xff]
    %v1631 = vld [vmem:[%s1020 + $0x102] sm:$0xff]
    %v1632 = vld [vmem:[%s1020 + $0x112] sm:$0xff]
    %v1633 = vpack.c.bf16 %v1618, %v1617
    %v1634 = vpack.c.bf16 %v1620, %v1619
    %v1635 = vpack.c.bf16 %v1622, %v1621
    %v1636 = vpack.c.bf16 %v1624, %v1623
    %v1637 = vpack.c.bf16 %v1626, %v1625
    %v1638 = vpack.c.bf16 %v1628, %v1627
    %v1639 = vpack.c.bf16 %v1630, %v1629
    %v1640 = vpack.c.bf16 %v1632, %v1631
    %v1649 = vunpack.c.l.b16 %v1633
    %v1650 = vunpack.c.h.b16 %v1633
    %v1651 = vunpack.c.l.b16 %v1634
    %v1652 = vunpack.c.h.b16 %v1634
    %v1653 = vunpack.c.l.b16 %v1635
    %v1654 = vunpack.c.h.b16 %v1635
    %v1655 = vunpack.c.l.b16 %v1636
    %v1656 = vunpack.c.h.b16 %v1636
    %v1657 = vunpack.c.l.b16 %v1637
    %v1658 = vunpack.c.h.b16 %v1637
    %v1659 = vunpack.c.l.b16 %v1638
    %v1660 = vunpack.c.h.b16 %v1638
    %v1661 = vunpack.c.l.b16 %v1639
    %v1662 = vunpack.c.h.b16 %v1639
    %v1663 = vunpack.c.l.b16 %v1640
    %v1664 = vunpack.c.h.b16 %v1640
    %v1665 = vpack.c.b16 %v1649, %v1649
    %v1666 = vpack.c.b16 %v1650, %v1650
    %v1667 = vpack.c.b16 %v1651, %v1651
    %v1668 = vpack.c.b16 %v1652, %v1652
    %v1669 = vpack.c.b16 %v1653, %v1653
    %v1670 = vpack.c.b16 %v1654, %v1654
    %v1671 = vpack.c.b16 %v1655, %v1655
    %v1672 = vpack.c.b16 %v1656, %v1656
    %v1673 = vpack.c.b16 %v1657, %v1657
    %v1674 = vpack.c.b16 %v1658, %v1658
    %v1675 = vpack.c.b16 %v1659, %v1659
    %v1676 = vpack.c.b16 %v1660, %v1660
    %v1677 = vpack.c.b16 %v1661, %v1661
    %v1678 = vpack.c.b16 %v1662, %v1662
    %v1679 = vpack.c.b16 %v1663, %v1663
    %v1680 = vpack.c.b16 %v1664, %v1664
    %1681 = vrot.lane.b32.xlu0 %v1665, 32
    %v1682 = vpop.permute.xlu0 %1681
    %1683 = vrot.lane.b32.xlu0 %v1666, 32
    %v1684 = vpop.permute.xlu0 %1683
    %1685 = vrot.lane.b32.xlu0 %v1667, 32
    %v1686 = vpop.permute.xlu0 %1685
    %1687 = vrot.lane.b32.xlu0 %v1668, 32
    %v1688 = vpop.permute.xlu0 %1687
    %1689 = vrot.lane.b32.xlu0 %v1669, 32
    %v1690 = vpop.permute.xlu0 %1689
    %1691 = vrot.lane.b32.xlu0 %v1670, 32
    %v1692 = vpop.permute.xlu0 %1691
    %1693 = vrot.lane.b32.xlu0 %v1671, 32
    %v1694 = vpop.permute.xlu0 %1693
    %1695 = vrot.lane.b32.xlu0 %v1672, 32
    %v1696 = vpop.permute.xlu0 %1695
    %1697 = vrot.lane.b32.xlu0 %v1673, 32
    %v1698 = vpop.permute.xlu0 %1697
    %1699 = vrot.lane.b32.xlu0 %v1674, 32
    %v1700 = vpop.permute.xlu0 %1699
    %1701 = vrot.lane.b32.xlu0 %v1675, 32
    %v1702 = vpop.permute.xlu0 %1701
    %1703 = vrot.lane.b32.xlu0 %v1676, 32
    %v1704 = vpop.permute.xlu0 %1703
    %1705 = vrot.lane.b32.xlu0 %v1677, 32
    %v1706 = vpop.permute.xlu0 %1705
    %1707 = vrot.lane.b32.xlu0 %v1678, 32
    %v1708 = vpop.permute.xlu0 %1707
    %1709 = vrot.lane.b32.xlu0 %v1679, 32
    %v1710 = vpop.permute.xlu0 %1709
    %1711 = vrot.lane.b32.xlu0 %v1680, 32
    %v1712 = vpop.permute.xlu0 %1711
    %1729 = vst.msk [vmem:[#allocation4 + $0x4] sm:$0xf] %vm1246, %v1682
    %1730 = vst.msk [vmem:[#allocation4 + $0x10] sm:$0xf] %vm1246, %v1684
    %1731 = vst.msk [vmem:[#allocation4 + $0x1c] sm:$0xf] %vm1246, %v1686
    %1732 = vst.msk [vmem:[#allocation4 + $0x28] sm:$0xf] %vm1246, %v1688
    %1733 = vst.msk [vmem:[#allocation4 + $0x34] sm:$0xf] %vm1246, %v1690
    %1734 = vst.msk [vmem:[#allocation4 + $0x40] sm:$0xf] %vm1246, %v1692
    %1735 = vst.msk [vmem:[#allocation4 + $0x4c] sm:$0xf] %vm1246, %v1694
    %1736 = vst.msk [vmem:[#allocation4 + $0x58] sm:$0xf] %vm1246, %v1696
    %1737 = vst.msk [vmem:[#allocation4 + $0x64] sm:$0xf] %vm1246, %v1698
    %1738 = vst.msk [vmem:[#allocation4 + $0x70] sm:$0xf] %vm1246, %v1700
    %1739 = vst.msk [vmem:[#allocation4 + $0x7c] sm:$0xf] %vm1246, %v1702
    %1740 = vst.msk [vmem:[#allocation4 + $0x88] sm:$0xf] %vm1246, %v1704
    %1741 = vst.msk [vmem:[#allocation4 + $0x94] sm:$0xf] %vm1246, %v1706
    %1742 = vst.msk [vmem:[#allocation4 + $0xa0] sm:$0xf] %vm1246, %v1708
    %1743 = vst.msk [vmem:[#allocation4 + $0xac] sm:$0xf] %vm1246, %v1710
    %1744 = vst.msk [vmem:[#allocation4 + $0xb8] sm:$0xf] %vm1246, %v1712
    %s1745 = scalar_lea.vmem [#allocation3], 32
    %v1746 = vld [vmem:[%s1745] sm:$0xff]
    %v1747 = vld [vmem:[%s1745 + $0x10] sm:$0xff]
    %v1748 = vld [vmem:[%s1745 + $0x20] sm:$0xff]
    %v1749 = vld [vmem:[%s1745 + $0x30] sm:$0xff]
    %v1750 = vld [vmem:[%s1745 + $0x40] sm:$0xff]
    %v1751 = vld [vmem:[%s1745 + $0x50] sm:$0xff]
    %v1752 = vld [vmem:[%s1745 + $0x60] sm:$0xff]
    %v1753 = vld [vmem:[%s1745 + $0x70] sm:$0xff]
    %v1754 = vld [vmem:[%s1745 + $0xa0] sm:$0xff]
    %v1755 = vld [vmem:[%s1745 + $0xb0] sm:$0xff]
    %v1756 = vld [vmem:[%s1745 + $0xc0] sm:$0xff]
    %v1757 = vld [vmem:[%s1745 + $0xd0] sm:$0xff]
    %v1758 = vld [vmem:[%s1745 + $0xe0] sm:$0xff]
    %v1759 = vld [vmem:[%s1745 + $0xf0] sm:$0xff]
    %v1760 = vld [vmem:[%s1745 + $0x100] sm:$0xff]
    %v1761 = vld [vmem:[%s1745 + $0x110] sm:$0xff]
    %v1762 = vpack.c.bf16 %v1747, %v1746
    %v1763 = vpack.c.bf16 %v1749, %v1748
    %v1764 = vpack.c.bf16 %v1751, %v1750
    %v1765 = vpack.c.bf16 %v1753, %v1752
    %v1766 = vpack.c.bf16 %v1755, %v1754
    %v1767 = vpack.c.bf16 %v1757, %v1756
    %v1768 = vpack.c.bf16 %v1759, %v1758
    %v1769 = vpack.c.bf16 %v1761, %v1760
    %v1778 = vunpack.c.l.b16 %v1762
    %v1779 = vunpack.c.h.b16 %v1762
    %v1780 = vunpack.c.l.b16 %v1763
    %v1781 = vunpack.c.h.b16 %v1763
    %v1782 = vunpack.c.l.b16 %v1764
    %v1783 = vunpack.c.h.b16 %v1764
    %v1784 = vunpack.c.l.b16 %v1765
    %v1785 = vunpack.c.h.b16 %v1765
    %v1786 = vunpack.c.l.b16 %v1766
    %v1787 = vunpack.c.h.b16 %v1766
    %v1788 = vunpack.c.l.b16 %v1767
    %v1789 = vunpack.c.h.b16 %v1767
    %v1790 = vunpack.c.l.b16 %v1768
    %v1791 = vunpack.c.h.b16 %v1768
    %v1792 = vunpack.c.l.b16 %v1769
    %v1793 = vunpack.c.h.b16 %v1769
    %v1794 = vpack.c.b16 %v1778, %v1778
    %v1795 = vpack.c.b16 %v1779, %v1779
    %v1796 = vpack.c.b16 %v1780, %v1780
    %v1797 = vpack.c.b16 %v1781, %v1781
    %v1798 = vpack.c.b16 %v1782, %v1782
    %v1799 = vpack.c.b16 %v1783, %v1783
    %v1800 = vpack.c.b16 %v1784, %v1784
    %v1801 = vpack.c.b16 %v1785, %v1785
    %v1802 = vpack.c.b16 %v1786, %v1786
    %v1803 = vpack.c.b16 %v1787, %v1787
    %v1804 = vpack.c.b16 %v1788, %v1788
    %v1805 = vpack.c.b16 %v1789, %v1789
    %v1806 = vpack.c.b16 %v1790, %v1790
    %v1807 = vpack.c.b16 %v1791, %v1791
    %v1808 = vpack.c.b16 %v1792, %v1792
    %v1809 = vpack.c.b16 %v1793, %v1793
    %1810 = vrot.lane.b32.xlu0 %v1794, 64
    %v1811 = vpop.permute.xlu0 %1810
    %1812 = vrot.lane.b32.xlu0 %v1795, 64
    %v1813 = vpop.permute.xlu0 %1812
    %1814 = vrot.lane.b32.xlu0 %v1796, 64
    %v1815 = vpop.permute.xlu0 %1814
    %1816 = vrot.lane.b32.xlu0 %v1797, 64
    %v1817 = vpop.permute.xlu0 %1816
    %1818 = vrot.lane.b32.xlu0 %v1798, 64
    %v1819 = vpop.permute.xlu0 %1818
    %1820 = vrot.lane.b32.xlu0 %v1799, 64
    %v1821 = vpop.permute.xlu0 %1820
    %1822 = vrot.lane.b32.xlu0 %v1800, 64
    %v1823 = vpop.permute.xlu0 %1822
    %1824 = vrot.lane.b32.xlu0 %v1801, 64
    %v1825 = vpop.permute.xlu0 %1824
    %1826 = vrot.lane.b32.xlu0 %v1802, 64
    %v1827 = vpop.permute.xlu0 %1826
    %1828 = vrot.lane.b32.xlu0 %v1803, 64
    %v1829 = vpop.permute.xlu0 %1828
    %1830 = vrot.lane.b32.xlu0 %v1804, 64
    %v1831 = vpop.permute.xlu0 %1830
    %1832 = vrot.lane.b32.xlu0 %v1805, 64
    %v1833 = vpop.permute.xlu0 %1832
    %1834 = vrot.lane.b32.xlu0 %v1806, 64
    %v1835 = vpop.permute.xlu0 %1834
    %1836 = vrot.lane.b32.xlu0 %v1807, 64
    %v1837 = vpop.permute.xlu0 %1836
    %1838 = vrot.lane.b32.xlu0 %v1808, 64
    %v1839 = vpop.permute.xlu0 %1838
    %1840 = vrot.lane.b32.xlu0 %v1809, 64
    %v1841 = vpop.permute.xlu0 %1840
    %1858 = vst.msk [vmem:[#allocation4 + $0x4] sm:$0xf] %vm1375, %v1811
    %1859 = vst.msk [vmem:[#allocation4 + $0x10] sm:$0xf] %vm1375, %v1813
    %1860 = vst.msk [vmem:[#allocation4 + $0x1c] sm:$0xf] %vm1375, %v1815
    %1861 = vst.msk [vmem:[#allocation4 + $0x28] sm:$0xf] %vm1375, %v1817
    %1862 = vst.msk [vmem:[#allocation4 + $0x34] sm:$0xf] %vm1375, %v1819
    %1863 = vst.msk [vmem:[#allocation4 + $0x40] sm:$0xf] %vm1375, %v1821
    %1864 = vst.msk [vmem:[#allocation4 + $0x4c] sm:$0xf] %vm1375, %v1823
    %1865 = vst.msk [vmem:[#allocation4 + $0x58] sm:$0xf] %vm1375, %v1825
    %1866 = vst.msk [vmem:[#allocation4 + $0x64] sm:$0xf] %vm1375, %v1827
    %1867 = vst.msk [vmem:[#allocation4 + $0x70] sm:$0xf] %vm1375, %v1829
    %1868 = vst.msk [vmem:[#allocation4 + $0x7c] sm:$0xf] %vm1375, %v1831
    %1869 = vst.msk [vmem:[#allocation4 + $0x88] sm:$0xf] %vm1375, %v1833
    %1870 = vst.msk [vmem:[#allocation4 + $0x94] sm:$0xf] %vm1375, %v1835
    %1871 = vst.msk [vmem:[#allocation4 + $0xa0] sm:$0xf] %vm1375, %v1837
    %1872 = vst.msk [vmem:[#allocation4 + $0xac] sm:$0xf] %vm1375, %v1839
    %1873 = vst.msk [vmem:[#allocation4 + $0xb8] sm:$0xf] %vm1375, %v1841
    %v1874 = vld [vmem:[%s1745 + $0x1] sm:$0xff]
    %v1875 = vld [vmem:[%s1745 + $0x11] sm:$0xff]
    %v1876 = vld [vmem:[%s1745 + $0x21] sm:$0xff]
    %v1877 = vld [vmem:[%s1745 + $0x31] sm:$0xff]
    %v1878 = vld [vmem:[%s1745 + $0x41] sm:$0xff]
    %v1879 = vld [vmem:[%s1745 + $0x51] sm:$0xff]
    %v1880 = vld [vmem:[%s1745 + $0x61] sm:$0xff]
    %v1881 = vld [vmem:[%s1745 + $0x71] sm:$0xff]
    %v1882 = vld [vmem:[%s1745 + $0xa1] sm:$0xff]
    %v1883 = vld [vmem:[%s1745 + $0xb1] sm:$0xff]
    %v1884 = vld [vmem:[%s1745 + $0xc1] sm:$0xff]
    %v1885 = vld [vmem:[%s1745 + $0xd1] sm:$0xff]
    %v1886 = vld [vmem:[%s1745 + $0xe1] sm:$0xff]
    %v1887 = vld [vmem:[%s1745 + $0xf1] sm:$0xff]
    %v1888 = vld [vmem:[%s1745 + $0x101] sm:$0xff]
    %v1889 = vld [vmem:[%s1745 + $0x111] sm:$0xff]
    %v1890 = vpack.c.bf16 %v1875, %v1874
    %v1891 = vpack.c.bf16 %v1877, %v1876
    %v1892 = vpack.c.bf16 %v1879, %v1878
    %v1893 = vpack.c.bf16 %v1881, %v1880
    %v1894 = vpack.c.bf16 %v1883, %v1882
    %v1895 = vpack.c.bf16 %v1885, %v1884
    %v1896 = vpack.c.bf16 %v1887, %v1886
    %v1897 = vpack.c.bf16 %v1889, %v1888
    %v1906 = vunpack.c.l.b16 %v1890
    %v1907 = vunpack.c.h.b16 %v1890
    %v1908 = vunpack.c.l.b16 %v1891
    %v1909 = vunpack.c.h.b16 %v1891
    %v1910 = vunpack.c.l.b16 %v1892
    %v1911 = vunpack.c.h.b16 %v1892
    %v1912 = vunpack.c.l.b16 %v1893
    %v1913 = vunpack.c.h.b16 %v1893
    %v1914 = vunpack.c.l.b16 %v1894
    %v1915 = vunpack.c.h.b16 %v1894
    %v1916 = vunpack.c.l.b16 %v1895
    %v1917 = vunpack.c.h.b16 %v1895
    %v1918 = vunpack.c.l.b16 %v1896
    %v1919 = vunpack.c.h.b16 %v1896
    %v1920 = vunpack.c.l.b16 %v1897
    %v1921 = vunpack.c.h.b16 %v1897
    %v1922 = vpack.c.b16 %v1906, %v1906
    %v1923 = vpack.c.b16 %v1907, %v1907
    %v1924 = vpack.c.b16 %v1908, %v1908
    %v1925 = vpack.c.b16 %v1909, %v1909
    %v1926 = vpack.c.b16 %v1910, %v1910
    %v1927 = vpack.c.b16 %v1911, %v1911
    %v1928 = vpack.c.b16 %v1912, %v1912
    %v1929 = vpack.c.b16 %v1913, %v1913
    %v1930 = vpack.c.b16 %v1914, %v1914
    %v1931 = vpack.c.b16 %v1915, %v1915
    %v1932 = vpack.c.b16 %v1916, %v1916
    %v1933 = vpack.c.b16 %v1917, %v1917
    %v1934 = vpack.c.b16 %v1918, %v1918
    %v1935 = vpack.c.b16 %v1919, %v1919
    %v1936 = vpack.c.b16 %v1920, %v1920
    %v1937 = vpack.c.b16 %v1921, %v1921
    %1938 = vrot.lane.b32.xlu0 %v1922, 96
    %v1939 = vpop.permute.xlu0 %1938
    %1940 = vrot.lane.b32.xlu0 %v1923, 96
    %v1941 = vpop.permute.xlu0 %1940
    %1942 = vrot.lane.b32.xlu0 %v1924, 96
    %v1943 = vpop.permute.xlu0 %1942
    %1944 = vrot.lane.b32.xlu0 %v1925, 96
    %v1945 = vpop.permute.xlu0 %1944
    %1946 = vrot.lane.b32.xlu0 %v1926, 96
    %v1947 = vpop.permute.xlu0 %1946
    %1948 = vrot.lane.b32.xlu0 %v1927, 96
    %v1949 = vpop.permute.xlu0 %1948
    %1950 = vrot.lane.b32.xlu0 %v1928, 96
    %v1951 = vpop.permute.xlu0 %1950
    %1952 = vrot.lane.b32.xlu0 %v1929, 96
    %v1953 = vpop.permute.xlu0 %1952
    %1954 = vrot.lane.b32.xlu0 %v1930, 96
    %v1955 = vpop.permute.xlu0 %1954
    %1956 = vrot.lane.b32.xlu0 %v1931, 96
    %v1957 = vpop.permute.xlu0 %1956
    %1958 = vrot.lane.b32.xlu0 %v1932, 96
    %v1959 = vpop.permute.xlu0 %1958
    %1960 = vrot.lane.b32.xlu0 %v1933, 96
    %v1961 = vpop.permute.xlu0 %1960
    %1962 = vrot.lane.b32.xlu0 %v1934, 96
    %v1963 = vpop.permute.xlu0 %1962
    %1964 = vrot.lane.b32.xlu0 %v1935, 96
    %v1965 = vpop.permute.xlu0 %1964
    %1966 = vrot.lane.b32.xlu0 %v1936, 96
    %v1967 = vpop.permute.xlu0 %1966
    %1968 = vrot.lane.b32.xlu0 %v1937, 96
    %v1969 = vpop.permute.xlu0 %1968
    %1986 = vst.msk [vmem:[#allocation4 + $0x4] sm:$0xf] %vm1504, %v1939
    %1987 = vst.msk [vmem:[#allocation4 + $0x10] sm:$0xf] %vm1504, %v1941
    %1988 = vst.msk [vmem:[#allocation4 + $0x1c] sm:$0xf] %vm1504, %v1943
    %1989 = vst.msk [vmem:[#allocation4 + $0x28] sm:$0xf] %vm1504, %v1945
    %1990 = vst.msk [vmem:[#allocation4 + $0x34] sm:$0xf] %vm1504, %v1947
    %1991 = vst.msk [vmem:[#allocation4 + $0x40] sm:$0xf] %vm1504, %v1949
    %1992 = vst.msk [vmem:[#allocation4 + $0x4c] sm:$0xf] %vm1504, %v1951
    %1993 = vst.msk [vmem:[#allocation4 + $0x58] sm:$0xf] %vm1504, %v1953
    %1994 = vst.msk [vmem:[#allocation4 + $0x64] sm:$0xf] %vm1504, %v1955
    %1995 = vst.msk [vmem:[#allocation4 + $0x70] sm:$0xf] %vm1504, %v1957
    %1996 = vst.msk [vmem:[#allocation4 + $0x7c] sm:$0xf] %vm1504, %v1959
    %1997 = vst.msk [vmem:[#allocation4 + $0x88] sm:$0xf] %vm1504, %v1961
    %1998 = vst.msk [vmem:[#allocation4 + $0x94] sm:$0xf] %vm1504, %v1963
    %1999 = vst.msk [vmem:[#allocation4 + $0xa0] sm:$0xf] %vm1504, %v1965
    %2000 = vst.msk [vmem:[#allocation4 + $0xac] sm:$0xf] %vm1504, %v1967
    %2001 = vst.msk [vmem:[#allocation4 + $0xb8] sm:$0xf] %vm1504, %v1969
    %v2002 = vld [vmem:[%s1745 + $0x2] sm:$0xff]
    %v2003 = vld [vmem:[%s1745 + $0x12] sm:$0xff]
    %v2004 = vld [vmem:[%s1745 + $0x22] sm:$0xff]
    %v2005 = vld [vmem:[%s1745 + $0x32] sm:$0xff]
    %v2006 = vld [vmem:[%s1745 + $0x42] sm:$0xff]
    %v2007 = vld [vmem:[%s1745 + $0x52] sm:$0xff]
    %v2008 = vld [vmem:[%s1745 + $0x62] sm:$0xff]
    %v2009 = vld [vmem:[%s1745 + $0x72] sm:$0xff]
    %v2010 = vld [vmem:[%s1745 + $0xa2] sm:$0xff]
    %v2011 = vld [vmem:[%s1745 + $0xb2] sm:$0xff]
    %v2012 = vld [vmem:[%s1745 + $0xc2] sm:$0xff]
    %v2013 = vld [vmem:[%s1745 + $0xd2] sm:$0xff]
    %v2014 = vld [vmem:[%s1745 + $0xe2] sm:$0xff]
    %v2015 = vld [vmem:[%s1745 + $0xf2] sm:$0xff]
    %v2016 = vld [vmem:[%s1745 + $0x102] sm:$0xff]
    %v2017 = vld [vmem:[%s1745 + $0x112] sm:$0xff]
    %v2018 = vpack.c.bf16 %v2003, %v2002
    %v2019 = vpack.c.bf16 %v2005, %v2004
    %v2020 = vpack.c.bf16 %v2007, %v2006
    %v2021 = vpack.c.bf16 %v2009, %v2008
    %v2022 = vpack.c.bf16 %v2011, %v2010
    %v2023 = vpack.c.bf16 %v2013, %v2012
    %v2024 = vpack.c.bf16 %v2015, %v2014
    %v2025 = vpack.c.bf16 %v2017, %v2016
    %v2034 = vunpack.c.l.b16 %v2018
    %v2035 = vunpack.c.h.b16 %v2018
    %v2036 = vunpack.c.l.b16 %v2019
    %v2037 = vunpack.c.h.b16 %v2019
    %v2038 = vunpack.c.l.b16 %v2020
    %v2039 = vunpack.c.h.b16 %v2020
    %v2040 = vunpack.c.l.b16 %v2021
    %v2041 = vunpack.c.h.b16 %v2021
    %v2042 = vunpack.c.l.b16 %v2022
    %v2043 = vunpack.c.h.b16 %v2022
    %v2044 = vunpack.c.l.b16 %v2023
    %v2045 = vunpack.c.h.b16 %v2023
    %v2046 = vunpack.c.l.b16 %v2024
    %v2047 = vunpack.c.h.b16 %v2024
    %v2048 = vunpack.c.l.b16 %v2025
    %v2049 = vunpack.c.h.b16 %v2025
    %v2050 = vpack.c.b16 %v2034, %v2034
    %v2051 = vpack.c.b16 %v2035, %v2035
    %v2052 = vpack.c.b16 %v2036, %v2036
    %v2053 = vpack.c.b16 %v2037, %v2037
    %v2054 = vpack.c.b16 %v2038, %v2038
    %v2055 = vpack.c.b16 %v2039, %v2039
    %v2056 = vpack.c.b16 %v2040, %v2040
    %v2057 = vpack.c.b16 %v2041, %v2041
    %v2058 = vpack.c.b16 %v2042, %v2042
    %v2059 = vpack.c.b16 %v2043, %v2043
    %v2060 = vpack.c.b16 %v2044, %v2044
    %v2061 = vpack.c.b16 %v2045, %v2045
    %v2062 = vpack.c.b16 %v2046, %v2046
    %v2063 = vpack.c.b16 %v2047, %v2047
    %v2064 = vpack.c.b16 %v2048, %v2048
    %v2065 = vpack.c.b16 %v2049, %v2049
    %2082 = vst.msk [vmem:[#allocation4 + $0x8] sm:$0xf] %vm1117, %v2050
    %2083 = vst.msk [vmem:[#allocation4 + $0x14] sm:$0xf] %vm1117, %v2051
    %2084 = vst.msk [vmem:[#allocation4 + $0x20] sm:$0xf] %vm1117, %v2052
    %2085 = vst.msk [vmem:[#allocation4 + $0x2c] sm:$0xf] %vm1117, %v2053
    %2086 = vst.msk [vmem:[#allocation4 + $0x38] sm:$0xf] %vm1117, %v2054
    %2087 = vst.msk [vmem:[#allocation4 + $0x44] sm:$0xf] %vm1117, %v2055
    %2088 = vst.msk [vmem:[#allocation4 + $0x50] sm:$0xf] %vm1117, %v2056
    %2089 = vst.msk [vmem:[#allocation4 + $0x5c] sm:$0xf] %vm1117, %v2057
    %2090 = vst.msk [vmem:[#allocation4 + $0x68] sm:$0xf] %vm1117, %v2058
    %2091 = vst.msk [vmem:[#allocation4 + $0x74] sm:$0xf] %vm1117, %v2059
    %2092 = vst.msk [vmem:[#allocation4 + $0x80] sm:$0xf] %vm1117, %v2060
    %2093 = vst.msk [vmem:[#allocation4 + $0x8c] sm:$0xf] %vm1117, %v2061
    %2094 = vst.msk [vmem:[#allocation4 + $0x98] sm:$0xf] %vm1117, %v2062
    %2095 = vst.msk [vmem:[#allocation4 + $0xa4] sm:$0xf] %vm1117, %v2063
    %2096 = vst.msk [vmem:[#allocation4 + $0xb0] sm:$0xf] %vm1117, %v2064
    %2097 = vst.msk [vmem:[#allocation4 + $0xbc] sm:$0xf] %vm1117, %v2065
    %v2098 = vld [vmem:[#allocation4] sm:$0xff]
    %v2099 = vld [vmem:[#allocation4 + $0x8] sm:$0xf]
    %v2100 = vld [vmem:[#allocation4 + $0xc] sm:$0xff]
    %v2101 = vld [vmem:[#allocation4 + $0x14] sm:$0xf]
    %v2102 = vld [vmem:[#allocation4 + $0x18] sm:$0xff]
    %v2103 = vld [vmem:[#allocation4 + $0x20] sm:$0xf]
    %v2104 = vld [vmem:[#allocation4 + $0x24] sm:$0xff]
    %v2105 = vld [vmem:[#allocation4 + $0x2c] sm:$0xf]
    %v2106 = vld [vmem:[#allocation4 + $0x30] sm:$0xff]
    %v2107 = vld [vmem:[#allocation4 + $0x38] sm:$0xf]
    %v2108 = vld [vmem:[#allocation4 + $0x3c] sm:$0xff]
    %v2109 = vld [vmem:[#allocation4 + $0x44] sm:$0xf]
    %v2110 = vld [vmem:[#allocation4 + $0x48] sm:$0xff]
    %v2111 = vld [vmem:[#allocation4 + $0x50] sm:$0xf]
    %v2112 = vld [vmem:[#allocation4 + $0x54] sm:$0xff]
    %v2113 = vld [vmem:[#allocation4 + $0x5c] sm:$0xf]
    %v2114 = vld [vmem:[#allocation4 + $0x60] sm:$0xff]
    %v2115 = vld [vmem:[#allocation4 + $0x68] sm:$0xf]
    %v2116 = vld [vmem:[#allocation4 + $0x6c] sm:$0xff]
    %v2117 = vld [vmem:[#allocation4 + $0x74] sm:$0xf]
    %v2118 = vld [vmem:[#allocation4 + $0x78] sm:$0xff]
    %v2119 = vld [vmem:[#allocation4 + $0x80] sm:$0xf]
    %v2120 = vld [vmem:[#allocation4 + $0x84] sm:$0xff]
    %v2121 = vld [vmem:[#allocation4 + $0x8c] sm:$0xf]
    %v2122 = vld [vmem:[#allocation4 + $0x90] sm:$0xff]
    %v2123 = vld [vmem:[#allocation4 + $0x98] sm:$0xf]
    %v2124 = vld [vmem:[#allocation4 + $0x9c] sm:$0xff]
    %v2125 = vld [vmem:[#allocation4 + $0xa4] sm:$0xf]
    %v2126 = vld [vmem:[#allocation4 + $0xa8] sm:$0xff]
    %v2127 = vld [vmem:[#allocation4 + $0xb0] sm:$0xf]
    %v2128 = vld [vmem:[#allocation4 + $0xb4] sm:$0xff]
    %v2129 = vld [vmem:[#allocation4 + $0xbc] sm:$0xf]
    %v2130 = vld [vmem:[%s3] sm:$0xf]
    %v2131 = vld [vmem:[%s3 + $0x4] sm:$0xf]
    %v2132 = vld [vmem:[%s3 + $0x8] sm:$0xf]
    %v2133 = vld [vmem:[%s3 + $0xc] sm:$0xf]
    %v2134 = vld [vmem:[%s3 + $0x10] sm:$0xf]
    %v2135 = vld [vmem:[%s3 + $0x14] sm:$0xf]
    %v2136 = vld [vmem:[%s3 + $0x18] sm:$0xf]
    %v2137 = vld [vmem:[%s3 + $0x1c] sm:$0xf]
    %v2138 = vld [vmem:[%s3 + $0x20] sm:$0xf]
    %v2139 = vld [vmem:[%s3 + $0x24] sm:$0xf]
    %v2140 = vld [vmem:[%s3 + $0x28] sm:$0xf]
    %v2141 = vld [vmem:[%s3 + $0x2c] sm:$0xf]
    %v2142 = vld [vmem:[%s3 + $0x30] sm:$0xf]
    %v2143 = vld [vmem:[%s3 + $0x34] sm:$0xf]
    %v2144 = vld [vmem:[%s3 + $0x38] sm:$0xf]
    %v2145 = vld [vmem:[%s3 + $0x3c] sm:$0xf]
    %v2146 = vld [vmem:[%s3 + $0x40] sm:$0xf]
    %v2147 = vld [vmem:[%s3 + $0x44] sm:$0xf]
    %v2148 = vld [vmem:[%s3 + $0x48] sm:$0xf]
    %v2149 = vld [vmem:[%s3 + $0x4c] sm:$0xf]
    %v2150 = vld [vmem:[%s3 + $0x50] sm:$0xf]
    %v2151 = vld [vmem:[%s3 + $0x54] sm:$0xf]
    %v2152 = vld [vmem:[%s3 + $0x58] sm:$0xf]
    %v2153 = vld [vmem:[%s3 + $0x5c] sm:$0xf]
    %v2154 = vld [vmem:[%s3 + $0x60] sm:$0xf]
    %v2155 = vld [vmem:[%s3 + $0x64] sm:$0xf]
    %v2156 = vld [vmem:[%s3 + $0x68] sm:$0xf]
    %v2157 = vld [vmem:[%s3 + $0x6c] sm:$0xf]
    %v2158 = vld [vmem:[%s3 + $0x70] sm:$0xf]
    %v2159 = vld [vmem:[%s3 + $0x74] sm:$0xf]
    %v2160 = vld [vmem:[%s3 + $0x78] sm:$0xf]
    %v2161 = vld [vmem:[%s3 + $0x7c] sm:$0xf]
    %v2162 = vld [vmem:[%s3 + $0x80] sm:$0xf]
    %v2163 = vld [vmem:[%s3 + $0x84] sm:$0xf]
    %v2164 = vld [vmem:[%s3 + $0x88] sm:$0xf]
    %v2165 = vld [vmem:[%s3 + $0x8c] sm:$0xf]
    %v2166 = vld [vmem:[%s4] sm:$0x1]
    %v2168 = vlaneseq
    %v2169 = vshrl.u32 %v2168, 7
    %v2170 = vsub.s32 0, %v2169
    %v2171 = vrot.slane %v2166, %v2170
    %v2205 = vunpack.c.l.b16 %v2098
    %v2206 = vunpack.c.h.b16 %v2098
    %v2207 = vunpack.c.l.b16 %v2099
    %v2208 = vunpack.c.l.b16 %v2100
    %v2209 = vunpack.c.h.b16 %v2100
    %v2210 = vunpack.c.l.b16 %v2101
    %v2211 = vunpack.c.l.b16 %v2102
    %v2212 = vunpack.c.h.b16 %v2102
    %v2213 = vunpack.c.l.b16 %v2103
    %v2214 = vunpack.c.l.b16 %v2104
    %v2215 = vunpack.c.h.b16 %v2104
    %v2216 = vunpack.c.l.b16 %v2105
    %v2217 = vunpack.c.l.b16 %v2106
    %v2218 = vunpack.c.h.b16 %v2106
    %v2219 = vunpack.c.l.b16 %v2107
    %v2220 = vunpack.c.l.b16 %v2108
    %v2221 = vunpack.c.h.b16 %v2108
    %v2222 = vunpack.c.l.b16 %v2109
    %v2223 = vunpack.c.l.b16 %v2110
    %v2224 = vunpack.c.h.b16 %v2110
    %v2225 = vunpack.c.l.b16 %v2111
    %v2226 = vunpack.c.l.b16 %v2112
    %v2227 = vunpack.c.h.b16 %v2112
    %v2228 = vunpack.c.l.b16 %v2113
    %v2229 = vunpack.c.l.b16 %v2114
    %v2230 = vunpack.c.h.b16 %v2114
    %v2231 = vunpack.c.l.b16 %v2115
    %v2232 = vunpack.c.l.b16 %v2116
    %v2233 = vunpack.c.h.b16 %v2116
    %v2234 = vunpack.c.l.b16 %v2117
    %v2235 = vunpack.c.l.b16 %v2118
    %v2236 = vunpack.c.h.b16 %v2118
    %v2237 = vunpack.c.l.b16 %v2119
    %v2238 = vunpack.c.l.b16 %v2120
    %v2239 = vunpack.c.h.b16 %v2120
    %v2240 = vunpack.c.l.b16 %v2121
    %v2241 = vunpack.c.l.b16 %v2122
    %v2242 = vunpack.c.h.b16 %v2122
    %v2243 = vunpack.c.l.b16 %v2123
    %v2244 = vunpack.c.l.b16 %v2124
    %v2245 = vunpack.c.h.b16 %v2124
    %v2246 = vunpack.c.l.b16 %v2125
    %v2247 = vunpack.c.l.b16 %v2126
    %v2248 = vunpack.c.h.b16 %v2126
    %v2249 = vunpack.c.l.b16 %v2127
    %v2250 = vunpack.c.l.b16 %v2128
    %v2251 = vunpack.c.h.b16 %v2128
    %v2252 = vunpack.c.l.b16 %v2129
    %v2253 = vpack.c.b16 %v2208, %v2205
    %v2254 = vpack.c.b16 %v2209, %v2206
    %v2255 = vpack.c.b16 %v2210, %v2207
    %v2256 = vpack.c.b16 %v2214, %v2211
    %v2257 = vpack.c.b16 %v2215, %v2212
    %v2258 = vpack.c.b16 %v2216, %v2213
    %v2259 = vpack.c.b16 %v2220, %v2217
    %v2260 = vpack.c.b16 %v2221, %v2218
    %v2261 = vpack.c.b16 %v2222, %v2219
    %v2262 = vpack.c.b16 %v2226, %v2223
    %v2263 = vpack.c.b16 %v2227, %v2224
    %v2264 = vpack.c.b16 %v2228, %v2225
    %v2265 = vpack.c.b16 %v2232, %v2229
    %v2266 = vpack.c.b16 %v2233, %v2230
    %v2267 = vpack.c.b16 %v2234, %v2231
    %v2268 = vpack.c.b16 %v2238, %v2235
    %v2269 = vpack.c.b16 %v2239, %v2236
    %v2270 = vpack.c.b16 %v2240, %v2237
    %v2271 = vpack.c.b16 %v2244, %v2241
    %v2272 = vpack.c.b16 %v2245, %v2242
    %v2273 = vpack.c.b16 %v2246, %v2243
    %v2274 = vpack.c.b16 %v2250, %v2247
    %v2275 = vpack.c.b16 %v2251, %v2248
    %v2276 = vpack.c.b16 %v2252, %v2249
    %v2329 = vunpack.c.l.b16 %v2130
    %v2330 = vunpack.c.l.b16 %v2131
    %v2331 = vunpack.c.l.b16 %v2132
    %v2332 = vunpack.c.l.b16 %v2133
    %v2333 = vunpack.c.l.b16 %v2134
    %v2334 = vunpack.c.l.b16 %v2135
    %v2335 = vunpack.c.l.b16 %v2136
    %v2336 = vunpack.c.l.b16 %v2137
    %v2337 = vunpack.c.l.b16 %v2138
    %v2338 = vunpack.c.l.b16 %v2139
    %v2339 = vunpack.c.l.b16 %v2140
    %v2340 = vunpack.c.l.b16 %v2141
    %v2341 = vunpack.c.l.b16 %v2142
    %v2342 = vunpack.c.l.b16 %v2143
    %v2343 = vunpack.c.l.b16 %v2144
    %v2344 = vunpack.c.l.b16 %v2145
    %v2345 = vunpack.c.l.b16 %v2146
    %v2346 = vunpack.c.l.b16 %v2147
    %v2347 = vunpack.c.l.b16 %v2148
    %v2348 = vunpack.c.l.b16 %v2149
    %v2349 = vunpack.c.l.b16 %v2150
    %v2350 = vunpack.c.l.b16 %v2151
    %v2351 = vunpack.c.l.b16 %v2152
    %v2352 = vunpack.c.l.b16 %v2153
    %v2353 = vunpack.c.l.b16 %v2154
    %v2354 = vunpack.c.l.b16 %v2155
    %v2355 = vunpack.c.l.b16 %v2156
    %v2356 = vunpack.c.l.b16 %v2157
    %v2357 = vunpack.c.l.b16 %v2158
    %v2358 = vunpack.c.l.b16 %v2159
    %v2359 = vunpack.c.l.b16 %v2160
    %v2360 = vunpack.c.l.b16 %v2161
    %v2361 = vunpack.c.l.b16 %v2162
    %v2362 = vunpack.c.l.b16 %v2163
    %v2363 = vunpack.c.l.b16 %v2164
    %v2364 = vunpack.c.l.b16 %v2165
    %v2365 = vpack.c.b16 %v2330, %v2329
    %v2366 = vpack.c.b16 %v2332, %v2331
    %v2367 = vpack.c.b16 %v2334, %v2333
    %v2368 = vpack.c.b16 %v2336, %v2335
    %v2369 = vpack.c.b16 %v2338, %v2337
    %v2370 = vpack.c.b16 %v2340, %v2339
    %v2371 = vpack.c.b16 %v2342, %v2341
    %v2372 = vpack.c.b16 %v2344, %v2343
    %v2373 = vpack.c.b16 %v2346, %v2345
    %v2374 = vpack.c.b16 %v2348, %v2347
    %v2375 = vpack.c.b16 %v2350, %v2349
    %v2376 = vpack.c.b16 %v2352, %v2351
    %v2377 = vpack.c.b16 %v2354, %v2353
    %v2378 = vpack.c.b16 %v2356, %v2355
    %v2379 = vpack.c.b16 %v2358, %v2357
    %v2380 = vpack.c.b16 %v2360, %v2359
    %v2381 = vpack.c.b16 %v2362, %v2361
    %v2382 = vpack.c.b16 %v2364, %v2363
    %v2402 = vsel %vm34, %v2255, 0
    %v2405 = vsel %vm34, %v2258, 0
    %v2408 = vsel %vm34, %v2261, 0
    %v2411 = vsel %vm34, %v2264, 0
    %v2414 = vsel %vm34, %v2267, 0
    %v2417 = vsel %vm34, %v2270, 0
    %v2420 = vsel %vm34, %v2273, 0
    %v2423 = vsel %vm34, %v2276, 0
    %2425 = vmatprep.subr.bf16.mxu0 0
    %2426 = vmatpush1.bf16.msra.mxu0 %v2372
    %2427 = vmatprep.subr.bf16.mxu0 0
    %2428 = vmatpush1.bf16.msra.mxu0 %v2371
    %2429 = vmatprep.subr.bf16.mxu0 0
    %2430 = vmatpush1.bf16.msra.mxu0 %v2370
    %2431 = vmatprep.subr.bf16.mxu0 0
    %2432 = vmatpush1.bf16.msra.mxu0 %v2369
    %2433 = vmatprep.subr.bf16.mxu0 0
    %2434 = vmatpush1.bf16.msra.mxu0 %v2368
    %2435 = vmatprep.subr.bf16.mxu0 0
    %2436 = vmatpush1.bf16.msra.mxu0 %v2367
    %2437 = vmatprep.subr.bf16.mxu0 0
    %2438 = vmatpush1.bf16.msra.mxu0 %v2366
    %2439 = vmatprep.subr.bf16.mxu0 0
    %2440 = vmatpush1.bf16.msra.mxu0 %v2365
    %2441 = vmatprep.subr.bf16.mxu0 0
    %2442 = vmatpush2.bf16.msra.mxu0 %v2380
    %2443 = vmatprep.subr.bf16.mxu0 0
    %2444 = vmatpush2.bf16.msra.mxu0 %v2379
    %2445 = vmatprep.subr.bf16.mxu0 0
    %2446 = vmatpush2.bf16.msra.mxu0 %v2378
    %2447 = vmatprep.subr.bf16.mxu0 0
    %2448 = vmatpush2.bf16.msra.mxu0 %v2377
    %2449 = vmatprep.subr.bf16.mxu0 0
    %2450 = vmatpush2.bf16.msra.mxu0 %v2376
    %2451 = vmatprep.subr.bf16.mxu0 0
    %2452 = vmatpush2.bf16.msra.mxu0 %v2375
    %2453 = vmatprep.subr.bf16.mxu0 0
    %2454 = vmatpush2.bf16.msra.mxu0 %v2374
    %2455 = vmatprep.subr.bf16.mxu0 0
    %2456 = vmatpush2.bf16.msra.mxu0 %v2373
    %2457 = vmatprep.mubr.bf16.mxu0 %v2254
    %2458 = vmatmul.mubr.bf16.gmra.mxu0 %v2253
    %v2459 = vpop.f32.mrf.mxu0
    %v2460 = vadd.f32 %v2171, %v2459
    %v2461 = vpop.f32.mrf.mxu0
    %v2462 = vpop.f32.mrf.mxu0
    %v2463 = vadd.f32 %v2171, %v2462
    %v2464 = vpop.f32.mrf.mxu0
    %2465 = vmatprep.mubr.bf16.mxu0 %v2257
    %2466 = vmatmul.mubr.bf16.gmra.mxu0 %v2256
    %v2467 = vpop.f32.mrf.mxu0
    %v2468 = vadd.f32 %v2171, %v2467
    %v2469 = vpop.f32.mrf.mxu0
    %v2470 = vpop.f32.mrf.mxu0
    %v2471 = vadd.f32 %v2171, %v2470
    %v2472 = vpop.f32.mrf.mxu0
    %2473 = vmatprep.mubr.bf16.mxu0 %v2260
    %2474 = vmatmul.mubr.bf16.gmra.mxu0 %v2259
    %v2475 = vpop.f32.mrf.mxu0
    %v2476 = vadd.f32 %v2171, %v2475
    %v2477 = vpop.f32.mrf.mxu0
    %v2478 = vpop.f32.mrf.mxu0
    %v2479 = vadd.f32 %v2171, %v2478
    %v2480 = vpop.f32.mrf.mxu0
    %2481 = vmatprep.mubr.bf16.mxu0 %v2263
    %2482 = vmatmul.mubr.bf16.gmra.mxu0 %v2262
    %v2483 = vpop.f32.mrf.mxu0
    %v2484 = vadd.f32 %v2171, %v2483
    %v2485 = vpop.f32.mrf.mxu0
    %v2486 = vpop.f32.mrf.mxu0
    %v2487 = vadd.f32 %v2171, %v2486
    %v2488 = vpop.f32.mrf.mxu0
    %2489 = vmatprep.mubr.bf16.mxu0 %v2266
    %2490 = vmatmul.mubr.bf16.gmra.mxu0 %v2265
    %v2491 = vpop.f32.mrf.mxu0
    %v2492 = vadd.f32 %v2171, %v2491
    %v2493 = vpop.f32.mrf.mxu0
    %v2494 = vpop.f32.mrf.mxu0
    %v2495 = vadd.f32 %v2171, %v2494
    %v2496 = vpop.f32.mrf.mxu0
    %2497 = vmatprep.mubr.bf16.mxu0 %v2269
    %2498 = vmatmul.mubr.bf16.gmra.mxu0 %v2268
    %v2499 = vpop.f32.mrf.mxu0
    %v2500 = vadd.f32 %v2171, %v2499
    %v2501 = vpop.f32.mrf.mxu0
    %v2502 = vpop.f32.mrf.mxu0
    %v2503 = vadd.f32 %v2171, %v2502
    %v2504 = vpop.f32.mrf.mxu0
    %2505 = vmatprep.mubr.bf16.mxu0 %v2272
    %2506 = vmatmul.mubr.bf16.gmra.mxu0 %v2271
    %v2507 = vpop.f32.mrf.mxu0
    %v2508 = vadd.f32 %v2171, %v2507
    %v2509 = vpop.f32.mrf.mxu0
    %v2510 = vpop.f32.mrf.mxu0
    %v2511 = vadd.f32 %v2171, %v2510
    %v2512 = vpop.f32.mrf.mxu0
    %2513 = vmatprep.mubr.bf16.mxu0 %v2275
    %2514 = vmatmul.mubr.bf16.gmra.mxu0 %v2274
    %v2515 = vpop.f32.mrf.mxu0
    %v2516 = vadd.f32 %v2171, %v2515
    %v2517 = vpop.f32.mrf.mxu0
    %v2518 = vpop.f32.mrf.mxu0
    %v2519 = vadd.f32 %v2171, %v2518
    %v2520 = vpop.f32.mrf.mxu0
    %2521 = vdwg.mxu0
    %2522 = vmatprep.subr.bf16.mxu0 0
    %2523 = vmatpush1.bf16.msra.mxu0 0
    %2524 = vmatprep.subr.bf16.mxu0 0
    %2525 = vmatpush1.bf16.msra.mxu0 0
    %2526 = vmatprep.subr.bf16.mxu0 0
    %2527 = vmatpush1.bf16.msra.mxu0 0
    %2528 = vmatprep.subr.bf16.mxu0 0
    %2529 = vmatpush1.bf16.msra.mxu0 0
    %2530 = vmatprep.subr.bf16.mxu0 0
    %2531 = vmatpush1.bf16.msra.mxu0 0
    %2532 = vmatprep.subr.bf16.mxu0 0
    %2533 = vmatpush1.bf16.msra.mxu0 0
    %2534 = vmatprep.subr.bf16.mxu0 0
    %2535 = vmatpush1.bf16.msra.mxu0 %v2382
    %2536 = vmatprep.subr.bf16.mxu0 0
    %2537 = vmatpush1.bf16.msra.mxu0 %v2381
    %2538 = vmatprep.subr.bf16.mxu0 0
    %2539 = vmatpush2.bf16.msra.mxu0 0
    %2540 = vmatprep.subr.bf16.mxu0 0
    %2541 = vmatpush2.bf16.msra.mxu0 0
    %2542 = vmatprep.subr.bf16.mxu0 0
    %2543 = vmatpush2.bf16.msra.mxu0 0
    %2544 = vmatprep.subr.bf16.mxu0 0
    %2545 = vmatpush2.bf16.msra.mxu0 0
    %2546 = vmatprep.subr.bf16.mxu0 0
    %2547 = vmatpush2.bf16.msra.mxu0 0
    %2548 = vmatprep.subr.bf16.mxu0 0
    %2549 = vmatpush2.bf16.msra.mxu0 0
    %2550 = vmatprep.subr.bf16.mxu0 0
    %2551 = vmatpush2.bf16.msra.mxu0 0
    %2552 = vmatprep.subr.bf16.mxu0 0
    %2553 = vmatpush2.bf16.msra.mxu0 0
    %2554 = vmatprep.mubr.bf16.mxu0 0
    %2555 = vmatmul.mubr.bf16.gmra.mxu0 %v2402
    %v2556 = vpop.f32.mrf.mxu0
    %v2557 = vadd.f32 %v2460, %v2556
    %v2558 = vpop.f32.mrf.mxu0
    %v2559 = vpop.f32.mrf.mxu0
    %v2560 = vadd.f32 %v2463, %v2559
    %v2561 = vpop.f32.mrf.mxu0
    %2562 = vmatprep.mubr.bf16.mxu0 0
    %2563 = vmatmul.mubr.bf16.gmra.mxu0 %v2405
    %v2564 = vpop.f32.mrf.mxu0
    %v2565 = vadd.f32 %v2468, %v2564
    %v2566 = vpop.f32.mrf.mxu0
    %v2567 = vpop.f32.mrf.mxu0
    %v2568 = vadd.f32 %v2471, %v2567
    %v2569 = vpop.f32.mrf.mxu0
    %2570 = vmatprep.mubr.bf16.mxu0 0
    %2571 = vmatmul.mubr.bf16.gmra.mxu0 %v2408
    %v2572 = vpop.f32.mrf.mxu0
    %v2573 = vadd.f32 %v2476, %v2572
    %v2574 = vpop.f32.mrf.mxu0
    %v2575 = vpop.f32.mrf.mxu0
    %v2576 = vadd.f32 %v2479, %v2575
    %v2577 = vpop.f32.mrf.mxu0
    %2578 = vmatprep.mubr.bf16.mxu0 0
    %2579 = vmatmul.mubr.bf16.gmra.mxu0 %v2411
    %v2580 = vpop.f32.mrf.mxu0
    %v2581 = vadd.f32 %v2484, %v2580
    %v2582 = vpop.f32.mrf.mxu0
    %v2583 = vpop.f32.mrf.mxu0
    %v2584 = vadd.f32 %v2487, %v2583
    %v2585 = vpop.f32.mrf.mxu0
    %2586 = vmatprep.mubr.bf16.mxu0 0
    %2587 = vmatmul.mubr.bf16.gmra.mxu0 %v2414
    %v2588 = vpop.f32.mrf.mxu0
    %v2589 = vadd.f32 %v2492, %v2588
    %v2590 = vpop.f32.mrf.mxu0
    %v2591 = vpop.f32.mrf.mxu0
    %v2592 = vadd.f32 %v2495, %v2591
    %v2593 = vpop.f32.mrf.mxu0
    %2594 = vmatprep.mubr.bf16.mxu0 0
    %2595 = vmatmul.mubr.bf16.gmra.mxu0 %v2417
    %v2596 = vpop.f32.mrf.mxu0
    %v2597 = vadd.f32 %v2500, %v2596
    %v2598 = vpop.f32.mrf.mxu0
    %v2599 = vpop.f32.mrf.mxu0
    %v2600 = vadd.f32 %v2503, %v2599
    %v2601 = vpop.f32.mrf.mxu0
    %2602 = vmatprep.mubr.bf16.mxu0 0
    %2603 = vmatmul.mubr.bf16.gmra.mxu0 %v2420
    %v2604 = vpop.f32.mrf.mxu0
    %v2605 = vadd.f32 %v2508, %v2604
    %v2606 = vpop.f32.mrf.mxu0
    %v2607 = vpop.f32.mrf.mxu0
    %v2608 = vadd.f32 %v2511, %v2607
    %v2609 = vpop.f32.mrf.mxu0
    %2610 = vmatprep.mubr.bf16.mxu0 0
    %2611 = vmatmul.mubr.bf16.gmra.mxu0 %v2423
    %v2612 = vpop.f32.mrf.mxu0
    %v2613 = vadd.f32 %v2516, %v2612
    %v2614 = vpop.f32.mrf.mxu0
    %v2615 = vpop.f32.mrf.mxu0
    %v2616 = vadd.f32 %v2519, %v2615
    %v2617 = vpop.f32.mrf.mxu0
    %2618 = vdwg.mxu0
    %v2619 = vmax.f32 %v2557, 0.0
    %v2620 = vmax.f32 %v2560, 0.0
    %v2621 = vmax.f32 %v2565, 0.0
    %v2622 = vmax.f32 %v2568, 0.0
    %v2623 = vmax.f32 %v2573, 0.0
    %v2624 = vmax.f32 %v2576, 0.0
    %v2625 = vmax.f32 %v2581, 0.0
    %v2626 = vmax.f32 %v2584, 0.0
    %v2627 = vmax.f32 %v2589, 0.0
    %v2628 = vmax.f32 %v2592, 0.0
    %v2629 = vmax.f32 %v2597, 0.0
    %v2630 = vmax.f32 %v2600, 0.0
    %v2631 = vmax.f32 %v2605, 0.0
    %v2632 = vmax.f32 %v2608, 0.0
    %v2633 = vmax.f32 %v2613, 0.0
    %v2634 = vmax.f32 %v2616, 0.0
    %vm2635 = vcmask 523264
    %v2636 = vsel %vm2635, %v2619, -inf
    %v2637 = vsel %vm2635, %v2620, -inf
    %v2638 = vmax.f32 %v2636, %v2637
    %v2639 = vsel %vm2635, %v2621, -inf
    %v2640 = vsel %vm2635, %v2622, -inf
    %v2641 = vmax.f32 %v2639, %v2640
    %v2642 = vsel %vm2635, %v2623, -inf
    %v2643 = vsel %vm2635, %v2624, -inf
    %v2644 = vmax.f32 %v2642, %v2643
    %v2645 = vsel %vm2635, %v2625, -inf
    %v2646 = vsel %vm2635, %v2626, -inf
    %v2647 = vmax.f32 %v2645, %v2646
    %v2648 = vsel %vm2635, %v2627, -inf
    %v2649 = vsel %vm2635, %v2628, -inf
    %v2650 = vmax.f32 %v2648, %v2649
    %v2651 = vsel %vm2635, %v2629, -inf
    %v2652 = vsel %vm2635, %v2630, -inf
    %v2653 = vmax.f32 %v2651, %v2652
    %v2654 = vsel %vm2635, %v2631, -inf
    %v2655 = vsel %vm2635, %v2632, -inf
    %v2656 = vmax.f32 %v2654, %v2655
    %v2657 = vsel %vm2635, %v2633, -inf
    %v2658 = vsel %vm2635, %v2634, -inf
    %v2659 = vmax.f32 %v2657, %v2658
    %2660 = vst.msk [vmem:[#allocation5] sm:$0xff] %vm2635, %v2638
    %2661 = vst.msk [vmem:[#allocation5 + $0x8] sm:$0xff] %vm2635, %v2641
    %2662 = vst.msk [vmem:[#allocation5 + $0x10] sm:$0xff] %vm2635, %v2644
    %2663 = vst.msk [vmem:[#allocation5 + $0x18] sm:$0xff] %vm2635, %v2647
    %2664 = vst.msk [vmem:[#allocation5 + $0x20] sm:$0xff] %vm2635, %v2650
    %2665 = vst.msk [vmem:[#allocation5 + $0x28] sm:$0xff] %vm2635, %v2653
    %2666 = vst.msk [vmem:[#allocation5 + $0x30] sm:$0xff] %vm2635, %v2656
    %2667 = vst.msk [vmem:[#allocation5 + $0x38] sm:$0xff] %vm2635, %v2659
    %v2668 = vld [vmem:[#allocation5] ss:$2 sm:$0xf]
    %s2669 = scalar_lea.vmem [#allocation5], 8
    %v2670 = vld [vmem:[%s2669] ss:$2 sm:$0xf]
    %s2671 = scalar_lea.vmem [#allocation5], 16
    %v2672 = vld [vmem:[%s2671] ss:$2 sm:$0xf]
    %s2673 = scalar_lea.vmem [#allocation5], 24
    %v2674 = vld [vmem:[%s2673] ss:$2 sm:$0xf]
    %s2675 = scalar_lea.vmem [#allocation5], 32
    %v2676 = vld [vmem:[%s2675] ss:$2 sm:$0xf]
    %s2677 = scalar_lea.vmem [#allocation5], 40
    %v2678 = vld [vmem:[%s2677] ss:$2 sm:$0xf]
    %s2679 = scalar_lea.vmem [#allocation5], 48
    %v2680 = vld [vmem:[%s2679] ss:$2 sm:$0xf]
    %s2681 = scalar_lea.vmem [#allocation5], 56
    %v2682 = vld [vmem:[%s2681] ss:$2 sm:$0xf]
    %s2683 = scalar_lea.vmem [#allocation5], 1
    %v2684 = vld [vmem:[%s2683] ss:$2 sm:$0xf]
    %s2685 = scalar_lea.vmem [#allocation5], 9
    %v2686 = vld [vmem:[%s2685] ss:$2 sm:$0xf]
    %s2687 = scalar_lea.vmem [#allocation5], 17
    %v2688 = vld [vmem:[%s2687] ss:$2 sm:$0xf]
    %s2689 = scalar_lea.vmem [#allocation5], 25
    %v2690 = vld [vmem:[%s2689] ss:$2 sm:$0xf]
    %s2691 = scalar_lea.vmem [#allocation5], 33
    %v2692 = vld [vmem:[%s2691] ss:$2 sm:$0xf]
    %s2693 = scalar_lea.vmem [#allocation5], 41
    %v2694 = vld [vmem:[%s2693] ss:$2 sm:$0xf]
    %s2695 = scalar_lea.vmem [#allocation5], 49
    %v2696 = vld [vmem:[%s2695] ss:$2 sm:$0xf]
    %s2697 = scalar_lea.vmem [#allocation5], 57
    %v2698 = vld [vmem:[%s2697] ss:$2 sm:$0xf]
    %v2699 = vmax.f32 %v2668, %v2684
    %v2700 = vmax.f32 %v2670, %v2686
    %v2701 = vmax.f32 %v2672, %v2688
    %v2702 = vmax.f32 %v2674, %v2690
    %v2703 = vmax.f32 %v2676, %v2692
    %v2704 = vmax.f32 %v2678, %v2694
    %v2705 = vmax.f32 %v2680, %v2696
    %v2706 = vmax.f32 %v2682, %v2698
    %s2707 = scalar_lea.vmem [#allocation6], 8
    %vm2708 = vcmask 519168
    %2709 = vst.msk [vmem:[%s2707 + $0x1] sm:$0xf] %vm2708, %v2699
    %2710 = vst.msk [vmem:[%s2707 + $0x9] sm:$0xf] %vm2708, %v2700
    %2711 = vst.msk [vmem:[%s2707 + $0x11] sm:$0xf] %vm2708, %v2701
    %2712 = vst.msk [vmem:[%s2707 + $0x19] sm:$0xf] %vm2708, %v2702
    %2713 = vst.msk [vmem:[%s2707 + $0x31] sm:$0xf] %vm2708, %v2703
    %2714 = vst.msk [vmem:[%s2707 + $0x39] sm:$0xf] %vm2708, %v2704
    %2715 = vst.msk [vmem:[%s2707 + $0x41] sm:$0xf] %vm2708, %v2705
    %2716 = vst.msk [vmem:[%s2707 + $0x49] sm:$0xf] %vm2708, %v2706
    %v2717 = vld [vmem:[#allocation6] sm:$0xf]
    %v2718 = vld [vmem:[#allocation6 + $0x8] sm:$0xf]
    %v2719 = vld [vmem:[#allocation6 + $0x10] sm:$0xf]
    %v2720 = vld [vmem:[#allocation6 + $0x18] sm:$0xf]
    %v2721 = vld [vmem:[#allocation6 + $0x30] sm:$0xf]
    %v2722 = vld [vmem:[#allocation6 + $0x38] sm:$0xf]
    %v2723 = vld [vmem:[#allocation6 + $0x40] sm:$0xf]
    %v2724 = vld [vmem:[#allocation6 + $0x48] sm:$0xf]
    %v2733 = vcombine.low %v2717, %v2718
    %v2734 = vcombine.low %v2719, %v2720
    %v2735 = vcombine.low %v2721, %v2722
    %v2736 = vcombine.low %v2723, %v2724
    %v2741 = vpack.c.bf16 %v2734, %v2733
    %v2742 = vpack.c.bf16 %v2736, %v2735
    %v2745 = vunpack.c.l.b16 %v2741
    %v2746 = vunpack.c.h.b16 %v2741
    %v2747 = vunpack.c.l.b16 %v2742
    %v2748 = vunpack.c.h.b16 %v2742
    %v2749 = vpack.c.b16 %v2745, %v2745
    %v2750 = vpack.c.b16 %v2746, %v2746
    %v2751 = vpack.c.b16 %v2747, %v2747
    %v2752 = vpack.c.b16 %v2748, %v2748
    %2757 = vst.msk [vmem:[#allocation7] sm:$0xf] %vm2708, %v2749
    %2758 = vst.msk [vmem:[#allocation7 + $0x14] sm:$0xf] %vm2708, %v2750
    %2759 = vst.msk [vmem:[#allocation7 + $0x28] sm:$0xf] %vm2708, %v2751
    %2760 = vst.msk [vmem:[#allocation7 + $0x3c] sm:$0xf] %vm2708, %v2752
    %v2761 = vld [vmem:[#allocation6 + $0x1] sm:$0xf]
    %v2762 = vld [vmem:[#allocation6 + $0x9] sm:$0xf]
    %v2763 = vld [vmem:[#allocation6 + $0x11] sm:$0xf]
    %v2764 = vld [vmem:[#allocation6 + $0x19] sm:$0xf]
    %v2765 = vld [vmem:[#allocation6 + $0x31] sm:$0xf]
    %v2766 = vld [vmem:[#allocation6 + $0x39] sm:$0xf]
    %v2767 = vld [vmem:[#allocation6 + $0x41] sm:$0xf]
    %v2768 = vld [vmem:[#allocation6 + $0x49] sm:$0xf]
    %v2777 = vcombine.low %v2761, %v2762
    %v2778 = vcombine.low %v2763, %v2764
    %v2779 = vcombine.low %v2765, %v2766
    %v2780 = vcombine.low %v2767, %v2768
    %v2785 = vpack.c.bf16 %v2778, %v2777
    %v2786 = vpack.c.bf16 %v2780, %v2779
    %v2789 = vunpack.c.l.b16 %v2785
    %v2790 = vunpack.c.h.b16 %v2785
    %v2791 = vunpack.c.l.b16 %v2786
    %v2792 = vunpack.c.h.b16 %v2786
    %v2793 = vpack.c.b16 %v2789, %v2789
    %v2794 = vpack.c.b16 %v2790, %v2790
    %v2795 = vpack.c.b16 %v2791, %v2791
    %v2796 = vpack.c.b16 %v2792, %v2792
    %2797 = vrot.lane.b32.xlu0 %v2793, 64
    %v2798 = vpop.permute.xlu0 %2797
    %2799 = vrot.lane.b32.xlu0 %v2794, 64
    %v2800 = vpop.permute.xlu0 %2799
    %2801 = vrot.lane.b32.xlu0 %v2795, 64
    %v2802 = vpop.permute.xlu0 %2801
    %2803 = vrot.lane.b32.xlu0 %v2796, 64
    %v2804 = vpop.permute.xlu0 %2803
    %vm2809 = vcmask 1043968
    %2810 = vst.msk [vmem:[#allocation7] sm:$0xf] %vm2809, %v2798
    %2811 = vst.msk [vmem:[#allocation7 + $0x14] sm:$0xf] %vm2809, %v2800
    %2812 = vst.msk [vmem:[#allocation7 + $0x28] sm:$0xf] %vm2809, %v2802
    %2813 = vst.msk [vmem:[#allocation7 + $0x3c] sm:$0xf] %vm2809, %v2804
    %v2814 = vld [vmem:[#allocation6 + $0x2] sm:$0xf]
    %v2815 = vld [vmem:[#allocation6 + $0xa] sm:$0xf]
    %v2816 = vld [vmem:[#allocation6 + $0x12] sm:$0xf]
    %v2817 = vld [vmem:[#allocation6 + $0x1a] sm:$0xf]
    %v2818 = vld [vmem:[#allocation6 + $0x32] sm:$0xf]
    %v2819 = vld [vmem:[#allocation6 + $0x3a] sm:$0xf]
    %v2820 = vld [vmem:[#allocation6 + $0x42] sm:$0xf]
    %v2821 = vld [vmem:[#allocation6 + $0x4a] sm:$0xf]
    %v2830 = vcombine.low %v2814, %v2815
    %v2831 = vcombine.low %v2816, %v2817
    %v2832 = vcombine.low %v2818, %v2819
    %v2833 = vcombine.low %v2820, %v2821
    %v2838 = vpack.c.bf16 %v2831, %v2830
    %v2839 = vpack.c.bf16 %v2833, %v2832
    %v2842 = vunpack.c.l.b16 %v2838
    %v2843 = vunpack.c.h.b16 %v2838
    %v2844 = vunpack.c.l.b16 %v2839
    %v2845 = vunpack.c.h.b16 %v2839
    %v2846 = vpack.c.b16 %v2842, %v2842
    %v2847 = vpack.c.b16 %v2843, %v2843
    %v2848 = vpack.c.b16 %v2844, %v2844
    %v2849 = vpack.c.b16 %v2845, %v2845
    %2854 = vst.msk [vmem:[#allocation7 + $0x4] sm:$0xf] %vm2708, %v2846
    %2855 = vst.msk [vmem:[#allocation7 + $0x18] sm:$0xf] %vm2708, %v2847
    %2856 = vst.msk [vmem:[#allocation7 + $0x2c] sm:$0xf] %vm2708, %v2848
    %2857 = vst.msk [vmem:[#allocation7 + $0x40] sm:$0xf] %vm2708, %v2849
    %v2858 = vld [vmem:[%s2707] sm:$0xf]
    %v2859 = vld [vmem:[%s2707 + $0x8] sm:$0xf]
    %v2860 = vld [vmem:[%s2707 + $0x10] sm:$0xf]
    %v2861 = vld [vmem:[%s2707 + $0x18] sm:$0xf]
    %v2862 = vld [vmem:[%s2707 + $0x30] sm:$0xf]
    %v2863 = vld [vmem:[%s2707 + $0x38] sm:$0xf]
    %v2864 = vld [vmem:[%s2707 + $0x40] sm:$0xf]
    %v2865 = vld [vmem:[%s2707 + $0x48] sm:$0xf]
    %v2874 = vcombine.low %v2858, %v2859
    %v2875 = vcombine.low %v2860, %v2861
    %v2876 = vcombine.low %v2862, %v2863
    %v2877 = vcombine.low %v2864, %v2865
    %v2882 = vpack.c.bf16 %v2875, %v2874
    %v2883 = vpack.c.bf16 %v2877, %v2876
    %v2886 = vunpack.c.l.b16 %v2882
    %v2887 = vunpack.c.h.b16 %v2882
    %v2888 = vunpack.c.l.b16 %v2883
    %v2889 = vunpack.c.h.b16 %v2883
    %v2890 = vpack.c.b16 %v2886, %v2886
    %v2891 = vpack.c.b16 %v2887, %v2887
    %v2892 = vpack.c.b16 %v2888, %v2888
    %v2893 = vpack.c.b16 %v2889, %v2889
    %2894 = vrot.lane.b32.xlu0 %v2890, 64
    %v2895 = vpop.permute.xlu0 %2894
    %2896 = vrot.lane.b32.xlu0 %v2891, 64
    %v2897 = vpop.permute.xlu0 %2896
    %2898 = vrot.lane.b32.xlu0 %v2892, 64
    %v2899 = vpop.permute.xlu0 %2898
    %2900 = vrot.lane.b32.xlu0 %v2893, 64
    %v2901 = vpop.permute.xlu0 %2900
    %2906 = vst.msk [vmem:[#allocation7 + $0x4] sm:$0xf] %vm2809, %v2895
    %2907 = vst.msk [vmem:[#allocation7 + $0x18] sm:$0xf] %vm2809, %v2897
    %2908 = vst.msk [vmem:[#allocation7 + $0x2c] sm:$0xf] %vm2809, %v2899
    %2909 = vst.msk [vmem:[#allocation7 + $0x40] sm:$0xf] %vm2809, %v2901
    %v2910 = vld [vmem:[%s2707 + $0x1] sm:$0xf]
    %v2911 = vld [vmem:[%s2707 + $0x9] sm:$0xf]
    %v2912 = vld [vmem:[%s2707 + $0x11] sm:$0xf]
    %v2913 = vld [vmem:[%s2707 + $0x19] sm:$0xf]
    %v2914 = vld [vmem:[%s2707 + $0x31] sm:$0xf]
    %v2915 = vld [vmem:[%s2707 + $0x39] sm:$0xf]
    %v2916 = vld [vmem:[%s2707 + $0x41] sm:$0xf]
    %v2917 = vld [vmem:[%s2707 + $0x49] sm:$0xf]
    %v2926 = vcombine.low %v2910, %v2911
    %v2927 = vcombine.low %v2912, %v2913
    %v2928 = vcombine.low %v2914, %v2915
    %v2929 = vcombine.low %v2916, %v2917
    %v2934 = vpack.c.bf16 %v2927, %v2926
    %v2935 = vpack.c.bf16 %v2929, %v2928
    %v2938 = vunpack.c.l.b16 %v2934
    %v2939 = vunpack.c.h.b16 %v2934
    %v2940 = vunpack.c.l.b16 %v2935
    %v2941 = vunpack.c.h.b16 %v2935
    %v2942 = vpack.c.b16 %v2938, %v2938
    %v2943 = vpack.c.b16 %v2939, %v2939
    %v2944 = vpack.c.b16 %v2940, %v2940
    %v2945 = vpack.c.b16 %v2941, %v2941
    %2950 = vst.msk [vmem:[#allocation7 + $0x8] sm:$0xf] %vm2708, %v2942
    %2951 = vst.msk [vmem:[#allocation7 + $0x1c] sm:$0xf] %vm2708, %v2943
    %2952 = vst.msk [vmem:[#allocation7 + $0x30] sm:$0xf] %vm2708, %v2944
    %2953 = vst.msk [vmem:[#allocation7 + $0x44] sm:$0xf] %vm2708, %v2945
    %v2954 = vld [vmem:[%s2707 + $0x2] sm:$0xf]
    %v2955 = vld [vmem:[%s2707 + $0xa] sm:$0xf]
    %v2956 = vld [vmem:[%s2707 + $0x12] sm:$0xf]
    %v2957 = vld [vmem:[%s2707 + $0x1a] sm:$0xf]
    %v2958 = vld [vmem:[%s2707 + $0x32] sm:$0xf]
    %v2959 = vld [vmem:[%s2707 + $0x3a] sm:$0xf]
    %v2960 = vld [vmem:[%s2707 + $0x42] sm:$0xf]
    %v2961 = vld [vmem:[%s2707 + $0x4a] sm:$0xf]
    %v2970 = vcombine.low %v2954, %v2955
    %v2971 = vcombine.low %v2956, %v2957
    %v2972 = vcombine.low %v2958, %v2959
    %v2973 = vcombine.low %v2960, %v2961
    %v2978 = vpack.c.bf16 %v2971, %v2970
    %v2979 = vpack.c.bf16 %v2973, %v2972
    %v2982 = vunpack.c.l.b16 %v2978
    %v2983 = vunpack.c.h.b16 %v2978
    %v2984 = vunpack.c.l.b16 %v2979
    %v2985 = vunpack.c.h.b16 %v2979
    %v2986 = vpack.c.b16 %v2982, %v2982
    %v2987 = vpack.c.b16 %v2983, %v2983
    %v2988 = vpack.c.b16 %v2984, %v2984
    %v2989 = vpack.c.b16 %v2985, %v2985
    %2990 = vrot.lane.b32.xlu0 %v2986, 64
    %v2991 = vpop.permute.xlu0 %2990
    %2992 = vrot.lane.b32.xlu0 %v2987, 64
    %v2993 = vpop.permute.xlu0 %2992
    %2994 = vrot.lane.b32.xlu0 %v2988, 64
    %v2995 = vpop.permute.xlu0 %2994
    %2996 = vrot.lane.b32.xlu0 %v2989, 64
    %v2997 = vpop.permute.xlu0 %2996
    %3002 = vst.msk [vmem:[#allocation7 + $0x8] sm:$0xf] %vm2809, %v2991
    %3003 = vst.msk [vmem:[#allocation7 + $0x1c] sm:$0xf] %vm2809, %v2993
    %3004 = vst.msk [vmem:[#allocation7 + $0x30] sm:$0xf] %vm2809, %v2995
    %3005 = vst.msk [vmem:[#allocation7 + $0x44] sm:$0xf] %vm2809, %v2997
    %s3006 = scalar_lea.vmem [#allocation6], 16
    %v3007 = vld [vmem:[%s3006] sm:$0xf]
    %v3008 = vld [vmem:[%s3006 + $0x8] sm:$0xf]
    %v3009 = vld [vmem:[%s3006 + $0x10] sm:$0xf]
    %v3010 = vld [vmem:[%s3006 + $0x18] sm:$0xf]
    %v3011 = vld [vmem:[%s3006 + $0x30] sm:$0xf]
    %v3012 = vld [vmem:[%s3006 + $0x38] sm:$0xf]
    %v3013 = vld [vmem:[%s3006 + $0x40] sm:$0xf]
    %v3014 = vld [vmem:[%s3006 + $0x48] sm:$0xf]
    %v3023 = vcombine.low %v3007, %v3008
    %v3024 = vcombine.low %v3009, %v3010
    %v3025 = vcombine.low %v3011, %v3012
    %v3026 = vcombine.low %v3013, %v3014
    %v3031 = vpack.c.bf16 %v3024, %v3023
    %v3032 = vpack.c.bf16 %v3026, %v3025
    %v3035 = vunpack.c.l.b16 %v3031
    %v3036 = vunpack.c.h.b16 %v3031
    %v3037 = vunpack.c.l.b16 %v3032
    %v3038 = vunpack.c.h.b16 %v3032
    %v3039 = vpack.c.b16 %v3035, %v3035
    %v3040 = vpack.c.b16 %v3036, %v3036
    %v3041 = vpack.c.b16 %v3037, %v3037
    %v3042 = vpack.c.b16 %v3038, %v3038
    %3047 = vst.msk [vmem:[#allocation7 + $0xc] sm:$0xf] %vm2708, %v3039
    %3048 = vst.msk [vmem:[#allocation7 + $0x20] sm:$0xf] %vm2708, %v3040
    %3049 = vst.msk [vmem:[#allocation7 + $0x34] sm:$0xf] %vm2708, %v3041
    %3050 = vst.msk [vmem:[#allocation7 + $0x48] sm:$0xf] %vm2708, %v3042
    %v3051 = vld [vmem:[%s3006 + $0x1] sm:$0xf]
    %v3052 = vld [vmem:[%s3006 + $0x9] sm:$0xf]
    %v3053 = vld [vmem:[%s3006 + $0x11] sm:$0xf]
    %v3054 = vld [vmem:[%s3006 + $0x19] sm:$0xf]
    %v3055 = vld [vmem:[%s3006 + $0x31] sm:$0xf]
    %v3056 = vld [vmem:[%s3006 + $0x39] sm:$0xf]
    %v3057 = vld [vmem:[%s3006 + $0x41] sm:$0xf]
    %v3058 = vld [vmem:[%s3006 + $0x49] sm:$0xf]
    %v3067 = vcombine.low %v3051, %v3052
    %v3068 = vcombine.low %v3053, %v3054
    %v3069 = vcombine.low %v3055, %v3056
    %v3070 = vcombine.low %v3057, %v3058
    %v3075 = vpack.c.bf16 %v3068, %v3067
    %v3076 = vpack.c.bf16 %v3070, %v3069
    %v3079 = vunpack.c.l.b16 %v3075
    %v3080 = vunpack.c.h.b16 %v3075
    %v3081 = vunpack.c.l.b16 %v3076
    %v3082 = vunpack.c.h.b16 %v3076
    %v3083 = vpack.c.b16 %v3079, %v3079
    %v3084 = vpack.c.b16 %v3080, %v3080
    %v3085 = vpack.c.b16 %v3081, %v3081
    %v3086 = vpack.c.b16 %v3082, %v3082
    %3087 = vrot.lane.b32.xlu0 %v3083, 64
    %v3088 = vpop.permute.xlu0 %3087
    %3089 = vrot.lane.b32.xlu0 %v3084, 64
    %v3090 = vpop.permute.xlu0 %3089
    %3091 = vrot.lane.b32.xlu0 %v3085, 64
    %v3092 = vpop.permute.xlu0 %3091
    %3093 = vrot.lane.b32.xlu0 %v3086, 64
    %v3094 = vpop.permute.xlu0 %3093
    %3099 = vst.msk [vmem:[#allocation7 + $0xc] sm:$0xf] %vm2809, %v3088
    %3100 = vst.msk [vmem:[#allocation7 + $0x20] sm:$0xf] %vm2809, %v3090
    %3101 = vst.msk [vmem:[#allocation7 + $0x34] sm:$0xf] %vm2809, %v3092
    %3102 = vst.msk [vmem:[#allocation7 + $0x48] sm:$0xf] %vm2809, %v3094
    %v3103 = vld [vmem:[%s3006 + $0x2] sm:$0xf]
    %v3104 = vld [vmem:[%s3006 + $0xa] sm:$0xf]
    %v3105 = vld [vmem:[%s3006 + $0x12] sm:$0xf]
    %v3106 = vld [vmem:[%s3006 + $0x1a] sm:$0xf]
    %v3107 = vld [vmem:[%s3006 + $0x32] sm:$0xf]
    %v3108 = vld [vmem:[%s3006 + $0x3a] sm:$0xf]
    %v3109 = vld [vmem:[%s3006 + $0x42] sm:$0xf]
    %v3110 = vld [vmem:[%s3006 + $0x4a] sm:$0xf]
    %v3119 = vcombine.low %v3103, %v3104
    %v3120 = vcombine.low %v3105, %v3106
    %v3121 = vcombine.low %v3107, %v3108
    %v3122 = vcombine.low %v3109, %v3110
    %v3127 = vpack.c.bf16 %v3120, %v3119
    %v3128 = vpack.c.bf16 %v3122, %v3121
    %v3131 = vunpack.c.l.b16 %v3127
    %v3132 = vunpack.c.h.b16 %v3127
    %v3133 = vunpack.c.l.b16 %v3128
    %v3134 = vunpack.c.h.b16 %v3128
    %v3135 = vpack.c.b16 %v3131, %v3131
    %v3136 = vpack.c.b16 %v3132, %v3132
    %v3137 = vpack.c.b16 %v3133, %v3133
    %v3138 = vpack.c.b16 %v3134, %v3134
    %3143 = vst.msk [vmem:[#allocation7 + $0x10] sm:$0xf] %vm2708, %v3135
    %3144 = vst.msk [vmem:[#allocation7 + $0x24] sm:$0xf] %vm2708, %v3136
    %3145 = vst.msk [vmem:[#allocation7 + $0x38] sm:$0xf] %vm2708, %v3137
    %3146 = vst.msk [vmem:[#allocation7 + $0x4c] sm:$0xf] %vm2708, %v3138
    %v3147 = vld [vmem:[#allocation7] sm:$0xff]
    %v3148 = vld [vmem:[#allocation7 + $0x8] sm:$0xff]
    %v3149 = vld [vmem:[#allocation7 + $0x10] sm:$0xf]
    %v3150 = vld [vmem:[#allocation7 + $0x14] sm:$0xff]
    %v3151 = vld [vmem:[#allocation7 + $0x1c] sm:$0xff]
    %v3152 = vld [vmem:[#allocation7 + $0x24] sm:$0xf]
    %v3153 = vld [vmem:[#allocation7 + $0x28] sm:$0xff]
    %v3154 = vld [vmem:[#allocation7 + $0x30] sm:$0xff]
    %v3155 = vld [vmem:[#allocation7 + $0x38] sm:$0xf]
    %v3156 = vld [vmem:[#allocation7 + $0x3c] sm:$0xff]
    %v3157 = vld [vmem:[#allocation7 + $0x44] sm:$0xff]
    %v3158 = vld [vmem:[#allocation7 + $0x4c] sm:$0xf]
    %v3159 = vld [vmem:[%s5] sm:$0xf]
    %v3160 = vld [vmem:[%s5 + $0x4] sm:$0xf]
    %v3161 = vld [vmem:[%s5 + $0x8] sm:$0xf]
    %v3162 = vld [vmem:[%s5 + $0xc] sm:$0xf]
    %v3163 = vld [vmem:[%s5 + $0x10] sm:$0xf]
    %v3164 = vld [vmem:[%s5 + $0x14] sm:$0xf]
    %v3165 = vld [vmem:[%s5 + $0x18] sm:$0xf]
    %v3166 = vld [vmem:[%s5 + $0x1c] sm:$0xf]
    %v3167 = vld [vmem:[%s5 + $0x20] sm:$0xf]
    %v3168 = vld [vmem:[%s5 + $0x24] sm:$0xf]
    %v3169 = vld [vmem:[%s5 + $0x28] sm:$0xf]
    %v3170 = vld [vmem:[%s5 + $0x2c] sm:$0xf]
    %v3171 = vld [vmem:[%s5 + $0x30] sm:$0xf]
    %v3172 = vld [vmem:[%s5 + $0x34] sm:$0xf]
    %v3173 = vld [vmem:[%s5 + $0x38] sm:$0xf]
    %v3174 = vld [vmem:[%s5 + $0x3c] sm:$0xf]
    %v3175 = vld [vmem:[%s5 + $0x40] sm:$0xf]
    %v3176 = vld [vmem:[%s5 + $0x44] sm:$0xf]
    %v3177 = vld [vmem:[%s5 + $0x48] sm:$0xf]
    %v3178 = vld [vmem:[%s5 + $0x4c] sm:$0xf]
    %v3179 = vld [vmem:[%s5 + $0x50] sm:$0xf]
    %v3180 = vld [vmem:[%s5 + $0x54] sm:$0xf]
    %v3181 = vld [vmem:[%s5 + $0x58] sm:$0xf]
    %v3182 = vld [vmem:[%s5 + $0x5c] sm:$0xf]
    %v3183 = vld [vmem:[%s5 + $0x60] sm:$0xf]
    %v3184 = vld [vmem:[%s5 + $0x64] sm:$0xf]
    %v3185 = vld [vmem:[%s5 + $0x68] sm:$0xf]
    %v3186 = vld [vmem:[%s5 + $0x6c] sm:$0xf]
    %v3187 = vld [vmem:[%s5 + $0x70] sm:$0xf]
    %v3188 = vld [vmem:[%s5 + $0x74] sm:$0xf]
    %v3189 = vld [vmem:[%s5 + $0x78] sm:$0xf]
    %v3190 = vld [vmem:[%s5 + $0x7c] sm:$0xf]
    %v3191 = vld [vmem:[%s5 + $0x80] sm:$0xf]
    %v3192 = vld [vmem:[%s5 + $0x84] sm:$0xf]
    %v3193 = vld [vmem:[%s5 + $0x88] sm:$0xf]
    %v3194 = vld [vmem:[%s5 + $0x8c] sm:$0xf]
    %v3195 = vld [vmem:[%s5 + $0x90] sm:$0xf]
    %v3196 = vld [vmem:[%s5 + $0x94] sm:$0xf]
    %v3197 = vld [vmem:[%s5 + $0x98] sm:$0xf]
    %v3198 = vld [vmem:[%s5 + $0x9c] sm:$0xf]
    %v3199 = vld [vmem:[%s5 + $0xa0] sm:$0xf]
    %v3200 = vld [vmem:[%s5 + $0xa4] sm:$0xf]
    %v3201 = vld [vmem:[%s5 + $0xa8] sm:$0xf]
    %v3202 = vld [vmem:[%s5 + $0xac] sm:$0xf]
    %v3203 = vld [vmem:[%s5 + $0xb0] sm:$0xf]
    %v3204 = vld [vmem:[%s5 + $0xb4] sm:$0xf]
    %v3205 = vld [vmem:[%s5 + $0xb8] sm:$0xf]
    %v3206 = vld [vmem:[%s5 + $0xbc] sm:$0xf]
    %v3207 = vld [vmem:[%s5 + $0xc0] sm:$0xf]
    %v3208 = vld [vmem:[%s5 + $0xc4] sm:$0xf]
    %v3209 = vld [vmem:[%s5 + $0xc8] sm:$0xf]
    %v3210 = vld [vmem:[%s5 + $0xcc] sm:$0xf]
    %v3211 = vld [vmem:[%s5 + $0xd0] sm:$0xf]
    %v3212 = vld [vmem:[%s5 + $0xd4] sm:$0xf]
    %v3213 = vld [vmem:[%s5 + $0xd8] sm:$0xf]
    %v3214 = vld [vmem:[%s5 + $0xdc] sm:$0xf]
    %v3215 = vld [vmem:[%s5 + $0xe0] sm:$0xf]
    %v3216 = vld [vmem:[%s5 + $0xe4] sm:$0xf]
    %v3217 = vld [vmem:[%s5 + $0xe8] sm:$0xf]
    %v3218 = vld [vmem:[%s5 + $0xec] sm:$0xf]
    %v3219 = vld [vmem:[%s5 + $0xf0] sm:$0xf]
    %v3220 = vld [vmem:[%s5 + $0xf4] sm:$0xf]
    %v3221 = vld [vmem:[%s5 + $0xf8] sm:$0xf]
    %v3222 = vld [vmem:[%s5 + $0xfc] sm:$0xf]
    %v3223 = vld [vmem:[%s5 + $0x100] sm:$0xf]
    %v3224 = vld [vmem:[%s5 + $0x104] sm:$0xf]
    %v3225 = vld [vmem:[%s5 + $0x108] sm:$0xf]
    %v3226 = vld [vmem:[%s5 + $0x10c] sm:$0xf]
    %v3227 = vld [vmem:[%s5 + $0x110] sm:$0xf]
    %v3228 = vld [vmem:[%s5 + $0x114] sm:$0xf]
    %v3229 = vld [vmem:[%s5 + $0x118] sm:$0xf]
    %v3230 = vld [vmem:[%s5 + $0x11c] sm:$0xf]
    %v3231 = vld [vmem:[%s6] sm:$0x1]
    %v3233 = vlaneseq
    %v3234 = vshrl.u32 %v3233, 7
    %v3235 = vsub.s32 0, %v3234
    %v3236 = vrot.slane %v3231, %v3235
    %v3250 = vunpack.c.l.b16 %v3147
    %v3251 = vunpack.c.h.b16 %v3147
    %v3252 = vunpack.c.l.b16 %v3148
    %v3253 = vunpack.c.h.b16 %v3148
    %v3254 = vunpack.c.l.b16 %v3149
    %v3255 = vunpack.c.l.b16 %v3150
    %v3256 = vunpack.c.h.b16 %v3150
    %v3257 = vunpack.c.l.b16 %v3151
    %v3258 = vunpack.c.h.b16 %v3151
    %v3259 = vunpack.c.l.b16 %v3152
    %v3260 = vunpack.c.l.b16 %v3153
    %v3261 = vunpack.c.h.b16 %v3153
    %v3262 = vunpack.c.l.b16 %v3154
    %v3263 = vunpack.c.h.b16 %v3154
    %v3264 = vunpack.c.l.b16 %v3155
    %v3265 = vunpack.c.l.b16 %v3156
    %v3266 = vunpack.c.h.b16 %v3156
    %v3267 = vunpack.c.l.b16 %v3157
    %v3268 = vunpack.c.h.b16 %v3157
    %v3269 = vunpack.c.l.b16 %v3158
    %v3270 = vpack.c.b16 %v3255, %v3250
    %v3271 = vpack.c.b16 %v3256, %v3251
    %v3272 = vpack.c.b16 %v3257, %v3252
    %v3273 = vpack.c.b16 %v3258, %v3253
    %v3274 = vpack.c.b16 %v3259, %v3254
    %v3275 = vpack.c.b16 %v3265, %v3260
    %v3276 = vpack.c.b16 %v3266, %v3261
    %v3277 = vpack.c.b16 %v3267, %v3262
    %v3278 = vpack.c.b16 %v3268, %v3263
    %v3279 = vpack.c.b16 %v3269, %v3264
    %v3360 = vunpack.c.l.b16 %v3159
    %v3361 = vunpack.c.l.b16 %v3160
    %v3362 = vunpack.c.l.b16 %v3161
    %v3363 = vunpack.c.l.b16 %v3162
    %v3364 = vunpack.c.l.b16 %v3163
    %v3365 = vunpack.c.l.b16 %v3164
    %v3366 = vunpack.c.l.b16 %v3165
    %v3367 = vunpack.c.l.b16 %v3166
    %v3368 = vunpack.c.l.b16 %v3167
    %v3369 = vunpack.c.l.b16 %v3168
    %v3370 = vunpack.c.l.b16 %v3169
    %v3371 = vunpack.c.l.b16 %v3170
    %v3372 = vunpack.c.l.b16 %v3171
    %v3373 = vunpack.c.l.b16 %v3172
    %v3374 = vunpack.c.l.b16 %v3173
    %v3375 = vunpack.c.l.b16 %v3174
    %v3376 = vunpack.c.l.b16 %v3175
    %v3377 = vunpack.c.l.b16 %v3176
    %v3378 = vunpack.c.l.b16 %v3177
    %v3379 = vunpack.c.l.b16 %v3178
    %v3380 = vunpack.c.l.b16 %v3179
    %v3381 = vunpack.c.l.b16 %v3180
    %v3382 = vunpack.c.l.b16 %v3181
    %v3383 = vunpack.c.l.b16 %v3182
    %v3384 = vunpack.c.l.b16 %v3183
    %v3385 = vunpack.c.l.b16 %v3184
    %v3386 = vunpack.c.l.b16 %v3185
    %v3387 = vunpack.c.l.b16 %v3186
    %v3388 = vunpack.c.l.b16 %v3187
    %v3389 = vunpack.c.l.b16 %v3188
    %v3390 = vunpack.c.l.b16 %v3189
    %v3391 = vunpack.c.l.b16 %v3190
    %v3392 = vunpack.c.l.b16 %v3191
    %v3393 = vunpack.c.l.b16 %v3192
    %v3394 = vunpack.c.l.b16 %v3193
    %v3395 = vunpack.c.l.b16 %v3194
    %v3396 = vunpack.c.l.b16 %v3195
    %v3397 = vunpack.c.l.b16 %v3196
    %v3398 = vunpack.c.l.b16 %v3197
    %v3399 = vunpack.c.l.b16 %v3198
    %v3400 = vunpack.c.l.b16 %v3199
    %v3401 = vunpack.c.l.b16 %v3200
    %v3402 = vunpack.c.l.b16 %v3201
    %v3403 = vunpack.c.l.b16 %v3202
    %v3404 = vunpack.c.l.b16 %v3203
    %v3405 = vunpack.c.l.b16 %v3204
    %v3406 = vunpack.c.l.b16 %v3205
    %v3407 = vunpack.c.l.b16 %v3206
    %v3408 = vunpack.c.l.b16 %v3207
    %v3409 = vunpack.c.l.b16 %v3208
    %v3410 = vunpack.c.l.b16 %v3209
    %v3411 = vunpack.c.l.b16 %v3210
    %v3412 = vunpack.c.l.b16 %v3211
    %v3413 = vunpack.c.l.b16 %v3212
    %v3414 = vunpack.c.l.b16 %v3213
    %v3415 = vunpack.c.l.b16 %v3214
    %v3416 = vunpack.c.l.b16 %v3215
    %v3417 = vunpack.c.l.b16 %v3216
    %v3418 = vunpack.c.l.b16 %v3217
    %v3419 = vunpack.c.l.b16 %v3218
    %v3420 = vunpack.c.l.b16 %v3219
    %v3421 = vunpack.c.l.b16 %v3220
    %v3422 = vunpack.c.l.b16 %v3221
    %v3423 = vunpack.c.l.b16 %v3222
    %v3424 = vunpack.c.l.b16 %v3223
    %v3425 = vunpack.c.l.b16 %v3224
    %v3426 = vunpack.c.l.b16 %v3225
    %v3427 = vunpack.c.l.b16 %v3226
    %v3428 = vunpack.c.l.b16 %v3227
    %v3429 = vunpack.c.l.b16 %v3228
    %v3430 = vunpack.c.l.b16 %v3229
    %v3431 = vunpack.c.l.b16 %v3230
    %v3432 = vpack.c.b16 %v3361, %v3360
    %v3433 = vpack.c.b16 %v3363, %v3362
    %v3434 = vpack.c.b16 %v3365, %v3364
    %v3435 = vpack.c.b16 %v3367, %v3366
    %v3436 = vpack.c.b16 %v3369, %v3368
    %v3437 = vpack.c.b16 %v3371, %v3370
    %v3438 = vpack.c.b16 %v3373, %v3372
    %v3439 = vpack.c.b16 %v3375, %v3374
    %v3440 = vpack.c.b16 %v3377, %v3376
    %v3441 = vpack.c.b16 %v3379, %v3378
    %v3442 = vpack.c.b16 %v3381, %v3380
    %v3443 = vpack.c.b16 %v3383, %v3382
    %v3444 = vpack.c.b16 %v3385, %v3384
    %v3445 = vpack.c.b16 %v3387, %v3386
    %v3446 = vpack.c.b16 %v3389, %v3388
    %v3447 = vpack.c.b16 %v3391, %v3390
    %v3448 = vpack.c.b16 %v3393, %v3392
    %v3449 = vpack.c.b16 %v3395, %v3394
    %v3450 = vpack.c.b16 %v3397, %v3396
    %v3451 = vpack.c.b16 %v3399, %v3398
    %v3452 = vpack.c.b16 %v3401, %v3400
    %v3453 = vpack.c.b16 %v3403, %v3402
    %v3454 = vpack.c.b16 %v3405, %v3404
    %v3455 = vpack.c.b16 %v3407, %v3406
    %v3456 = vpack.c.b16 %v3409, %v3408
    %v3457 = vpack.c.b16 %v3411, %v3410
    %v3458 = vpack.c.b16 %v3413, %v3412
    %v3459 = vpack.c.b16 %v3415, %v3414
    %v3460 = vpack.c.b16 %v3417, %v3416
    %v3461 = vpack.c.b16 %v3419, %v3418
    %v3462 = vpack.c.b16 %v3421, %v3420
    %v3463 = vpack.c.b16 %v3423, %v3422
    %v3464 = vpack.c.b16 %v3425, %v3424
    %v3465 = vpack.c.b16 %v3427, %v3426
    %v3466 = vpack.c.b16 %v3429, %v3428
    %v3467 = vpack.c.b16 %v3431, %v3430
    %v3505 = vsel %vm2635, %v3274, 0
    %v3508 = vsel %vm2635, %v3279, 0
    %3510 = vmatprep.subr.bf16.mxu0 0
    %3511 = vmatpush1.bf16.msra.mxu0 %v3439
    %3512 = vmatprep.subr.bf16.mxu0 0
    %3513 = vmatpush1.bf16.msra.mxu0 %v3438
    %3514 = vmatprep.subr.bf16.mxu0 0
    %3515 = vmatpush1.bf16.msra.mxu0 %v3437
    %3516 = vmatprep.subr.bf16.mxu0 0
    %3517 = vmatpush1.bf16.msra.mxu0 %v3436
    %3518 = vmatprep.subr.bf16.mxu0 0
    %3519 = vmatpush1.bf16.msra.mxu0 %v3435
    %3520 = vmatprep.subr.bf16.mxu0 0
    %3521 = vmatpush1.bf16.msra.mxu0 %v3434
    %3522 = vmatprep.subr.bf16.mxu0 0
    %3523 = vmatpush1.bf16.msra.mxu0 %v3433
    %3524 = vmatprep.subr.bf16.mxu0 0
    %3525 = vmatpush1.bf16.msra.mxu0 %v3432
    %3526 = vmatprep.subr.bf16.mxu0 0
    %3527 = vmatpush2.bf16.msra.mxu0 %v3447
    %3528 = vmatprep.subr.bf16.mxu0 0
    %3529 = vmatpush2.bf16.msra.mxu0 %v3446
    %3530 = vmatprep.subr.bf16.mxu0 0
    %3531 = vmatpush2.bf16.msra.mxu0 %v3445
    %3532 = vmatprep.subr.bf16.mxu0 0
    %3533 = vmatpush2.bf16.msra.mxu0 %v3444
    %3534 = vmatprep.subr.bf16.mxu0 0
    %3535 = vmatpush2.bf16.msra.mxu0 %v3443
    %3536 = vmatprep.subr.bf16.mxu0 0
    %3537 = vmatpush2.bf16.msra.mxu0 %v3442
    %3538 = vmatprep.subr.bf16.mxu0 0
    %3539 = vmatpush2.bf16.msra.mxu0 %v3441
    %3540 = vmatprep.subr.bf16.mxu0 0
    %3541 = vmatpush2.bf16.msra.mxu0 %v3440
    %3542 = vmatprep.mubr.bf16.mxu0 %v3271
    %3543 = vmatmul.mubr.bf16.gmra.mxu0 %v3270
    %v3544 = vpop.f32.mrf.mxu0
    %v3545 = vadd.f32 %v3236, %v3544
    %v3546 = vpop.f32.mrf.mxu0
    %v3547 = vpop.f32.mrf.mxu0
    %v3548 = vadd.f32 %v3236, %v3547
    %v3549 = vpop.f32.mrf.mxu0
    %3550 = vmatprep.mubr.bf16.mxu0 %v3276
    %3551 = vmatmul.mubr.bf16.gmra.mxu0 %v3275
    %v3552 = vpop.f32.mrf.mxu0
    %v3553 = vadd.f32 %v3236, %v3552
    %v3554 = vpop.f32.mrf.mxu0
    %v3555 = vpop.f32.mrf.mxu0
    %v3556 = vadd.f32 %v3236, %v3555
    %v3557 = vpop.f32.mrf.mxu0
    %3558 = vdwg.mxu0
    %3559 = vmatprep.subr.bf16.mxu0 0
    %3560 = vmatpush1.bf16.msra.mxu0 %v3455
    %3561 = vmatprep.subr.bf16.mxu0 0
    %3562 = vmatpush1.bf16.msra.mxu0 %v3454
    %3563 = vmatprep.subr.bf16.mxu0 0
    %3564 = vmatpush1.bf16.msra.mxu0 %v3453
    %3565 = vmatprep.subr.bf16.mxu0 0
    %3566 = vmatpush1.bf16.msra.mxu0 %v3452
    %3567 = vmatprep.subr.bf16.mxu0 0
    %3568 = vmatpush1.bf16.msra.mxu0 %v3451
    %3569 = vmatprep.subr.bf16.mxu0 0
    %3570 = vmatpush1.bf16.msra.mxu0 %v3450
    %3571 = vmatprep.subr.bf16.mxu0 0
    %3572 = vmatpush1.bf16.msra.mxu0 %v3449
    %3573 = vmatprep.subr.bf16.mxu0 0
    %3574 = vmatpush1.bf16.msra.mxu0 %v3448
    %3575 = vmatprep.subr.bf16.mxu0 0
    %3576 = vmatpush2.bf16.msra.mxu0 %v3463
    %3577 = vmatprep.subr.bf16.mxu0 0
    %3578 = vmatpush2.bf16.msra.mxu0 %v3462
    %3579 = vmatprep.subr.bf16.mxu0 0
    %3580 = vmatpush2.bf16.msra.mxu0 %v3461
    %3581 = vmatprep.subr.bf16.mxu0 0
    %3582 = vmatpush2.bf16.msra.mxu0 %v3460
    %3583 = vmatprep.subr.bf16.mxu0 0
    %3584 = vmatpush2.bf16.msra.mxu0 %v3459
    %3585 = vmatprep.subr.bf16.mxu0 0
    %3586 = vmatpush2.bf16.msra.mxu0 %v3458
    %3587 = vmatprep.subr.bf16.mxu0 0
    %3588 = vmatpush2.bf16.msra.mxu0 %v3457
    %3589 = vmatprep.subr.bf16.mxu0 0
    %3590 = vmatpush2.bf16.msra.mxu0 %v3456
    %3591 = vmatprep.mubr.bf16.mxu0 %v3273
    %3592 = vmatmul.mubr.bf16.gmra.mxu0 %v3272
    %v3593 = vpop.f32.mrf.mxu0
    %v3594 = vadd.f32 %v3545, %v3593
    %v3595 = vpop.f32.mrf.mxu0
    %v3596 = vpop.f32.mrf.mxu0
    %v3597 = vadd.f32 %v3548, %v3596
    %v3598 = vpop.f32.mrf.mxu0
    %3599 = vmatprep.mubr.bf16.mxu0 %v3278
    %3600 = vmatmul.mubr.bf16.gmra.mxu0 %v3277
    %v3601 = vpop.f32.mrf.mxu0
    %v3602 = vadd.f32 %v3553, %v3601
    %v3603 = vpop.f32.mrf.mxu0
    %v3604 = vpop.f32.mrf.mxu0
    %v3605 = vadd.f32 %v3556, %v3604
    %v3606 = vpop.f32.mrf.mxu0
    %3607 = vdwg.mxu0
    %3608 = vmatprep.subr.bf16.mxu0 0
    %3609 = vmatpush1.bf16.msra.mxu0 0
    %3610 = vmatprep.subr.bf16.mxu0 0
    %3611 = vmatpush1.bf16.msra.mxu0 0
    %3612 = vmatprep.subr.bf16.mxu0 0
    %3613 = vmatpush1.bf16.msra.mxu0 0
    %3614 = vmatprep.subr.bf16.mxu0 0
    %3615 = vmatpush1.bf16.msra.mxu0 0
    %3616 = vmatprep.subr.bf16.mxu0 0
    %3617 = vmatpush1.bf16.msra.mxu0 %v3467
    %3618 = vmatprep.subr.bf16.mxu0 0
    %3619 = vmatpush1.bf16.msra.mxu0 %v3466
    %3620 = vmatprep.subr.bf16.mxu0 0
    %3621 = vmatpush1.bf16.msra.mxu0 %v3465
    %3622 = vmatprep.subr.bf16.mxu0 0
    %3623 = vmatpush1.bf16.msra.mxu0 %v3464
    %3624 = vmatprep.subr.bf16.mxu0 0
    %3625 = vmatpush2.bf16.msra.mxu0 0
    %3626 = vmatprep.subr.bf16.mxu0 0
    %3627 = vmatpush2.bf16.msra.mxu0 0
    %3628 = vmatprep.subr.bf16.mxu0 0
    %3629 = vmatpush2.bf16.msra.mxu0 0
    %3630 = vmatprep.subr.bf16.mxu0 0
    %3631 = vmatpush2.bf16.msra.mxu0 0
    %3632 = vmatprep.subr.bf16.mxu0 0
    %3633 = vmatpush2.bf16.msra.mxu0 0
    %3634 = vmatprep.subr.bf16.mxu0 0
    %3635 = vmatpush2.bf16.msra.mxu0 0
    %3636 = vmatprep.subr.bf16.mxu0 0
    %3637 = vmatpush2.bf16.msra.mxu0 0
    %3638 = vmatprep.subr.bf16.mxu0 0
    %3639 = vmatpush2.bf16.msra.mxu0 0
    %3640 = vmatprep.mubr.bf16.mxu0 0
    %3641 = vmatmul.mubr.bf16.gmra.mxu0 %v3505
    %v3642 = vpop.f32.mrf.mxu0
    %v3643 = vadd.f32 %v3594, %v3642
    %v3644 = vpop.f32.mrf.mxu0
    %v3645 = vpop.f32.mrf.mxu0
    %v3646 = vadd.f32 %v3597, %v3645
    %v3647 = vpop.f32.mrf.mxu0
    %3648 = vmatprep.mubr.bf16.mxu0 0
    %3649 = vmatmul.mubr.bf16.gmra.mxu0 %v3508
    %v3650 = vpop.f32.mrf.mxu0
    %v3651 = vadd.f32 %v3602, %v3650
    %v3652 = vpop.f32.mrf.mxu0
    %v3653 = vpop.f32.mrf.mxu0
    %v3654 = vadd.f32 %v3605, %v3653
    %v3655 = vpop.f32.mrf.mxu0
    %3656 = vdwg.mxu0
    %v3657 = vmax.f32 %v3643, 0.0
    %v3658 = vmax.f32 %v3646, 0.0
    %v3659 = vmax.f32 %v3651, 0.0
    %v3660 = vmax.f32 %v3654, 0.0
    %v3661 = vadd.f32 %v3657, %v3658
    %v3662 = vrot.slane %v3661, 4
    %v3663 = vadd.f32 %v3661, %v3662
    %v3664 = vrot.slane %v3663, 2
    %v3665 = vadd.f32 %v3663, %v3664
    %v3666 = vrot.slane %v3665, 1
    %v3667 = vadd.f32 %v3665, %v3666
    %v3668 = vadd.f32 %v3659, %v3660
    %v3669 = vrot.slane %v3668, 4
    %v3670 = vadd.f32 %v3668, %v3669
    %v3671 = vrot.slane %v3670, 2
    %v3672 = vadd.f32 %v3670, %v3671
    %v3673 = vrot.slane %v3672, 1
    %v3674 = vadd.f32 %v3672, %v3673
    %v3675 = vld [vmem:[%s7] sm:$0xff]
    %v3676 = vld [vmem:[%s7 + $0x8] sm:$0xff]
    %v3677 = vld [vmem:[%s7 + $0x10] sm:$0xff]
    %v3678 = vld [vmem:[%s7 + $0x18] sm:$0xff]
    %v3679 = vld [vmem:[%s7 + $0x20] sm:$0xff]
    %v3680 = vld [vmem:[%s7 + $0x28] sm:$0xff]
    %v3681 = vld [vmem:[%s7 + $0x30] sm:$0xff]
    %v3682 = vld [vmem:[%s7 + $0x38] sm:$0xff]
    %v3683 = vld [vmem:[%s7 + $0x40] sm:$0xff]
    %v3684 = vld [vmem:[%s7 + $0x48] sm:$0xff]
    %v3685 = vld [vmem:[%s7 + $0x50] sm:$0xff]
    %v3686 = vld [vmem:[%s7 + $0x58] sm:$0xff]
    %v3687 = vld [vmem:[%s7 + $0x60] sm:$0xff]
    %v3688 = vld [vmem:[%s7 + $0x68] sm:$0xff]
    %v3689 = vld [vmem:[%s7 + $0x70] sm:$0xff]
    %v3690 = vld [vmem:[%s7 + $0x78] sm:$0xff]
    %v3691 = vld [vmem:[%s8] sm:$0x1]
    %v3693 = vlaneseq
    %v3694 = vshrl.u32 %v3693, 7
    %v3695 = vsub.s32 0, %v3694
    %v3696 = vrot.slane %v3691, %v3695
    %vm3700 = vcmask 1041409
    %v3701 = vsel %vm3700, %v3674, %v3667
    %3703 = vmatprep.subr.mxu0 0.0
    %3704 = vmatpush1.msra.mxu0 %v3690
    %3705 = vmatprep.subr.mxu0 0.0
    %3706 = vmatpush1.msra.mxu0 %v3689
    %3707 = vmatprep.subr.mxu0 0.0
    %3708 = vmatpush1.msra.mxu0 %v3688
    %3709 = vmatprep.subr.mxu0 0.0
    %3710 = vmatpush1.msra.mxu0 %v3687
    %3711 = vmatprep.subr.mxu0 0.0
    %3712 = vmatpush1.msra.mxu0 %v3686
    %3713 = vmatprep.subr.mxu0 0.0
    %3714 = vmatpush1.msra.mxu0 %v3685
    %3715 = vmatprep.subr.mxu0 0.0
    %3716 = vmatpush1.msra.mxu0 %v3684
    %3717 = vmatprep.subr.mxu0 0.0
    %3718 = vmatpush1.msra.mxu0 %v3683
    %3719 = vmatprep.subr.mxu0 0.0
    %3720 = vmatpush1.msra.mxu0 %v3682
    %3721 = vmatprep.subr.mxu0 0.0
    %3722 = vmatpush1.msra.mxu0 %v3681
    %3723 = vmatprep.subr.mxu0 0.0
    %3724 = vmatpush1.msra.mxu0 %v3680
    %3725 = vmatprep.subr.mxu0 0.0
    %3726 = vmatpush1.msra.mxu0 %v3679
    %3727 = vmatprep.subr.mxu0 0.0
    %3728 = vmatpush1.msra.mxu0 %v3678
    %3729 = vmatprep.subr.mxu0 0.0
    %3730 = vmatpush1.msra.mxu0 %v3677
    %3731 = vmatprep.subr.mxu0 0.0
    %3732 = vmatpush1.msra.mxu0 %v3676
    %3733 = vmatprep.subr.mxu0 0.0
    %3734 = vmatpush1.msra.mxu0 %v3675
    %3735 = vmatprep.subr.mxu0 0.0
    %3736 = vmatpush2.msra.mxu0 0.0
    %3737 = vmatprep.subr.mxu0 0.0
    %3738 = vmatpush2.msra.mxu0 0.0
    %3739 = vmatprep.subr.mxu0 0.0
    %3740 = vmatpush2.msra.mxu0 0.0
    %3741 = vmatprep.subr.mxu0 0.0
    %3742 = vmatpush2.msra.mxu0 0.0
    %3743 = vmatprep.subr.mxu0 0.0
    %3744 = vmatpush2.msra.mxu0 0.0
    %3745 = vmatprep.subr.mxu0 0.0
    %3746 = vmatpush2.msra.mxu0 0.0
    %3747 = vmatprep.subr.mxu0 0.0
    %3748 = vmatpush2.msra.mxu0 0.0
    %3749 = vmatprep.subr.mxu0 0.0
    %3750 = vmatpush2.msra.mxu0 0.0
    %3751 = vmatprep.subr.mxu0 0.0
    %3752 = vmatpush2.msra.mxu0 0.0
    %3753 = vmatprep.subr.mxu0 0.0
    %3754 = vmatpush2.msra.mxu0 0.0
    %3755 = vmatprep.subr.mxu0 0.0
    %3756 = vmatpush2.msra.mxu0 0.0
    %3757 = vmatprep.subr.mxu0 0.0
    %3758 = vmatpush2.msra.mxu0 0.0
    %3759 = vmatprep.subr.mxu0 0.0
    %3760 = vmatpush2.msra.mxu0 0.0
    %3761 = vmatprep.subr.mxu0 0.0
    %3762 = vmatpush2.msra.mxu0 0.0
    %3763 = vmatprep.subr.mxu0 0.0
    %3764 = vmatpush2.msra.mxu0 0.0
    %3765 = vmatprep.subr.mxu0 0.0
    %3766 = vmatpush2.msra.mxu0 0.0
    %3767 = vmatprep.mubr.f32.mxu0 0.0
    %3768 = vmatmul.mubr.f32.gmra.mxu0 %v3701
    %v3769 = vpop.f32.mrf.mxu0
    %v3770 = vadd.f32 %v3696, %v3769
    %v3771 = vpop.f32.mrf.mxu0
    %3772 = vdwg.mxu0
    %3773 = vst [vmem:[#allocation8] sm:$0x3] %v3770
    // Predicated region
    $region38: #{conv_gap_forward.1} parent=1 // pred_check
      _
    $region39: #{conv_gap_forward.1} parent=1 // pred_check_branch
      %3775 = sbr.rel (0) target = $region41
    $region40: #{conv_gap_forward.1} parent=1 // pred_region
      %s3777 = ssub.s32 32, 32
      %3778 = vsyncadd [#allocation9], %s3777
      %s3780 = sshll.u32 [#allocation8], 4
      %s3781 = int_to_ptr.vmem [resolvable:$true] %s3780
      %3783 = dma.vmem_to_hbm [thread:$0]  %s3781, 32, %s9, [#allocation9]
    $region41: #{conv_gap_forward.1} parent=1 // pred_fallthru
      _
    // Predicated region
    $region42: #{conv_gap_forward.1} parent=1 // pred_check
      _
    $region43: #{conv_gap_forward.1} parent=1 // pred_check_branch
      %3785 = sbr.rel (0) target = $region45
    $region44: #{conv_gap_forward.1} parent=1 // pred_region
      %3786 = dma.done [#allocation9], 32
    $region45: #{conv_gap_forward.1} parent=1 // pred_fallthru
      _
    %3787 = vsyncpa [#allocation9], 1

</llo_original>
